<compile_context>
chip_gen: v7x
topology: tpu7x:2x2x1
jax: 0.10.0
libtpu: 0.0.40
codegen_flags: <defaults>
</compile_context>

<pallas_src>
import jax
import jax.numpy as jnp
from jax.experimental import pallas as pl
from jax.experimental.pallas import tpu as pltpu


# ----------------------------------------------------------------------------
# Host-side weight preparation (pure weight reshuffles, no activation work).
# ----------------------------------------------------------------------------
def _conv1_toeplitz(w1):
    """w1 (6,1,5,5) -> T1 (5,32,168): T1[kh, m, q*84+co*14+t] = w1[co,0,kh, m-(2t+q)]."""
    Cout, _, KH, KW = w1.shape              # 6, 1, 5, 5
    W_in, W_pool = 32, 14
    w = w1[:, 0]                            # (6,5,5)
    m = jnp.arange(W_in)
    t = jnp.arange(W_pool)
    q = jnp.arange(2)
    kw = m[None, None, :] - (2 * t[None, :, None] + q[:, None, None])   # (2,14,32)
    valid = ((kw >= 0) & (kw < KW)).astype(w.dtype)
    g = w[:, :, jnp.clip(kw, 0, KW - 1)] * valid[None, None]            # (6,5,2,14,32)
    # axes (co,kh,q,t,m) -> (kh,m,q,co,t)
    return jnp.transpose(g, (1, 4, 2, 0, 3)).reshape(KH, W_in, 2 * Cout * W_pool)


def _conv2_toeplitz(w2):
    """w2 (16,6,5,5) -> T2 (5,84,160): T2[kh, ci*14+t', q*80+co*5+t] = w2[co,ci,kh, t'-(2t+q)]."""
    Cout, Cin, KH, KW = w2.shape            # 16, 6, 5, 5
    W_in, W_pool = 14, 5
    tp = jnp.arange(W_in)
    t = jnp.arange(W_pool)
    q = jnp.arange(2)
    kw = tp[None, None, :] - (2 * t[None, :, None] + q[:, None, None])  # (2,5,14)
    valid = ((kw >= 0) & (kw < KW)).astype(w2.dtype)
    g = w2[:, :, :, jnp.clip(kw, 0, KW - 1)] * valid[None, None, None]  # (16,6,5,2,5,14)
    # axes (co,ci,kh,q,t,t') -> (kh,ci,t',q,co,t)
    return jnp.transpose(g, (2, 1, 5, 3, 0, 4)).reshape(KH, Cin * W_in, 2 * Cout * W_pool)


def _fc1_regroup(w):
    """fc1 weights (400,120), rows f = co*25 + u*5 + t  ->  (5, 80, 120) indexed [u, co*5+t, n]."""
    return jnp.transpose(w.reshape(16, 5, 5, 120), (1, 0, 2, 3)).reshape(5, 80, 120)


def prepare_params(params):
    return (
        _conv1_toeplitz(params["conv1_w"]),
        jnp.repeat(params["conv1_b"], 14).reshape(1, 84),
        _conv2_toeplitz(params["conv2_w"]),
        jnp.repeat(params["conv2_b"], 5).reshape(1, 80),
        _fc1_regroup(params["fc1_w"]),
        params["fc1_b"].reshape(1, 120),
        params["fc2_w"],
        params["fc2_b"].reshape(1, 84),
        params["fc3_w"],
        params["fc3_b"].reshape(1, 10),
    )


# ----------------------------------------------------------------------------
# The single fused Pallas kernel.
# ----------------------------------------------------------------------------
def _lenet_kernel(x_ref, t1_ref, b1_ref, t2_ref, b2_ref,
                  wf1_ref, bf1_ref, wf2_ref, bf2_ref, wf3_ref, bf3_ref,
                  o_ref, h1_scr):
    B = x_ref.shape[0]
    f32 = jnp.float32
    for b in range(B):                           # B is tiny; statically unrolled.
        # ---------------- conv1: 5 Toeplitz matmuls (lane dim = 168) ----------------
        xb = x_ref[b]                            # (32, 32)
        r1 = jnp.zeros((28, 168), f32)
        for kh in range(5):
            r1 = r1 + jnp.dot(xb[kh:kh + 28, :], t1_ref[kh],
                              preferred_element_type=f32)
        # relu + 2x2/2 maxpool fused: row-pair max + contiguous column-half max.
        for u in range(14):
            rmax = jnp.maximum(r1[2 * u:2 * u + 1, :], r1[2 * u + 1:2 * u + 2, :])  # (1,168)
            row = jnp.maximum(rmax[:, 0:84], rmax[:, 84:168])                       # (1,84)
            row = jnp.maximum(row + b1_ref[...], 0.0)
            h1_scr[pl.ds(b * 14 + u, 1), :] = row        # pooled conv1 row u (all 6 ch)

        # ---------------- conv2: 5 Toeplitz matmuls over the pooled rows ------------
        r2 = jnp.zeros((10, 160), f32)
        for kh in range(5):
            blk = h1_scr[pl.ds(b * 14 + kh, 10), :]      # (10, 84) = 10 pooled rows, 6 ch
            r2 = r2 + jnp.dot(blk, t2_ref[kh], preferred_element_type=f32)

        # relu + pool2 fused, with fc1 accumulated directly from each pooled row.
        z1 = bf1_ref[...]                                # (1, 120)
        for u in range(5):
            rmax = jnp.maximum(r2[2 * u:2 * u + 1, :], r2[2 * u + 1:2 * u + 2, :])  # (1,160)
            prow = jnp.maximum(rmax[:, 0:80], rmax[:, 80:160])                      # (1,80)
            prow = jnp.maximum(prow + b2_ref[...], 0.0)  # pooled2[b, :, u, :] as (co*5+t)
            z1 = z1 + jnp.dot(prow, wf1_ref[u], preferred_element_type=f32)
        z1 = jnp.maximum(z1, 0.0)

        # ---------------- fc2 / fc3 --------------------------------------------------
        z2 = jnp.maximum(
            jnp.dot(z1, wf2_ref[...], preferred_element_type=f32) + bf2_ref[...], 0.0)
        z3 = jnp.dot(z2, wf3_ref[...], preferred_element_type=f32) + bf3_ref[...]
        o_ref[pl.ds(b, 1), :] = z3.astype(o_ref.dtype)


def lenet_fused(x3, prepped):
    B = x3.shape[0]
    args = (x3,) + tuple(prepped)

    def full(shape):
        return pl.BlockSpec(shape, lambda i: (0,) * len(shape))

    return pl.pallas_call(
        _lenet_kernel,
        out_shape=jax.ShapeDtypeStruct((B, 10), jnp.float32),
        grid=(1,),
        in_specs=[full(a.shape) for a in args],
        out_specs=full((B, 10)),
        scratch_shapes=[pltpu.VMEM((B * 14, 84), jnp.float32)],  # pooled conv1 activations
        compiler_params=pltpu.CompilerParams(
            dimension_semantics=("arbitrary",),
            vmem_limit_bytes=16 * 1024 * 1024,  # ~1 MiB used; safe on v5e/v6e/v7x
        ),
    )(*args)


# ----------------------------------------------------------------------------
# Full Net forward (semantics of the PyTorch module).
# ----------------------------------------------------------------------------
def net_forward(x, params):
    B = x.shape[0]
    x3 = x.reshape(B, 32, 32)            # drop the unit channel dim (free)
    prepped = prepare_params(params)     # weight-only prep; cacheable per model
    return lenet_fused(x3, prepped)


# Plain-JAX reference (for a correctness cross-check of the fused kernel).
def net_forward_reference(x, params):
    dn = ("NCHW", "OIHW", "NCHW")
    y = jax.lax.conv_general_dilated(x, params["conv1_w"], (1, 1), "VALID",
                                     dimension_numbers=dn)
    y = jax.nn.relu(y + params["conv1_b"][None, :, None, None])
    y = jax.lax.reduce_window(y, -jnp.inf, jax.lax.max, (1, 1, 2, 2), (1, 1, 2, 2), "VALID")
    y = jax.lax.conv_general_dilated(y, params["conv2_w"], (1, 1), "VALID",
                                     dimension_numbers=dn)
    y = jax.nn.relu(y + params["conv2_b"][None, :, None, None])
    y = jax.lax.reduce_window(y, -jnp.inf, jax.lax.max, (1, 1, 2, 2), (1, 1, 2, 2), "VALID")
    y = y.reshape(y.shape[0], -1)
    y = jax.nn.relu(y @ params["fc1_w"] + params["fc1_b"])
    y = jax.nn.relu(y @ params["fc2_w"] + params["fc2_b"])
    return y @ params["fc3_w"] + params["fc3_b"]


def init_params(key):
    ks = jax.random.split(key, 10)

    def u(k, shape, fan_in):
        bound = 1.0 / jnp.sqrt(fan_in)
        return jax.random.uniform(k, shape, jnp.float32, -bound, bound)

    return {
        "conv1_w": u(ks[0], (6, 1, 5, 5), 1 * 5 * 5),
        "conv1_b": u(ks[1], (6,), 1 * 5 * 5),
        "conv2_w": u(ks[2], (16, 6, 5, 5), 6 * 5 * 5),
        "conv2_b": u(ks[3], (16,), 6 * 5 * 5),
        # fc weights stored already transposed as (in, out) for the GEMMs
        "fc1_w": u(ks[4], (400, 120), 400),
        "fc1_b": u(ks[5], (120,), 400),
        "fc2_w": u(ks[6], (120, 84), 120),
        "fc2_b": u(ks[7], (84,), 120),
        "fc3_w": u(ks[8], (84, 10), 84),
        "fc3_b": u(ks[9], (10,), 84),
    }


if __name__ == "__main__":
    key = jax.random.PRNGKey(0)
    k_x, k_p = jax.random.split(key)
    # LeNet expects 32x32 single-channel input (so that flatten gives 16*5*5 features)
    x = jax.random.normal(k_x, (2, 1, 32, 32), dtype=jnp.float32)
    params = init_params(k_p)

    out = jax.jit(net_forward)(x, params)
    out = jax.block_until_ready(out)
    assert out.shape == (2, 10) and out.dtype == jnp.float32

    ref = jax.block_until_ready(jax.jit(net_forward_reference)(x, params))
    assert jnp.allclose(out, ref, rtol=3e-2, atol=3e-2), (out, ref)

    print("KERNEL_OK")
</pallas_src>

<mosaic_0001>
module attributes {stable_mosaic.version = 11 : i64} {
  func.func @_lenet_kernel(%arg0: i32, %arg1: memref<2x32x32xf32, #tpu.memory_space<vmem>>, %arg2: memref<5x32x168xf32, #tpu.memory_space<vmem>>, %arg3: memref<1x84xf32, #tpu.memory_space<vmem>>, %arg4: memref<5x84x160xf32, #tpu.memory_space<vmem>>, %arg5: memref<1x80xf32, #tpu.memory_space<vmem>>, %arg6: memref<5x80x120xf32, #tpu.memory_space<vmem>>, %arg7: memref<1x120xf32, #tpu.memory_space<vmem>>, %arg8: memref<120x84xf32, #tpu.memory_space<vmem>>, %arg9: memref<1x84xf32, #tpu.memory_space<vmem>>, %arg10: memref<84x10xf32, #tpu.memory_space<vmem>>, %arg11: memref<1x10xf32, #tpu.memory_space<vmem>>, %arg12: memref<2x10xf32, #tpu.memory_space<vmem>>, %arg13: memref<28x84xf32, #tpu.memory_space<vmem>>) attributes {dimension_semantics = [#tpu.dimension_semantics<arbitrary>], iteration_bounds = array<i64: 1>, scalar_prefetch = 0 : i64, scratch_operands = 1 : i64, tpu.core_type = #tpu.core_type<tc>, window_params = [{pipeline_mode = #tpu.pipeline_mode<synchronous>, transform_indices = @transform_0, window_bounds = array<i64: 2, 32, 32>}, {pipeline_mode = #tpu.pipeline_mode<synchronous>, transform_indices = @transform_1, window_bounds = array<i64: 5, 32, 168>}, {pipeline_mode = #tpu.pipeline_mode<synchronous>, transform_indices = @transform_2, window_bounds = array<i64: 1, 84>}, {pipeline_mode = #tpu.pipeline_mode<synchronous>, transform_indices = @transform_3, window_bounds = array<i64: 5, 84, 160>}, {pipeline_mode = #tpu.pipeline_mode<synchronous>, transform_indices = @transform_4, window_bounds = array<i64: 1, 80>}, {pipeline_mode = #tpu.pipeline_mode<synchronous>, transform_indices = @transform_5, window_bounds = array<i64: 5, 80, 120>}, {pipeline_mode = #tpu.pipeline_mode<synchronous>, transform_indices = @transform_6, window_bounds = array<i64: 1, 120>}, {pipeline_mode = #tpu.pipeline_mode<synchronous>, transform_indices = @transform_7, window_bounds = array<i64: 120, 84>}, {pipeline_mode = #tpu.pipeline_mode<synchronous>, transform_indices = @transform_8, window_bounds = array<i64: 1, 84>}, {pipeline_mode = #tpu.pipeline_mode<synchronous>, transform_indices = @transform_9, window_bounds = array<i64: 84, 10>}, {pipeline_mode = #tpu.pipeline_mode<synchronous>, transform_indices = @transform_10, window_bounds = array<i64: 1, 10>}, {pipeline_mode = #tpu.pipeline_mode<synchronous>, transform_indices = @transform_11, window_bounds = array<i64: 2, 10>}]} {
    %c0 = arith.constant 0 : index
    %c0_0 = arith.constant 0 : index
    %c0_1 = arith.constant 0 : index
    %0 = vector.load %arg1[%c0, %c0_0, %c0_1] : memref<2x32x32xf32, #tpu.memory_space<vmem>>, vector<1x32x32xf32>
    %1 = vector.shape_cast %0 : vector<1x32x32xf32> to vector<32x32xf32>
    %cst = arith.constant 0.000000e+00 : f32
    %2 = vector.broadcast %cst : f32 to vector<28x168xf32>
    %3 = vector.extract_strided_slice %1 {offsets = [0, 0], sizes = [28, 32], strides = [1, 1]} : vector<32x32xf32> to vector<28x32xf32>
    %c0_2 = arith.constant 0 : index
    %c0_3 = arith.constant 0 : index
    %c0_4 = arith.constant 0 : index
    %4 = vector.load %arg2[%c0_2, %c0_3, %c0_4] : memref<5x32x168xf32, #tpu.memory_space<vmem>>, vector<1x32x168xf32>
    %5 = vector.shape_cast %4 : vector<1x32x168xf32> to vector<32x168xf32>
    %cst_5 = arith.constant dense<0.000000e+00> : vector<28x168xf32>
    %6 = tpu.matmul %3, %5, %cst_5 {dimension_numbers = #tpu.dot_dimension_numbers<[1], [0], [0], [1], [0, 0, 1, 1], [], []>} : vector<28x32xf32>, vector<32x168xf32>, vector<28x168xf32> -> vector<28x168xf32>
    %7 = arith.addf %2, %6 : vector<28x168xf32>
    %8 = vector.extract_strided_slice %1 {offsets = [1, 0], sizes = [28, 32], strides = [1, 1]} : vector<32x32xf32> to vector<28x32xf32>
    %c1 = arith.constant 1 : index
    %c0_6 = arith.constant 0 : index
    %c0_7 = arith.constant 0 : index
    %9 = vector.load %arg2[%c1, %c0_6, %c0_7] : memref<5x32x168xf32, #tpu.memory_space<vmem>>, vector<1x32x168xf32>
    %10 = vector.shape_cast %9 : vector<1x32x168xf32> to vector<32x168xf32>
    %cst_8 = arith.constant dense<0.000000e+00> : vector<28x168xf32>
    %11 = tpu.matmul %8, %10, %cst_8 {dimension_numbers = #tpu.dot_dimension_numbers<[1], [0], [0], [1], [0, 0, 1, 1], [], []>} : vector<28x32xf32>, vector<32x168xf32>, vector<28x168xf32> -> vector<28x168xf32>
    %12 = arith.addf %7, %11 : vector<28x168xf32>
    %13 = vector.extract_strided_slice %1 {offsets = [2, 0], sizes = [28, 32], strides = [1, 1]} : vector<32x32xf32> to vector<28x32xf32>
    %c2 = arith.constant 2 : index
    %c0_9 = arith.constant 0 : index
    %c0_10 = arith.constant 0 : index
    %14 = vector.load %arg2[%c2, %c0_9, %c0_10] : memref<5x32x168xf32, #tpu.memory_space<vmem>>, vector<1x32x168xf32>
    %15 = vector.shape_cast %14 : vector<1x32x168xf32> to vector<32x168xf32>
    %cst_11 = arith.constant dense<0.000000e+00> : vector<28x168xf32>
    %16 = tpu.matmul %13, %15, %cst_11 {dimension_numbers = #tpu.dot_dimension_numbers<[1], [0], [0], [1], [0, 0, 1, 1], [], []>} : vector<28x32xf32>, vector<32x168xf32>, vector<28x168xf32> -> vector<28x168xf32>
    %17 = arith.addf %12, %16 : vector<28x168xf32>
    %18 = vector.extract_strided_slice %1 {offsets = [3, 0], sizes = [28, 32], strides = [1, 1]} : vector<32x32xf32> to vector<28x32xf32>
    %c3 = arith.constant 3 : index
    %c0_12 = arith.constant 0 : index
    %c0_13 = arith.constant 0 : index
    %19 = vector.load %arg2[%c3, %c0_12, %c0_13] : memref<5x32x168xf32, #tpu.memory_space<vmem>>, vector<1x32x168xf32>
    %20 = vector.shape_cast %19 : vector<1x32x168xf32> to vector<32x168xf32>
    %cst_14 = arith.constant dense<0.000000e+00> : vector<28x168xf32>
    %21 = tpu.matmul %18, %20, %cst_14 {dimension_numbers = #tpu.dot_dimension_numbers<[1], [0], [0], [1], [0, 0, 1, 1], [], []>} : vector<28x32xf32>, vector<32x168xf32>, vector<28x168xf32> -> vector<28x168xf32>
    %22 = arith.addf %17, %21 : vector<28x168xf32>
    %23 = vector.extract_strided_slice %1 {offsets = [4, 0], sizes = [28, 32], strides = [1, 1]} : vector<32x32xf32> to vector<28x32xf32>
    %c4 = arith.constant 4 : index
    %c0_15 = arith.constant 0 : index
    %c0_16 = arith.constant 0 : index
    %24 = vector.load %arg2[%c4, %c0_15, %c0_16] : memref<5x32x168xf32, #tpu.memory_space<vmem>>, vector<1x32x168xf32>
    %25 = vector.shape_cast %24 : vector<1x32x168xf32> to vector<32x168xf32>
    %cst_17 = arith.constant dense<0.000000e+00> : vector<28x168xf32>
    %26 = tpu.matmul %23, %25, %cst_17 {dimension_numbers = #tpu.dot_dimension_numbers<[1], [0], [0], [1], [0, 0, 1, 1], [], []>} : vector<28x32xf32>, vector<32x168xf32>, vector<28x168xf32> -> vector<28x168xf32>
    %27 = arith.addf %22, %26 : vector<28x168xf32>
    %28 = vector.extract_strided_slice %27 {offsets = [0, 0], sizes = [1, 168], strides = [1, 1]} : vector<28x168xf32> to vector<1x168xf32>
    %29 = vector.extract_strided_slice %27 {offsets = [1, 0], sizes = [1, 168], strides = [1, 1]} : vector<28x168xf32> to vector<1x168xf32>
    %30 = arith.maximumf %28, %29 : vector<1x168xf32>
    %31 = vector.extract_strided_slice %30 {offsets = [0, 0], sizes = [1, 84], strides = [1, 1]} : vector<1x168xf32> to vector<1x84xf32>
    %32 = vector.extract_strided_slice %30 {offsets = [0, 84], sizes = [1, 84], strides = [1, 1]} : vector<1x168xf32> to vector<1x84xf32>
    %33 = arith.maximumf %31, %32 : vector<1x84xf32>
    %c0_18 = arith.constant 0 : index
    %c0_19 = arith.constant 0 : index
    %34 = vector.load %arg3[%c0_18, %c0_19] : memref<1x84xf32, #tpu.memory_space<vmem>>, vector<1x84xf32>
    %35 = arith.addf %33, %34 : vector<1x84xf32>
    %cst_20 = arith.constant 0.000000e+00 : f32
    %36 = vector.broadcast %cst_20 : f32 to vector<1x84xf32>
    %37 = arith.maximumf %35, %36 : vector<1x84xf32>
    %c0_21 = arith.constant 0 : index
    %c0_22 = arith.constant 0 : index
    %38 = vector.load %arg13[%c0_21, %c0_22] : memref<28x84xf32, #tpu.memory_space<vmem>>, vector<1x84xf32>
    tpu.vector_store %arg13[%c0_21, %c0_22], %37 {strides = array<i32>} : memref<28x84xf32, #tpu.memory_space<vmem>>, vector<1x84xf32>,
    %39 = vector.extract_strided_slice %27 {offsets = [2, 0], sizes = [1, 168], strides = [1, 1]} : vector<28x168xf32> to vector<1x168xf32>
    %40 = vector.extract_strided_slice %27 {offsets = [3, 0], sizes = [1, 168], strides = [1, 1]} : vector<28x168xf32> to vector<1x168xf32>
    %41 = arith.maximumf %39, %40 : vector<1x168xf32>
    %42 = vector.extract_strided_slice %41 {offsets = [0, 0], sizes = [1, 84], strides = [1, 1]} : vector<1x168xf32> to vector<1x84xf32>
    %43 = vector.extract_strided_slice %41 {offsets = [0, 84], sizes = [1, 84], strides = [1, 1]} : vector<1x168xf32> to vector<1x84xf32>
    %44 = arith.maximumf %42, %43 : vector<1x84xf32>
    %c0_23 = arith.constant 0 : index
    %c0_24 = arith.constant 0 : index
    %45 = vector.load %arg3[%c0_23, %c0_24] : memref<1x84xf32, #tpu.memory_space<vmem>>, vector<1x84xf32>
    %46 = arith.addf %44, %45 : vector<1x84xf32>
    %cst_25 = arith.constant 0.000000e+00 : f32
    %47 = vector.broadcast %cst_25 : f32 to vector<1x84xf32>
    %48 = arith.maximumf %46, %47 : vector<1x84xf32>
    %c1_26 = arith.constant 1 : index
    %c0_27 = arith.constant 0 : index
    %49 = vector.load %arg13[%c1_26, %c0_27] : memref<28x84xf32, #tpu.memory_space<vmem>>, vector<1x84xf32>
    tpu.vector_store %arg13[%c1_26, %c0_27], %48 {strides = array<i32>} : memref<28x84xf32, #tpu.memory_space<vmem>>, vector<1x84xf32>,
    %50 = vector.extract_strided_slice %27 {offsets = [4, 0], sizes = [1, 168], strides = [1, 1]} : vector<28x168xf32> to vector<1x168xf32>
    %51 = vector.extract_strided_slice %27 {offsets = [5, 0], sizes = [1, 168], strides = [1, 1]} : vector<28x168xf32> to vector<1x168xf32>
    %52 = arith.maximumf %50, %51 : vector<1x168xf32>
    %53 = vector.extract_strided_slice %52 {offsets = [0, 0], sizes = [1, 84], strides = [1, 1]} : vector<1x168xf32> to vector<1x84xf32>
    %54 = vector.extract_strided_slice %52 {offsets = [0, 84], sizes = [1, 84], strides = [1, 1]} : vector<1x168xf32> to vector<1x84xf32>
    %55 = arith.maximumf %53, %54 : vector<1x84xf32>
    %c0_28 = arith.constant 0 : index
    %c0_29 = arith.constant 0 : index
    %56 = vector.load %arg3[%c0_28, %c0_29] : memref<1x84xf32, #tpu.memory_space<vmem>>, vector<1x84xf32>
    %57 = arith.addf %55, %56 : vector<1x84xf32>
    %cst_30 = arith.constant 0.000000e+00 : f32
    %58 = vector.broadcast %cst_30 : f32 to vector<1x84xf32>
    %59 = arith.maximumf %57, %58 : vector<1x84xf32>
    %c2_31 = arith.constant 2 : index
    %c0_32 = arith.constant 0 : index
    %60 = vector.load %arg13[%c2_31, %c0_32] : memref<28x84xf32, #tpu.memory_space<vmem>>, vector<1x84xf32>
    tpu.vector_store %arg13[%c2_31, %c0_32], %59 {strides = array<i32>} : memref<28x84xf32, #tpu.memory_space<vmem>>, vector<1x84xf32>,
    %61 = vector.extract_strided_slice %27 {offsets = [6, 0], sizes = [1, 168], strides = [1, 1]} : vector<28x168xf32> to vector<1x168xf32>
    %62 = vector.extract_strided_slice %27 {offsets = [7, 0], sizes = [1, 168], strides = [1, 1]} : vector<28x168xf32> to vector<1x168xf32>
    %63 = arith.maximumf %61, %62 : vector<1x168xf32>
    %64 = vector.extract_strided_slice %63 {offsets = [0, 0], sizes = [1, 84], strides = [1, 1]} : vector<1x168xf32> to vector<1x84xf32>
    %65 = vector.extract_strided_slice %63 {offsets = [0, 84], sizes = [1, 84], strides = [1, 1]} : vector<1x168xf32> to vector<1x84xf32>
    %66 = arith.maximumf %64, %65 : vector<1x84xf32>
    %c0_33 = arith.constant 0 : index
    %c0_34 = arith.constant 0 : index
    %67 = vector.load %arg3[%c0_33, %c0_34] : memref<1x84xf32, #tpu.memory_space<vmem>>, vector<1x84xf32>
    %68 = arith.addf %66, %67 : vector<1x84xf32>
    %cst_35 = arith.constant 0.000000e+00 : f32
    %69 = vector.broadcast %cst_35 : f32 to vector<1x84xf32>
    %70 = arith.maximumf %68, %69 : vector<1x84xf32>
    %c3_36 = arith.constant 3 : index
    %c0_37 = arith.constant 0 : index
    %71 = vector.load %arg13[%c3_36, %c0_37] : memref<28x84xf32, #tpu.memory_space<vmem>>, vector<1x84xf32>
    tpu.vector_store %arg13[%c3_36, %c0_37], %70 {strides = array<i32>} : memref<28x84xf32, #tpu.memory_space<vmem>>, vector<1x84xf32>,
    %72 = vector.extract_strided_slice %27 {offsets = [8, 0], sizes = [1, 168], strides = [1, 1]} : vector<28x168xf32> to vector<1x168xf32>
    %73 = vector.extract_strided_slice %27 {offsets = [9, 0], sizes = [1, 168], strides = [1, 1]} : vector<28x168xf32> to vector<1x168xf32>
    %74 = arith.maximumf %72, %73 : vector<1x168xf32>
    %75 = vector.extract_strided_slice %74 {offsets = [0, 0], sizes = [1, 84], strides = [1, 1]} : vector<1x168xf32> to vector<1x84xf32>
    %76 = vector.extract_strided_slice %74 {offsets = [0, 84], sizes = [1, 84], strides = [1, 1]} : vector<1x168xf32> to vector<1x84xf32>
    %77 = arith.maximumf %75, %76 : vector<1x84xf32>
    %c0_38 = arith.constant 0 : index
    %c0_39 = arith.constant 0 : index
    %78 = vector.load %arg3[%c0_38, %c0_39] : memref<1x84xf32, #tpu.memory_space<vmem>>, vector<1x84xf32>
    %79 = arith.addf %77, %78 : vector<1x84xf32>
    %cst_40 = arith.constant 0.000000e+00 : f32
    %80 = vector.broadcast %cst_40 : f32 to vector<1x84xf32>
    %81 = arith.maximumf %79, %80 : vector<1x84xf32>
    %c4_41 = arith.constant 4 : index
    %c0_42 = arith.constant 0 : index
    %82 = vector.load %arg13[%c4_41, %c0_42] : memref<28x84xf32, #tpu.memory_space<vmem>>, vector<1x84xf32>
    tpu.vector_store %arg13[%c4_41, %c0_42], %81 {strides = array<i32>} : memref<28x84xf32, #tpu.memory_space<vmem>>, vector<1x84xf32>,
    %83 = vector.extract_strided_slice %27 {offsets = [10, 0], sizes = [1, 168], strides = [1, 1]} : vector<28x168xf32> to vector<1x168xf32>
    %84 = vector.extract_strided_slice %27 {offsets = [11, 0], sizes = [1, 168], strides = [1, 1]} : vector<28x168xf32> to vector<1x168xf32>
    %85 = arith.maximumf %83, %84 : vector<1x168xf32>
    %86 = vector.extract_strided_slice %85 {offsets = [0, 0], sizes = [1, 84], strides = [1, 1]} : vector<1x168xf32> to vector<1x84xf32>
    %87 = vector.extract_strided_slice %85 {offsets = [0, 84], sizes = [1, 84], strides = [1, 1]} : vector<1x168xf32> to vector<1x84xf32>
    %88 = arith.maximumf %86, %87 : vector<1x84xf32>
    %c0_43 = arith.constant 0 : index
    %c0_44 = arith.constant 0 : index
    %89 = vector.load %arg3[%c0_43, %c0_44] : memref<1x84xf32, #tpu.memory_space<vmem>>, vector<1x84xf32>
    %90 = arith.addf %88, %89 : vector<1x84xf32>
    %cst_45 = arith.constant 0.000000e+00 : f32
    %91 = vector.broadcast %cst_45 : f32 to vector<1x84xf32>
    %92 = arith.maximumf %90, %91 : vector<1x84xf32>
    %c5 = arith.constant 5 : index
    %c0_46 = arith.constant 0 : index
    %93 = vector.load %arg13[%c5, %c0_46] : memref<28x84xf32, #tpu.memory_space<vmem>>, vector<1x84xf32>
    tpu.vector_store %arg13[%c5, %c0_46], %92 {strides = array<i32>} : memref<28x84xf32, #tpu.memory_space<vmem>>, vector<1x84xf32>,
    %94 = vector.extract_strided_slice %27 {offsets = [12, 0], sizes = [1, 168], strides = [1, 1]} : vector<28x168xf32> to vector<1x168xf32>
    %95 = vector.extract_strided_slice %27 {offsets = [13, 0], sizes = [1, 168], strides = [1, 1]} : vector<28x168xf32> to vector<1x168xf32>
    %96 = arith.maximumf %94, %95 : vector<1x168xf32>
    %97 = vector.extract_strided_slice %96 {offsets = [0, 0], sizes = [1, 84], strides = [1, 1]} : vector<1x168xf32> to vector<1x84xf32>
    %98 = vector.extract_strided_slice %96 {offsets = [0, 84], sizes = [1, 84], strides = [1, 1]} : vector<1x168xf32> to vector<1x84xf32>
    %99 = arith.maximumf %97, %98 : vector<1x84xf32>
    %c0_47 = arith.constant 0 : index
    %c0_48 = arith.constant 0 : index
    %100 = vector.load %arg3[%c0_47, %c0_48] : memref<1x84xf32, #tpu.memory_space<vmem>>, vector<1x84xf32>
    %101 = arith.addf %99, %100 : vector<1x84xf32>
    %cst_49 = arith.constant 0.000000e+00 : f32
    %102 = vector.broadcast %cst_49 : f32 to vector<1x84xf32>
    %103 = arith.maximumf %101, %102 : vector<1x84xf32>
    %c6 = arith.constant 6 : index
    %c0_50 = arith.constant 0 : index
    %104 = vector.load %arg13[%c6, %c0_50] : memref<28x84xf32, #tpu.memory_space<vmem>>, vector<1x84xf32>
    tpu.vector_store %arg13[%c6, %c0_50], %103 {strides = array<i32>} : memref<28x84xf32, #tpu.memory_space<vmem>>, vector<1x84xf32>,
    %105 = vector.extract_strided_slice %27 {offsets = [14, 0], sizes = [1, 168], strides = [1, 1]} : vector<28x168xf32> to vector<1x168xf32>
    %106 = vector.extract_strided_slice %27 {offsets = [15, 0], sizes = [1, 168], strides = [1, 1]} : vector<28x168xf32> to vector<1x168xf32>
    %107 = arith.maximumf %105, %106 : vector<1x168xf32>
    %108 = vector.extract_strided_slice %107 {offsets = [0, 0], sizes = [1, 84], strides = [1, 1]} : vector<1x168xf32> to vector<1x84xf32>
    %109 = vector.extract_strided_slice %107 {offsets = [0, 84], sizes = [1, 84], strides = [1, 1]} : vector<1x168xf32> to vector<1x84xf32>
    %110 = arith.maximumf %108, %109 : vector<1x84xf32>
    %c0_51 = arith.constant 0 : index
    %c0_52 = arith.constant 0 : index
    %111 = vector.load %arg3[%c0_51, %c0_52] : memref<1x84xf32, #tpu.memory_space<vmem>>, vector<1x84xf32>
    %112 = arith.addf %110, %111 : vector<1x84xf32>
    %cst_53 = arith.constant 0.000000e+00 : f32
    %113 = vector.broadcast %cst_53 : f32 to vector<1x84xf32>
    %114 = arith.maximumf %112, %113 : vector<1x84xf32>
    %c7 = arith.constant 7 : index
    %c0_54 = arith.constant 0 : index
    %115 = vector.load %arg13[%c7, %c0_54] : memref<28x84xf32, #tpu.memory_space<vmem>>, vector<1x84xf32>
    tpu.vector_store %arg13[%c7, %c0_54], %114 {strides = array<i32>} : memref<28x84xf32, #tpu.memory_space<vmem>>, vector<1x84xf32>,
    %116 = vector.extract_strided_slice %27 {offsets = [16, 0], sizes = [1, 168], strides = [1, 1]} : vector<28x168xf32> to vector<1x168xf32>
    %117 = vector.extract_strided_slice %27 {offsets = [17, 0], sizes = [1, 168], strides = [1, 1]} : vector<28x168xf32> to vector<1x168xf32>
    %118 = arith.maximumf %116, %117 : vector<1x168xf32>
    %119 = vector.extract_strided_slice %118 {offsets = [0, 0], sizes = [1, 84], strides = [1, 1]} : vector<1x168xf32> to vector<1x84xf32>
    %120 = vector.extract_strided_slice %118 {offsets = [0, 84], sizes = [1, 84], strides = [1, 1]} : vector<1x168xf32> to vector<1x84xf32>
    %121 = arith.maximumf %119, %120 : vector<1x84xf32>
    %c0_55 = arith.constant 0 : index
    %c0_56 = arith.constant 0 : index
    %122 = vector.load %arg3[%c0_55, %c0_56] : memref<1x84xf32, #tpu.memory_space<vmem>>, vector<1x84xf32>
    %123 = arith.addf %121, %122 : vector<1x84xf32>
    %cst_57 = arith.constant 0.000000e+00 : f32
    %124 = vector.broadcast %cst_57 : f32 to vector<1x84xf32>
    %125 = arith.maximumf %123, %124 : vector<1x84xf32>
    %c8 = arith.constant 8 : index
    %c0_58 = arith.constant 0 : index
    %126 = vector.load %arg13[%c8, %c0_58] : memref<28x84xf32, #tpu.memory_space<vmem>>, vector<1x84xf32>
    tpu.vector_store %arg13[%c8, %c0_58], %125 {strides = array<i32>} : memref<28x84xf32, #tpu.memory_space<vmem>>, vector<1x84xf32>,
    %127 = vector.extract_strided_slice %27 {offsets = [18, 0], sizes = [1, 168], strides = [1, 1]} : vector<28x168xf32> to vector<1x168xf32>
    %128 = vector.extract_strided_slice %27 {offsets = [19, 0], sizes = [1, 168], strides = [1, 1]} : vector<28x168xf32> to vector<1x168xf32>
    %129 = arith.maximumf %127, %128 : vector<1x168xf32>
    %130 = vector.extract_strided_slice %129 {offsets = [0, 0], sizes = [1, 84], strides = [1, 1]} : vector<1x168xf32> to vector<1x84xf32>
    %131 = vector.extract_strided_slice %129 {offsets = [0, 84], sizes = [1, 84], strides = [1, 1]} : vector<1x168xf32> to vector<1x84xf32>
    %132 = arith.maximumf %130, %131 : vector<1x84xf32>
    %c0_59 = arith.constant 0 : index
    %c0_60 = arith.constant 0 : index
    %133 = vector.load %arg3[%c0_59, %c0_60] : memref<1x84xf32, #tpu.memory_space<vmem>>, vector<1x84xf32>
    %134 = arith.addf %132, %133 : vector<1x84xf32>
    %cst_61 = arith.constant 0.000000e+00 : f32
    %135 = vector.broadcast %cst_61 : f32 to vector<1x84xf32>
    %136 = arith.maximumf %134, %135 : vector<1x84xf32>
    %c9 = arith.constant 9 : index
    %c0_62 = arith.constant 0 : index
    %137 = vector.load %arg13[%c9, %c0_62] : memref<28x84xf32, #tpu.memory_space<vmem>>, vector<1x84xf32>
    tpu.vector_store %arg13[%c9, %c0_62], %136 {strides = array<i32>} : memref<28x84xf32, #tpu.memory_space<vmem>>, vector<1x84xf32>,
    %138 = vector.extract_strided_slice %27 {offsets = [20, 0], sizes = [1, 168], strides = [1, 1]} : vector<28x168xf32> to vector<1x168xf32>
    %139 = vector.extract_strided_slice %27 {offsets = [21, 0], sizes = [1, 168], strides = [1, 1]} : vector<28x168xf32> to vector<1x168xf32>
    %140 = arith.maximumf %138, %139 : vector<1x168xf32>
    %141 = vector.extract_strided_slice %140 {offsets = [0, 0], sizes = [1, 84], strides = [1, 1]} : vector<1x168xf32> to vector<1x84xf32>
    %142 = vector.extract_strided_slice %140 {offsets = [0, 84], sizes = [1, 84], strides = [1, 1]} : vector<1x168xf32> to vector<1x84xf32>
    %143 = arith.maximumf %141, %142 : vector<1x84xf32>
    %c0_63 = arith.constant 0 : index
    %c0_64 = arith.constant 0 : index
    %144 = vector.load %arg3[%c0_63, %c0_64] : memref<1x84xf32, #tpu.memory_space<vmem>>, vector<1x84xf32>
    %145 = arith.addf %143, %144 : vector<1x84xf32>
    %cst_65 = arith.constant 0.000000e+00 : f32
    %146 = vector.broadcast %cst_65 : f32 to vector<1x84xf32>
    %147 = arith.maximumf %145, %146 : vector<1x84xf32>
    %c10 = arith.constant 10 : index
    %c0_66 = arith.constant 0 : index
    %148 = vector.load %arg13[%c10, %c0_66] : memref<28x84xf32, #tpu.memory_space<vmem>>, vector<1x84xf32>
    tpu.vector_store %arg13[%c10, %c0_66], %147 {strides = array<i32>} : memref<28x84xf32, #tpu.memory_space<vmem>>, vector<1x84xf32>,
    %149 = vector.extract_strided_slice %27 {offsets = [22, 0], sizes = [1, 168], strides = [1, 1]} : vector<28x168xf32> to vector<1x168xf32>
    %150 = vector.extract_strided_slice %27 {offsets = [23, 0], sizes = [1, 168], strides = [1, 1]} : vector<28x168xf32> to vector<1x168xf32>
    %151 = arith.maximumf %149, %150 : vector<1x168xf32>
    %152 = vector.extract_strided_slice %151 {offsets = [0, 0], sizes = [1, 84], strides = [1, 1]} : vector<1x168xf32> to vector<1x84xf32>
    %153 = vector.extract_strided_slice %151 {offsets = [0, 84], sizes = [1, 84], strides = [1, 1]} : vector<1x168xf32> to vector<1x84xf32>
    %154 = arith.maximumf %152, %153 : vector<1x84xf32>
    %c0_67 = arith.constant 0 : index
    %c0_68 = arith.constant 0 : index
    %155 = vector.load %arg3[%c0_67, %c0_68] : memref<1x84xf32, #tpu.memory_space<vmem>>, vector<1x84xf32>
    %156 = arith.addf %154, %155 : vector<1x84xf32>
    %cst_69 = arith.constant 0.000000e+00 : f32
    %157 = vector.broadcast %cst_69 : f32 to vector<1x84xf32>
    %158 = arith.maximumf %156, %157 : vector<1x84xf32>
    %c11 = arith.constant 11 : index
    %c0_70 = arith.constant 0 : index
    %159 = vector.load %arg13[%c11, %c0_70] : memref<28x84xf32, #tpu.memory_space<vmem>>, vector<1x84xf32>
    tpu.vector_store %arg13[%c11, %c0_70], %158 {strides = array<i32>} : memref<28x84xf32, #tpu.memory_space<vmem>>, vector<1x84xf32>,
    %160 = vector.extract_strided_slice %27 {offsets = [24, 0], sizes = [1, 168], strides = [1, 1]} : vector<28x168xf32> to vector<1x168xf32>
    %161 = vector.extract_strided_slice %27 {offsets = [25, 0], sizes = [1, 168], strides = [1, 1]} : vector<28x168xf32> to vector<1x168xf32>
    %162 = arith.maximumf %160, %161 : vector<1x168xf32>
    %163 = vector.extract_strided_slice %162 {offsets = [0, 0], sizes = [1, 84], strides = [1, 1]} : vector<1x168xf32> to vector<1x84xf32>
    %164 = vector.extract_strided_slice %162 {offsets = [0, 84], sizes = [1, 84], strides = [1, 1]} : vector<1x168xf32> to vector<1x84xf32>
    %165 = arith.maximumf %163, %164 : vector<1x84xf32>
    %c0_71 = arith.constant 0 : index
    %c0_72 = arith.constant 0 : index
    %166 = vector.load %arg3[%c0_71, %c0_72] : memref<1x84xf32, #tpu.memory_space<vmem>>, vector<1x84xf32>
    %167 = arith.addf %165, %166 : vector<1x84xf32>
    %cst_73 = arith.constant 0.000000e+00 : f32
    %168 = vector.broadcast %cst_73 : f32 to vector<1x84xf32>
    %169 = arith.maximumf %167, %168 : vector<1x84xf32>
    %c12 = arith.constant 12 : index
    %c0_74 = arith.constant 0 : index
    %170 = vector.load %arg13[%c12, %c0_74] : memref<28x84xf32, #tpu.memory_space<vmem>>, vector<1x84xf32>
    tpu.vector_store %arg13[%c12, %c0_74], %169 {strides = array<i32>} : memref<28x84xf32, #tpu.memory_space<vmem>>, vector<1x84xf32>,
    %171 = vector.extract_strided_slice %27 {offsets = [26, 0], sizes = [1, 168], strides = [1, 1]} : vector<28x168xf32> to vector<1x168xf32>
    %172 = vector.extract_strided_slice %27 {offsets = [27, 0], sizes = [1, 168], strides = [1, 1]} : vector<28x168xf32> to vector<1x168xf32>
    %173 = arith.maximumf %171, %172 : vector<1x168xf32>
    %174 = vector.extract_strided_slice %173 {offsets = [0, 0], sizes = [1, 84], strides = [1, 1]} : vector<1x168xf32> to vector<1x84xf32>
    %175 = vector.extract_strided_slice %173 {offsets = [0, 84], sizes = [1, 84], strides = [1, 1]} : vector<1x168xf32> to vector<1x84xf32>
    %176 = arith.maximumf %174, %175 : vector<1x84xf32>
    %c0_75 = arith.constant 0 : index
    %c0_76 = arith.constant 0 : index
    %177 = vector.load %arg3[%c0_75, %c0_76] : memref<1x84xf32, #tpu.memory_space<vmem>>, vector<1x84xf32>
    %178 = arith.addf %176, %177 : vector<1x84xf32>
    %cst_77 = arith.constant 0.000000e+00 : f32
    %179 = vector.broadcast %cst_77 : f32 to vector<1x84xf32>
    %180 = arith.maximumf %178, %179 : vector<1x84xf32>
    %c13 = arith.constant 13 : index
    %c0_78 = arith.constant 0 : index
    %181 = vector.load %arg13[%c13, %c0_78] : memref<28x84xf32, #tpu.memory_space<vmem>>, vector<1x84xf32>
    tpu.vector_store %arg13[%c13, %c0_78], %180 {strides = array<i32>} : memref<28x84xf32, #tpu.memory_space<vmem>>, vector<1x84xf32>,
    %cst_79 = arith.constant 0.000000e+00 : f32
    %182 = vector.broadcast %cst_79 : f32 to vector<10x160xf32>
    %c0_80 = arith.constant 0 : index
    %c0_81 = arith.constant 0 : index
    %183 = vector.load %arg13[%c0_80, %c0_81] : memref<28x84xf32, #tpu.memory_space<vmem>>, vector<10x84xf32>
    %c0_82 = arith.constant 0 : index
    %c0_83 = arith.constant 0 : index
    %c0_84 = arith.constant 0 : index
    %184 = vector.load %arg4[%c0_82, %c0_83, %c0_84] : memref<5x84x160xf32, #tpu.memory_space<vmem>>, vector<1x84x160xf32>
    %185 = vector.shape_cast %184 : vector<1x84x160xf32> to vector<84x160xf32>
    %cst_85 = arith.constant dense<0.000000e+00> : vector<10x160xf32>
    %186 = tpu.matmul %183, %185, %cst_85 {dimension_numbers = #tpu.dot_dimension_numbers<[1], [0], [0], [1], [0, 0, 1, 1], [], []>} : vector<10x84xf32>, vector<84x160xf32>, vector<10x160xf32> -> vector<10x160xf32>
    %187 = arith.addf %182, %186 : vector<10x160xf32>
    %c1_86 = arith.constant 1 : index
    %c0_87 = arith.constant 0 : index
    %188 = vector.load %arg13[%c1_86, %c0_87] : memref<28x84xf32, #tpu.memory_space<vmem>>, vector<10x84xf32>
    %c1_88 = arith.constant 1 : index
    %c0_89 = arith.constant 0 : index
    %c0_90 = arith.constant 0 : index
    %189 = vector.load %arg4[%c1_88, %c0_89, %c0_90] : memref<5x84x160xf32, #tpu.memory_space<vmem>>, vector<1x84x160xf32>
    %190 = vector.shape_cast %189 : vector<1x84x160xf32> to vector<84x160xf32>
    %cst_91 = arith.constant dense<0.000000e+00> : vector<10x160xf32>
    %191 = tpu.matmul %188, %190, %cst_91 {dimension_numbers = #tpu.dot_dimension_numbers<[1], [0], [0], [1], [0, 0, 1, 1], [], []>} : vector<10x84xf32>, vector<84x160xf32>, vector<10x160xf32> -> vector<10x160xf32>
    %192 = arith.addf %187, %191 : vector<10x160xf32>
    %c2_92 = arith.constant 2 : index
    %c0_93 = arith.constant 0 : index
    %193 = vector.load %arg13[%c2_92, %c0_93] : memref<28x84xf32, #tpu.memory_space<vmem>>, vector<10x84xf32>
    %c2_94 = arith.constant 2 : index
    %c0_95 = arith.constant 0 : index
    %c0_96 = arith.constant 0 : index
    %194 = vector.load %arg4[%c2_94, %c0_95, %c0_96] : memref<5x84x160xf32, #tpu.memory_space<vmem>>, vector<1x84x160xf32>
    %195 = vector.shape_cast %194 : vector<1x84x160xf32> to vector<84x160xf32>
    %cst_97 = arith.constant dense<0.000000e+00> : vector<10x160xf32>
    %196 = tpu.matmul %193, %195, %cst_97 {dimension_numbers = #tpu.dot_dimension_numbers<[1], [0], [0], [1], [0, 0, 1, 1], [], []>} : vector<10x84xf32>, vector<84x160xf32>, vector<10x160xf32> -> vector<10x160xf32>
    %197 = arith.addf %192, %196 : vector<10x160xf32>
    %c3_98 = arith.constant 3 : index
    %c0_99 = arith.constant 0 : index
    %198 = vector.load %arg13[%c3_98, %c0_99] : memref<28x84xf32, #tpu.memory_space<vmem>>, vector<10x84xf32>
    %c3_100 = arith.constant 3 : index
    %c0_101 = arith.constant 0 : index
    %c0_102 = arith.constant 0 : index
    %199 = vector.load %arg4[%c3_100, %c0_101, %c0_102] : memref<5x84x160xf32, #tpu.memory_space<vmem>>, vector<1x84x160xf32>
    %200 = vector.shape_cast %199 : vector<1x84x160xf32> to vector<84x160xf32>
    %cst_103 = arith.constant dense<0.000000e+00> : vector<10x160xf32>
    %201 = tpu.matmul %198, %200, %cst_103 {dimension_numbers = #tpu.dot_dimension_numbers<[1], [0], [0], [1], [0, 0, 1, 1], [], []>} : vector<10x84xf32>, vector<84x160xf32>, vector<10x160xf32> -> vector<10x160xf32>
    %202 = arith.addf %197, %201 : vector<10x160xf32>
    %c4_104 = arith.constant 4 : index
    %c0_105 = arith.constant 0 : index
    %203 = vector.load %arg13[%c4_104, %c0_105] : memref<28x84xf32, #tpu.memory_space<vmem>>, vector<10x84xf32>
    %c4_106 = arith.constant 4 : index
    %c0_107 = arith.constant 0 : index
    %c0_108 = arith.constant 0 : index
    %204 = vector.load %arg4[%c4_106, %c0_107, %c0_108] : memref<5x84x160xf32, #tpu.memory_space<vmem>>, vector<1x84x160xf32>
    %205 = vector.shape_cast %204 : vector<1x84x160xf32> to vector<84x160xf32>
    %cst_109 = arith.constant dense<0.000000e+00> : vector<10x160xf32>
    %206 = tpu.matmul %203, %205, %cst_109 {dimension_numbers = #tpu.dot_dimension_numbers<[1], [0], [0], [1], [0, 0, 1, 1], [], []>} : vector<10x84xf32>, vector<84x160xf32>, vector<10x160xf32> -> vector<10x160xf32>
    %207 = arith.addf %202, %206 : vector<10x160xf32>
    %c0_110 = arith.constant 0 : index
    %c0_111 = arith.constant 0 : index
    %208 = vector.load %arg7[%c0_110, %c0_111] : memref<1x120xf32, #tpu.memory_space<vmem>>, vector<1x120xf32>
    %209 = vector.extract_strided_slice %207 {offsets = [0, 0], sizes = [1, 160], strides = [1, 1]} : vector<10x160xf32> to vector<1x160xf32>
    %210 = vector.extract_strided_slice %207 {offsets = [1, 0], sizes = [1, 160], strides = [1, 1]} : vector<10x160xf32> to vector<1x160xf32>
    %211 = arith.maximumf %209, %210 : vector<1x160xf32>
    %212 = vector.extract_strided_slice %211 {offsets = [0, 0], sizes = [1, 80], strides = [1, 1]} : vector<1x160xf32> to vector<1x80xf32>
    %213 = vector.extract_strided_slice %211 {offsets = [0, 80], sizes = [1, 80], strides = [1, 1]} : vector<1x160xf32> to vector<1x80xf32>
    %214 = arith.maximumf %212, %213 : vector<1x80xf32>
    %c0_112 = arith.constant 0 : index
    %c0_113 = arith.constant 0 : index
    %215 = vector.load %arg5[%c0_112, %c0_113] : memref<1x80xf32, #tpu.memory_space<vmem>>, vector<1x80xf32>
    %216 = arith.addf %214, %215 : vector<1x80xf32>
    %cst_114 = arith.constant 0.000000e+00 : f32
    %217 = vector.broadcast %cst_114 : f32 to vector<1x80xf32>
    %218 = arith.maximumf %216, %217 : vector<1x80xf32>
    %c0_115 = arith.constant 0 : index
    %c0_116 = arith.constant 0 : index
    %c0_117 = arith.constant 0 : index
    %219 = vector.load %arg6[%c0_115, %c0_116, %c0_117] : memref<5x80x120xf32, #tpu.memory_space<vmem>>, vector<1x80x120xf32>
    %220 = vector.shape_cast %219 : vector<1x80x120xf32> to vector<80x120xf32>
    %cst_118 = arith.constant dense<0.000000e+00> : vector<1x120xf32>
    %221 = tpu.matmul %218, %220, %cst_118 {dimension_numbers = #tpu.dot_dimension_numbers<[1], [0], [0], [1], [0, 0, 1, 1], [], []>} : vector<1x80xf32>, vector<80x120xf32>, vector<1x120xf32> -> vector<1x120xf32>
    %222 = arith.addf %208, %221 : vector<1x120xf32>
    %223 = vector.extract_strided_slice %207 {offsets = [2, 0], sizes = [1, 160], strides = [1, 1]} : vector<10x160xf32> to vector<1x160xf32>
    %224 = vector.extract_strided_slice %207 {offsets = [3, 0], sizes = [1, 160], strides = [1, 1]} : vector<10x160xf32> to vector<1x160xf32>
    %225 = arith.maximumf %223, %224 : vector<1x160xf32>
    %226 = vector.extract_strided_slice %225 {offsets = [0, 0], sizes = [1, 80], strides = [1, 1]} : vector<1x160xf32> to vector<1x80xf32>
    %227 = vector.extract_strided_slice %225 {offsets = [0, 80], sizes = [1, 80], strides = [1, 1]} : vector<1x160xf32> to vector<1x80xf32>
    %228 = arith.maximumf %226, %227 : vector<1x80xf32>
    %c0_119 = arith.constant 0 : index
    %c0_120 = arith.constant 0 : index
    %229 = vector.load %arg5[%c0_119, %c0_120] : memref<1x80xf32, #tpu.memory_space<vmem>>, vector<1x80xf32>
    %230 = arith.addf %228, %229 : vector<1x80xf32>
    %cst_121 = arith.constant 0.000000e+00 : f32
    %231 = vector.broadcast %cst_121 : f32 to vector<1x80xf32>
    %232 = arith.maximumf %230, %231 : vector<1x80xf32>
    %c1_122 = arith.constant 1 : index
    %c0_123 = arith.constant 0 : index
    %c0_124 = arith.constant 0 : index
    %233 = vector.load %arg6[%c1_122, %c0_123, %c0_124] : memref<5x80x120xf32, #tpu.memory_space<vmem>>, vector<1x80x120xf32>
    %234 = vector.shape_cast %233 : vector<1x80x120xf32> to vector<80x120xf32>
    %cst_125 = arith.constant dense<0.000000e+00> : vector<1x120xf32>
    %235 = tpu.matmul %232, %234, %cst_125 {dimension_numbers = #tpu.dot_dimension_numbers<[1], [0], [0], [1], [0, 0, 1, 1], [], []>} : vector<1x80xf32>, vector<80x120xf32>, vector<1x120xf32> -> vector<1x120xf32>
    %236 = arith.addf %222, %235 : vector<1x120xf32>
    %237 = vector.extract_strided_slice %207 {offsets = [4, 0], sizes = [1, 160], strides = [1, 1]} : vector<10x160xf32> to vector<1x160xf32>
    %238 = vector.extract_strided_slice %207 {offsets = [5, 0], sizes = [1, 160], strides = [1, 1]} : vector<10x160xf32> to vector<1x160xf32>
    %239 = arith.maximumf %237, %238 : vector<1x160xf32>
    %240 = vector.extract_strided_slice %239 {offsets = [0, 0], sizes = [1, 80], strides = [1, 1]} : vector<1x160xf32> to vector<1x80xf32>
    %241 = vector.extract_strided_slice %239 {offsets = [0, 80], sizes = [1, 80], strides = [1, 1]} : vector<1x160xf32> to vector<1x80xf32>
    %242 = arith.maximumf %240, %241 : vector<1x80xf32>
    %c0_126 = arith.constant 0 : index
    %c0_127 = arith.constant 0 : index
    %243 = vector.load %arg5[%c0_126, %c0_127] : memref<1x80xf32, #tpu.memory_space<vmem>>, vector<1x80xf32>
    %244 = arith.addf %242, %243 : vector<1x80xf32>
    %cst_128 = arith.constant 0.000000e+00 : f32
    %245 = vector.broadcast %cst_128 : f32 to vector<1x80xf32>
    %246 = arith.maximumf %244, %245 : vector<1x80xf32>
    %c2_129 = arith.constant 2 : index
    %c0_130 = arith.constant 0 : index
    %c0_131 = arith.constant 0 : index
    %247 = vector.load %arg6[%c2_129, %c0_130, %c0_131] : memref<5x80x120xf32, #tpu.memory_space<vmem>>, vector<1x80x120xf32>
    %248 = vector.shape_cast %247 : vector<1x80x120xf32> to vector<80x120xf32>
    %cst_132 = arith.constant dense<0.000000e+00> : vector<1x120xf32>
    %249 = tpu.matmul %246, %248, %cst_132 {dimension_numbers = #tpu.dot_dimension_numbers<[1], [0], [0], [1], [0, 0, 1, 1], [], []>} : vector<1x80xf32>, vector<80x120xf32>, vector<1x120xf32> -> vector<1x120xf32>
    %250 = arith.addf %236, %249 : vector<1x120xf32>
    %251 = vector.extract_strided_slice %207 {offsets = [6, 0], sizes = [1, 160], strides = [1, 1]} : vector<10x160xf32> to vector<1x160xf32>
    %252 = vector.extract_strided_slice %207 {offsets = [7, 0], sizes = [1, 160], strides = [1, 1]} : vector<10x160xf32> to vector<1x160xf32>
    %253 = arith.maximumf %251, %252 : vector<1x160xf32>
    %254 = vector.extract_strided_slice %253 {offsets = [0, 0], sizes = [1, 80], strides = [1, 1]} : vector<1x160xf32> to vector<1x80xf32>
    %255 = vector.extract_strided_slice %253 {offsets = [0, 80], sizes = [1, 80], strides = [1, 1]} : vector<1x160xf32> to vector<1x80xf32>
    %256 = arith.maximumf %254, %255 : vector<1x80xf32>
    %c0_133 = arith.constant 0 : index
    %c0_134 = arith.constant 0 : index
    %257 = vector.load %arg5[%c0_133, %c0_134] : memref<1x80xf32, #tpu.memory_space<vmem>>, vector<1x80xf32>
    %258 = arith.addf %256, %257 : vector<1x80xf32>
    %cst_135 = arith.constant 0.000000e+00 : f32
    %259 = vector.broadcast %cst_135 : f32 to vector<1x80xf32>
    %260 = arith.maximumf %258, %259 : vector<1x80xf32>
    %c3_136 = arith.constant 3 : index
    %c0_137 = arith.constant 0 : index
    %c0_138 = arith.constant 0 : index
    %261 = vector.load %arg6[%c3_136, %c0_137, %c0_138] : memref<5x80x120xf32, #tpu.memory_space<vmem>>, vector<1x80x120xf32>
    %262 = vector.shape_cast %261 : vector<1x80x120xf32> to vector<80x120xf32>
    %cst_139 = arith.constant dense<0.000000e+00> : vector<1x120xf32>
    %263 = tpu.matmul %260, %262, %cst_139 {dimension_numbers = #tpu.dot_dimension_numbers<[1], [0], [0], [1], [0, 0, 1, 1], [], []>} : vector<1x80xf32>, vector<80x120xf32>, vector<1x120xf32> -> vector<1x120xf32>
    %264 = arith.addf %250, %263 : vector<1x120xf32>
    %265 = vector.extract_strided_slice %207 {offsets = [8, 0], sizes = [1, 160], strides = [1, 1]} : vector<10x160xf32> to vector<1x160xf32>
    %266 = vector.extract_strided_slice %207 {offsets = [9, 0], sizes = [1, 160], strides = [1, 1]} : vector<10x160xf32> to vector<1x160xf32>
    %267 = arith.maximumf %265, %266 : vector<1x160xf32>
    %268 = vector.extract_strided_slice %267 {offsets = [0, 0], sizes = [1, 80], strides = [1, 1]} : vector<1x160xf32> to vector<1x80xf32>
    %269 = vector.extract_strided_slice %267 {offsets = [0, 80], sizes = [1, 80], strides = [1, 1]} : vector<1x160xf32> to vector<1x80xf32>
    %270 = arith.maximumf %268, %269 : vector<1x80xf32>
    %c0_140 = arith.constant 0 : index
    %c0_141 = arith.constant 0 : index
    %271 = vector.load %arg5[%c0_140, %c0_141] : memref<1x80xf32, #tpu.memory_space<vmem>>, vector<1x80xf32>
    %272 = arith.addf %270, %271 : vector<1x80xf32>
    %cst_142 = arith.constant 0.000000e+00 : f32
    %273 = vector.broadcast %cst_142 : f32 to vector<1x80xf32>
    %274 = arith.maximumf %272, %273 : vector<1x80xf32>
    %c4_143 = arith.constant 4 : index
    %c0_144 = arith.constant 0 : index
    %c0_145 = arith.constant 0 : index
    %275 = vector.load %arg6[%c4_143, %c0_144, %c0_145] : memref<5x80x120xf32, #tpu.memory_space<vmem>>, vector<1x80x120xf32>
    %276 = vector.shape_cast %275 : vector<1x80x120xf32> to vector<80x120xf32>
    %cst_146 = arith.constant dense<0.000000e+00> : vector<1x120xf32>
    %277 = tpu.matmul %274, %276, %cst_146 {dimension_numbers = #tpu.dot_dimension_numbers<[1], [0], [0], [1], [0, 0, 1, 1], [], []>} : vector<1x80xf32>, vector<80x120xf32>, vector<1x120xf32> -> vector<1x120xf32>
    %278 = arith.addf %264, %277 : vector<1x120xf32>
    %cst_147 = arith.constant 0.000000e+00 : f32
    %279 = vector.broadcast %cst_147 : f32 to vector<1x120xf32>
    %280 = arith.maximumf %278, %279 : vector<1x120xf32>
    %c0_148 = arith.constant 0 : index
    %c0_149 = arith.constant 0 : index
    %281 = vector.load %arg8[%c0_148, %c0_149] : memref<120x84xf32, #tpu.memory_space<vmem>>, vector<120x84xf32>
    %cst_150 = arith.constant dense<0.000000e+00> : vector<1x84xf32>
    %282 = tpu.matmul %280, %281, %cst_150 {dimension_numbers = #tpu.dot_dimension_numbers<[1], [0], [0], [1], [0, 0, 1, 1], [], []>} : vector<1x120xf32>, vector<120x84xf32>, vector<1x84xf32> -> vector<1x84xf32>
    %c0_151 = arith.constant 0 : index
    %c0_152 = arith.constant 0 : index
    %283 = vector.load %arg9[%c0_151, %c0_152] : memref<1x84xf32, #tpu.memory_space<vmem>>, vector<1x84xf32>
    %284 = arith.addf %282, %283 : vector<1x84xf32>
    %cst_153 = arith.constant 0.000000e+00 : f32
    %285 = vector.broadcast %cst_153 : f32 to vector<1x84xf32>
    %286 = arith.maximumf %284, %285 : vector<1x84xf32>
    %c0_154 = arith.constant 0 : index
    %c0_155 = arith.constant 0 : index
    %287 = vector.load %arg10[%c0_154, %c0_155] : memref<84x10xf32, #tpu.memory_space<vmem>>, vector<84x10xf32>
    %cst_156 = arith.constant dense<0.000000e+00> : vector<1x10xf32>
    %288 = tpu.matmul %286, %287, %cst_156 {dimension_numbers = #tpu.dot_dimension_numbers<[1], [0], [0], [1], [0, 0, 1, 1], [], []>} : vector<1x84xf32>, vector<84x10xf32>, vector<1x10xf32> -> vector<1x10xf32>
    %c0_157 = arith.constant 0 : index
    %c0_158 = arith.constant 0 : index
    %289 = vector.load %arg11[%c0_157, %c0_158] : memref<1x10xf32, #tpu.memory_space<vmem>>, vector<1x10xf32>
    %290 = arith.addf %288, %289 : vector<1x10xf32>
    %c0_159 = arith.constant 0 : index
    %c0_160 = arith.constant 0 : index
    %291 = vector.load %arg12[%c0_159, %c0_160] : memref<2x10xf32, #tpu.memory_space<vmem>>, vector<1x10xf32>
    tpu.vector_store %arg12[%c0_159, %c0_160], %290 {strides = array<i32>} : memref<2x10xf32, #tpu.memory_space<vmem>>, vector<1x10xf32>,
    %c1_161 = arith.constant 1 : index
    %c0_162 = arith.constant 0 : index
    %c0_163 = arith.constant 0 : index
    %292 = vector.load %arg1[%c1_161, %c0_162, %c0_163] : memref<2x32x32xf32, #tpu.memory_space<vmem>>, vector<1x32x32xf32>
    %293 = vector.shape_cast %292 : vector<1x32x32xf32> to vector<32x32xf32>
    %cst_164 = arith.constant 0.000000e+00 : f32
    %294 = vector.broadcast %cst_164 : f32 to vector<28x168xf32>
    %295 = vector.extract_strided_slice %293 {offsets = [0, 0], sizes = [28, 32], strides = [1, 1]} : vector<32x32xf32> to vector<28x32xf32>
    %c0_165 = arith.constant 0 : index
    %c0_166 = arith.constant 0 : index
    %c0_167 = arith.constant 0 : index
    %296 = vector.load %arg2[%c0_165, %c0_166, %c0_167] : memref<5x32x168xf32, #tpu.memory_space<vmem>>, vector<1x32x168xf32>
    %297 = vector.shape_cast %296 : vector<1x32x168xf32> to vector<32x168xf32>
    %cst_168 = arith.constant dense<0.000000e+00> : vector<28x168xf32>
    %298 = tpu.matmul %295, %297, %cst_168 {dimension_numbers = #tpu.dot_dimension_numbers<[1], [0], [0], [1], [0, 0, 1, 1], [], []>} : vector<28x32xf32>, vector<32x168xf32>, vector<28x168xf32> -> vector<28x168xf32>
    %299 = arith.addf %294, %298 : vector<28x168xf32>
    %300 = vector.extract_strided_slice %293 {offsets = [1, 0], sizes = [28, 32], strides = [1, 1]} : vector<32x32xf32> to vector<28x32xf32>
    %c1_169 = arith.constant 1 : index
    %c0_170 = arith.constant 0 : index
    %c0_171 = arith.constant 0 : index
    %301 = vector.load %arg2[%c1_169, %c0_170, %c0_171] : memref<5x32x168xf32, #tpu.memory_space<vmem>>, vector<1x32x168xf32>
    %302 = vector.shape_cast %301 : vector<1x32x168xf32> to vector<32x168xf32>
    %cst_172 = arith.constant dense<0.000000e+00> : vector<28x168xf32>
    %303 = tpu.matmul %300, %302, %cst_172 {dimension_numbers = #tpu.dot_dimension_numbers<[1], [0], [0], [1], [0, 0, 1, 1], [], []>} : vector<28x32xf32>, vector<32x168xf32>, vector<28x168xf32> -> vector<28x168xf32>
    %304 = arith.addf %299, %303 : vector<28x168xf32>
    %305 = vector.extract_strided_slice %293 {offsets = [2, 0], sizes = [28, 32], strides = [1, 1]} : vector<32x32xf32> to vector<28x32xf32>
    %c2_173 = arith.constant 2 : index
    %c0_174 = arith.constant 0 : index
    %c0_175 = arith.constant 0 : index
    %306 = vector.load %arg2[%c2_173, %c0_174, %c0_175] : memref<5x32x168xf32, #tpu.memory_space<vmem>>, vector<1x32x168xf32>
    %307 = vector.shape_cast %306 : vector<1x32x168xf32> to vector<32x168xf32>
    %cst_176 = arith.constant dense<0.000000e+00> : vector<28x168xf32>
    %308 = tpu.matmul %305, %307, %cst_176 {dimension_numbers = #tpu.dot_dimension_numbers<[1], [0], [0], [1], [0, 0, 1, 1], [], []>} : vector<28x32xf32>, vector<32x168xf32>, vector<28x168xf32> -> vector<28x168xf32>
    %309 = arith.addf %304, %308 : vector<28x168xf32>
    %310 = vector.extract_strided_slice %293 {offsets = [3, 0], sizes = [28, 32], strides = [1, 1]} : vector<32x32xf32> to vector<28x32xf32>
    %c3_177 = arith.constant 3 : index
    %c0_178 = arith.constant 0 : index
    %c0_179 = arith.constant 0 : index
    %311 = vector.load %arg2[%c3_177, %c0_178, %c0_179] : memref<5x32x168xf32, #tpu.memory_space<vmem>>, vector<1x32x168xf32>
    %312 = vector.shape_cast %311 : vector<1x32x168xf32> to vector<32x168xf32>
    %cst_180 = arith.constant dense<0.000000e+00> : vector<28x168xf32>
    %313 = tpu.matmul %310, %312, %cst_180 {dimension_numbers = #tpu.dot_dimension_numbers<[1], [0], [0], [1], [0, 0, 1, 1], [], []>} : vector<28x32xf32>, vector<32x168xf32>, vector<28x168xf32> -> vector<28x168xf32>
    %314 = arith.addf %309, %313 : vector<28x168xf32>
    %315 = vector.extract_strided_slice %293 {offsets = [4, 0], sizes = [28, 32], strides = [1, 1]} : vector<32x32xf32> to vector<28x32xf32>
    %c4_181 = arith.constant 4 : index
    %c0_182 = arith.constant 0 : index
    %c0_183 = arith.constant 0 : index
    %316 = vector.load %arg2[%c4_181, %c0_182, %c0_183] : memref<5x32x168xf32, #tpu.memory_space<vmem>>, vector<1x32x168xf32>
    %317 = vector.shape_cast %316 : vector<1x32x168xf32> to vector<32x168xf32>
    %cst_184 = arith.constant dense<0.000000e+00> : vector<28x168xf32>
    %318 = tpu.matmul %315, %317, %cst_184 {dimension_numbers = #tpu.dot_dimension_numbers<[1], [0], [0], [1], [0, 0, 1, 1], [], []>} : vector<28x32xf32>, vector<32x168xf32>, vector<28x168xf32> -> vector<28x168xf32>
    %319 = arith.addf %314, %318 : vector<28x168xf32>
    %320 = vector.extract_strided_slice %319 {offsets = [0, 0], sizes = [1, 168], strides = [1, 1]} : vector<28x168xf32> to vector<1x168xf32>
    %321 = vector.extract_strided_slice %319 {offsets = [1, 0], sizes = [1, 168], strides = [1, 1]} : vector<28x168xf32> to vector<1x168xf32>
    %322 = arith.maximumf %320, %321 : vector<1x168xf32>
    %323 = vector.extract_strided_slice %322 {offsets = [0, 0], sizes = [1, 84], strides = [1, 1]} : vector<1x168xf32> to vector<1x84xf32>
    %324 = vector.extract_strided_slice %322 {offsets = [0, 84], sizes = [1, 84], strides = [1, 1]} : vector<1x168xf32> to vector<1x84xf32>
    %325 = arith.maximumf %323, %324 : vector<1x84xf32>
    %c0_185 = arith.constant 0 : index
    %c0_186 = arith.constant 0 : index
    %326 = vector.load %arg3[%c0_185, %c0_186] : memref<1x84xf32, #tpu.memory_space<vmem>>, vector<1x84xf32>
    %327 = arith.addf %325, %326 : vector<1x84xf32>
    %cst_187 = arith.constant 0.000000e+00 : f32
    %328 = vector.broadcast %cst_187 : f32 to vector<1x84xf32>
    %329 = arith.maximumf %327, %328 : vector<1x84xf32>
    %c14 = arith.constant 14 : index
    %c0_188 = arith.constant 0 : index
    %330 = vector.load %arg13[%c14, %c0_188] : memref<28x84xf32, #tpu.memory_space<vmem>>, vector<1x84xf32>
    tpu.vector_store %arg13[%c14, %c0_188], %329 {strides = array<i32>} : memref<28x84xf32, #tpu.memory_space<vmem>>, vector<1x84xf32>,
    %331 = vector.extract_strided_slice %319 {offsets = [2, 0], sizes = [1, 168], strides = [1, 1]} : vector<28x168xf32> to vector<1x168xf32>
    %332 = vector.extract_strided_slice %319 {offsets = [3, 0], sizes = [1, 168], strides = [1, 1]} : vector<28x168xf32> to vector<1x168xf32>
    %333 = arith.maximumf %331, %332 : vector<1x168xf32>
    %334 = vector.extract_strided_slice %333 {offsets = [0, 0], sizes = [1, 84], strides = [1, 1]} : vector<1x168xf32> to vector<1x84xf32>
    %335 = vector.extract_strided_slice %333 {offsets = [0, 84], sizes = [1, 84], strides = [1, 1]} : vector<1x168xf32> to vector<1x84xf32>
    %336 = arith.maximumf %334, %335 : vector<1x84xf32>
    %c0_189 = arith.constant 0 : index
    %c0_190 = arith.constant 0 : index
    %337 = vector.load %arg3[%c0_189, %c0_190] : memref<1x84xf32, #tpu.memory_space<vmem>>, vector<1x84xf32>
    %338 = arith.addf %336, %337 : vector<1x84xf32>
    %cst_191 = arith.constant 0.000000e+00 : f32
    %339 = vector.broadcast %cst_191 : f32 to vector<1x84xf32>
    %340 = arith.maximumf %338, %339 : vector<1x84xf32>
    %c15 = arith.constant 15 : index
    %c0_192 = arith.constant 0 : index
    %341 = vector.load %arg13[%c15, %c0_192] : memref<28x84xf32, #tpu.memory_space<vmem>>, vector<1x84xf32>
    tpu.vector_store %arg13[%c15, %c0_192], %340 {strides = array<i32>} : memref<28x84xf32, #tpu.memory_space<vmem>>, vector<1x84xf32>,
    %342 = vector.extract_strided_slice %319 {offsets = [4, 0], sizes = [1, 168], strides = [1, 1]} : vector<28x168xf32> to vector<1x168xf32>
    %343 = vector.extract_strided_slice %319 {offsets = [5, 0], sizes = [1, 168], strides = [1, 1]} : vector<28x168xf32> to vector<1x168xf32>
    %344 = arith.maximumf %342, %343 : vector<1x168xf32>
    %345 = vector.extract_strided_slice %344 {offsets = [0, 0], sizes = [1, 84], strides = [1, 1]} : vector<1x168xf32> to vector<1x84xf32>
    %346 = vector.extract_strided_slice %344 {offsets = [0, 84], sizes = [1, 84], strides = [1, 1]} : vector<1x168xf32> to vector<1x84xf32>
    %347 = arith.maximumf %345, %346 : vector<1x84xf32>
    %c0_193 = arith.constant 0 : index
    %c0_194 = arith.constant 0 : index
    %348 = vector.load %arg3[%c0_193, %c0_194] : memref<1x84xf32, #tpu.memory_space<vmem>>, vector<1x84xf32>
    %349 = arith.addf %347, %348 : vector<1x84xf32>
    %cst_195 = arith.constant 0.000000e+00 : f32
    %350 = vector.broadcast %cst_195 : f32 to vector<1x84xf32>
    %351 = arith.maximumf %349, %350 : vector<1x84xf32>
    %c16 = arith.constant 16 : index
    %c0_196 = arith.constant 0 : index
    %352 = vector.load %arg13[%c16, %c0_196] : memref<28x84xf32, #tpu.memory_space<vmem>>, vector<1x84xf32>
    tpu.vector_store %arg13[%c16, %c0_196], %351 {strides = array<i32>} : memref<28x84xf32, #tpu.memory_space<vmem>>, vector<1x84xf32>,
    %353 = vector.extract_strided_slice %319 {offsets = [6, 0], sizes = [1, 168], strides = [1, 1]} : vector<28x168xf32> to vector<1x168xf32>
    %354 = vector.extract_strided_slice %319 {offsets = [7, 0], sizes = [1, 168], strides = [1, 1]} : vector<28x168xf32> to vector<1x168xf32>
    %355 = arith.maximumf %353, %354 : vector<1x168xf32>
    %356 = vector.extract_strided_slice %355 {offsets = [0, 0], sizes = [1, 84], strides = [1, 1]} : vector<1x168xf32> to vector<1x84xf32>
    %357 = vector.extract_strided_slice %355 {offsets = [0, 84], sizes = [1, 84], strides = [1, 1]} : vector<1x168xf32> to vector<1x84xf32>
    %358 = arith.maximumf %356, %357 : vector<1x84xf32>
    %c0_197 = arith.constant 0 : index
    %c0_198 = arith.constant 0 : index
    %359 = vector.load %arg3[%c0_197, %c0_198] : memref<1x84xf32, #tpu.memory_space<vmem>>, vector<1x84xf32>
    %360 = arith.addf %358, %359 : vector<1x84xf32>
    %cst_199 = arith.constant 0.000000e+00 : f32
    %361 = vector.broadcast %cst_199 : f32 to vector<1x84xf32>
    %362 = arith.maximumf %360, %361 : vector<1x84xf32>
    %c17 = arith.constant 17 : index
    %c0_200 = arith.constant 0 : index
    %363 = vector.load %arg13[%c17, %c0_200] : memref<28x84xf32, #tpu.memory_space<vmem>>, vector<1x84xf32>
    tpu.vector_store %arg13[%c17, %c0_200], %362 {strides = array<i32>} : memref<28x84xf32, #tpu.memory_space<vmem>>, vector<1x84xf32>,
    %364 = vector.extract_strided_slice %319 {offsets = [8, 0], sizes = [1, 168], strides = [1, 1]} : vector<28x168xf32> to vector<1x168xf32>
    %365 = vector.extract_strided_slice %319 {offsets = [9, 0], sizes = [1, 168], strides = [1, 1]} : vector<28x168xf32> to vector<1x168xf32>
    %366 = arith.maximumf %364, %365 : vector<1x168xf32>
    %367 = vector.extract_strided_slice %366 {offsets = [0, 0], sizes = [1, 84], strides = [1, 1]} : vector<1x168xf32> to vector<1x84xf32>
    %368 = vector.extract_strided_slice %366 {offsets = [0, 84], sizes = [1, 84], strides = [1, 1]} : vector<1x168xf32> to vector<1x84xf32>
    %369 = arith.maximumf %367, %368 : vector<1x84xf32>
    %c0_201 = arith.constant 0 : index
    %c0_202 = arith.constant 0 : index
    %370 = vector.load %arg3[%c0_201, %c0_202] : memref<1x84xf32, #tpu.memory_space<vmem>>, vector<1x84xf32>
    %371 = arith.addf %369, %370 : vector<1x84xf32>
    %cst_203 = arith.constant 0.000000e+00 : f32
    %372 = vector.broadcast %cst_203 : f32 to vector<1x84xf32>
    %373 = arith.maximumf %371, %372 : vector<1x84xf32>
    %c18 = arith.constant 18 : index
    %c0_204 = arith.constant 0 : index
    %374 = vector.load %arg13[%c18, %c0_204] : memref<28x84xf32, #tpu.memory_space<vmem>>, vector<1x84xf32>
    tpu.vector_store %arg13[%c18, %c0_204], %373 {strides = array<i32>} : memref<28x84xf32, #tpu.memory_space<vmem>>, vector<1x84xf32>,
    %375 = vector.extract_strided_slice %319 {offsets = [10, 0], sizes = [1, 168], strides = [1, 1]} : vector<28x168xf32> to vector<1x168xf32>
    %376 = vector.extract_strided_slice %319 {offsets = [11, 0], sizes = [1, 168], strides = [1, 1]} : vector<28x168xf32> to vector<1x168xf32>
    %377 = arith.maximumf %375, %376 : vector<1x168xf32>
    %378 = vector.extract_strided_slice %377 {offsets = [0, 0], sizes = [1, 84], strides = [1, 1]} : vector<1x168xf32> to vector<1x84xf32>
    %379 = vector.extract_strided_slice %377 {offsets = [0, 84], sizes = [1, 84], strides = [1, 1]} : vector<1x168xf32> to vector<1x84xf32>
    %380 = arith.maximumf %378, %379 : vector<1x84xf32>
    %c0_205 = arith.constant 0 : index
    %c0_206 = arith.constant 0 : index
    %381 = vector.load %arg3[%c0_205, %c0_206] : memref<1x84xf32, #tpu.memory_space<vmem>>, vector<1x84xf32>
    %382 = arith.addf %380, %381 : vector<1x84xf32>
    %cst_207 = arith.constant 0.000000e+00 : f32
    %383 = vector.broadcast %cst_207 : f32 to vector<1x84xf32>
    %384 = arith.maximumf %382, %383 : vector<1x84xf32>
    %c19 = arith.constant 19 : index
    %c0_208 = arith.constant 0 : index
    %385 = vector.load %arg13[%c19, %c0_208] : memref<28x84xf32, #tpu.memory_space<vmem>>, vector<1x84xf32>
    tpu.vector_store %arg13[%c19, %c0_208], %384 {strides = array<i32>} : memref<28x84xf32, #tpu.memory_space<vmem>>, vector<1x84xf32>,
    %386 = vector.extract_strided_slice %319 {offsets = [12, 0], sizes = [1, 168], strides = [1, 1]} : vector<28x168xf32> to vector<1x168xf32>
    %387 = vector.extract_strided_slice %319 {offsets = [13, 0], sizes = [1, 168], strides = [1, 1]} : vector<28x168xf32> to vector<1x168xf32>
    %388 = arith.maximumf %386, %387 : vector<1x168xf32>
    %389 = vector.extract_strided_slice %388 {offsets = [0, 0], sizes = [1, 84], strides = [1, 1]} : vector<1x168xf32> to vector<1x84xf32>
    %390 = vector.extract_strided_slice %388 {offsets = [0, 84], sizes = [1, 84], strides = [1, 1]} : vector<1x168xf32> to vector<1x84xf32>
    %391 = arith.maximumf %389, %390 : vector<1x84xf32>
    %c0_209 = arith.constant 0 : index
    %c0_210 = arith.constant 0 : index
    %392 = vector.load %arg3[%c0_209, %c0_210] : memref<1x84xf32, #tpu.memory_space<vmem>>, vector<1x84xf32>
    %393 = arith.addf %391, %392 : vector<1x84xf32>
    %cst_211 = arith.constant 0.000000e+00 : f32
    %394 = vector.broadcast %cst_211 : f32 to vector<1x84xf32>
    %395 = arith.maximumf %393, %394 : vector<1x84xf32>
    %c20 = arith.constant 20 : index
    %c0_212 = arith.constant 0 : index
    %396 = vector.load %arg13[%c20, %c0_212] : memref<28x84xf32, #tpu.memory_space<vmem>>, vector<1x84xf32>
    tpu.vector_store %arg13[%c20, %c0_212], %395 {strides = array<i32>} : memref<28x84xf32, #tpu.memory_space<vmem>>, vector<1x84xf32>,
    %397 = vector.extract_strided_slice %319 {offsets = [14, 0], sizes = [1, 168], strides = [1, 1]} : vector<28x168xf32> to vector<1x168xf32>
    %398 = vector.extract_strided_slice %319 {offsets = [15, 0], sizes = [1, 168], strides = [1, 1]} : vector<28x168xf32> to vector<1x168xf32>
    %399 = arith.maximumf %397, %398 : vector<1x168xf32>
    %400 = vector.extract_strided_slice %399 {offsets = [0, 0], sizes = [1, 84], strides = [1, 1]} : vector<1x168xf32> to vector<1x84xf32>
    %401 = vector.extract_strided_slice %399 {offsets = [0, 84], sizes = [1, 84], strides = [1, 1]} : vector<1x168xf32> to vector<1x84xf32>
    %402 = arith.maximumf %400, %401 : vector<1x84xf32>
    %c0_213 = arith.constant 0 : index
    %c0_214 = arith.constant 0 : index
    %403 = vector.load %arg3[%c0_213, %c0_214] : memref<1x84xf32, #tpu.memory_space<vmem>>, vector<1x84xf32>
    %404 = arith.addf %402, %403 : vector<1x84xf32>
    %cst_215 = arith.constant 0.000000e+00 : f32
    %405 = vector.broadcast %cst_215 : f32 to vector<1x84xf32>
    %406 = arith.maximumf %404, %405 : vector<1x84xf32>
    %c21 = arith.constant 21 : index
    %c0_216 = arith.constant 0 : index
    %407 = vector.load %arg13[%c21, %c0_216] : memref<28x84xf32, #tpu.memory_space<vmem>>, vector<1x84xf32>
    tpu.vector_store %arg13[%c21, %c0_216], %406 {strides = array<i32>} : memref<28x84xf32, #tpu.memory_space<vmem>>, vector<1x84xf32>,
    %408 = vector.extract_strided_slice %319 {offsets = [16, 0], sizes = [1, 168], strides = [1, 1]} : vector<28x168xf32> to vector<1x168xf32>
    %409 = vector.extract_strided_slice %319 {offsets = [17, 0], sizes = [1, 168], strides = [1, 1]} : vector<28x168xf32> to vector<1x168xf32>
    %410 = arith.maximumf %408, %409 : vector<1x168xf32>
    %411 = vector.extract_strided_slice %410 {offsets = [0, 0], sizes = [1, 84], strides = [1, 1]} : vector<1x168xf32> to vector<1x84xf32>
    %412 = vector.extract_strided_slice %410 {offsets = [0, 84], sizes = [1, 84], strides = [1, 1]} : vector<1x168xf32> to vector<1x84xf32>
    %413 = arith.maximumf %411, %412 : vector<1x84xf32>
    %c0_217 = arith.constant 0 : index
    %c0_218 = arith.constant 0 : index
    %414 = vector.load %arg3[%c0_217, %c0_218] : memref<1x84xf32, #tpu.memory_space<vmem>>, vector<1x84xf32>
    %415 = arith.addf %413, %414 : vector<1x84xf32>
    %cst_219 = arith.constant 0.000000e+00 : f32
    %416 = vector.broadcast %cst_219 : f32 to vector<1x84xf32>
    %417 = arith.maximumf %415, %416 : vector<1x84xf32>
    %c22 = arith.constant 22 : index
    %c0_220 = arith.constant 0 : index
    %418 = vector.load %arg13[%c22, %c0_220] : memref<28x84xf32, #tpu.memory_space<vmem>>, vector<1x84xf32>
    tpu.vector_store %arg13[%c22, %c0_220], %417 {strides = array<i32>} : memref<28x84xf32, #tpu.memory_space<vmem>>, vector<1x84xf32>,
    %419 = vector.extract_strided_slice %319 {offsets = [18, 0], sizes = [1, 168], strides = [1, 1]} : vector<28x168xf32> to vector<1x168xf32>
    %420 = vector.extract_strided_slice %319 {offsets = [19, 0], sizes = [1, 168], strides = [1, 1]} : vector<28x168xf32> to vector<1x168xf32>
    %421 = arith.maximumf %419, %420 : vector<1x168xf32>
    %422 = vector.extract_strided_slice %421 {offsets = [0, 0], sizes = [1, 84], strides = [1, 1]} : vector<1x168xf32> to vector<1x84xf32>
    %423 = vector.extract_strided_slice %421 {offsets = [0, 84], sizes = [1, 84], strides = [1, 1]} : vector<1x168xf32> to vector<1x84xf32>
    %424 = arith.maximumf %422, %423 : vector<1x84xf32>
    %c0_221 = arith.constant 0 : index
    %c0_222 = arith.constant 0 : index
    %425 = vector.load %arg3[%c0_221, %c0_222] : memref<1x84xf32, #tpu.memory_space<vmem>>, vector<1x84xf32>
    %426 = arith.addf %424, %425 : vector<1x84xf32>
    %cst_223 = arith.constant 0.000000e+00 : f32
    %427 = vector.broadcast %cst_223 : f32 to vector<1x84xf32>
    %428 = arith.maximumf %426, %427 : vector<1x84xf32>
    %c23 = arith.constant 23 : index
    %c0_224 = arith.constant 0 : index
    %429 = vector.load %arg13[%c23, %c0_224] : memref<28x84xf32, #tpu.memory_space<vmem>>, vector<1x84xf32>
    tpu.vector_store %arg13[%c23, %c0_224], %428 {strides = array<i32>} : memref<28x84xf32, #tpu.memory_space<vmem>>, vector<1x84xf32>,
    %430 = vector.extract_strided_slice %319 {offsets = [20, 0], sizes = [1, 168], strides = [1, 1]} : vector<28x168xf32> to vector<1x168xf32>
    %431 = vector.extract_strided_slice %319 {offsets = [21, 0], sizes = [1, 168], strides = [1, 1]} : vector<28x168xf32> to vector<1x168xf32>
    %432 = arith.maximumf %430, %431 : vector<1x168xf32>
    %433 = vector.extract_strided_slice %432 {offsets = [0, 0], sizes = [1, 84], strides = [1, 1]} : vector<1x168xf32> to vector<1x84xf32>
    %434 = vector.extract_strided_slice %432 {offsets = [0, 84], sizes = [1, 84], strides = [1, 1]} : vector<1x168xf32> to vector<1x84xf32>
    %435 = arith.maximumf %433, %434 : vector<1x84xf32>
    %c0_225 = arith.constant 0 : index
    %c0_226 = arith.constant 0 : index
    %436 = vector.load %arg3[%c0_225, %c0_226] : memref<1x84xf32, #tpu.memory_space<vmem>>, vector<1x84xf32>
    %437 = arith.addf %435, %436 : vector<1x84xf32>
    %cst_227 = arith.constant 0.000000e+00 : f32
    %438 = vector.broadcast %cst_227 : f32 to vector<1x84xf32>
    %439 = arith.maximumf %437, %438 : vector<1x84xf32>
    %c24 = arith.constant 24 : index
    %c0_228 = arith.constant 0 : index
    %440 = vector.load %arg13[%c24, %c0_228] : memref<28x84xf32, #tpu.memory_space<vmem>>, vector<1x84xf32>
    tpu.vector_store %arg13[%c24, %c0_228], %439 {strides = array<i32>} : memref<28x84xf32, #tpu.memory_space<vmem>>, vector<1x84xf32>,
    %441 = vector.extract_strided_slice %319 {offsets = [22, 0], sizes = [1, 168], strides = [1, 1]} : vector<28x168xf32> to vector<1x168xf32>
    %442 = vector.extract_strided_slice %319 {offsets = [23, 0], sizes = [1, 168], strides = [1, 1]} : vector<28x168xf32> to vector<1x168xf32>
    %443 = arith.maximumf %441, %442 : vector<1x168xf32>
    %444 = vector.extract_strided_slice %443 {offsets = [0, 0], sizes = [1, 84], strides = [1, 1]} : vector<1x168xf32> to vector<1x84xf32>
    %445 = vector.extract_strided_slice %443 {offsets = [0, 84], sizes = [1, 84], strides = [1, 1]} : vector<1x168xf32> to vector<1x84xf32>
    %446 = arith.maximumf %444, %445 : vector<1x84xf32>
    %c0_229 = arith.constant 0 : index
    %c0_230 = arith.constant 0 : index
    %447 = vector.load %arg3[%c0_229, %c0_230] : memref<1x84xf32, #tpu.memory_space<vmem>>, vector<1x84xf32>
    %448 = arith.addf %446, %447 : vector<1x84xf32>
    %cst_231 = arith.constant 0.000000e+00 : f32
    %449 = vector.broadcast %cst_231 : f32 to vector<1x84xf32>
    %450 = arith.maximumf %448, %449 : vector<1x84xf32>
    %c25 = arith.constant 25 : index
    %c0_232 = arith.constant 0 : index
    %451 = vector.load %arg13[%c25, %c0_232] : memref<28x84xf32, #tpu.memory_space<vmem>>, vector<1x84xf32>
    tpu.vector_store %arg13[%c25, %c0_232], %450 {strides = array<i32>} : memref<28x84xf32, #tpu.memory_space<vmem>>, vector<1x84xf32>,
    %452 = vector.extract_strided_slice %319 {offsets = [24, 0], sizes = [1, 168], strides = [1, 1]} : vector<28x168xf32> to vector<1x168xf32>
    %453 = vector.extract_strided_slice %319 {offsets = [25, 0], sizes = [1, 168], strides = [1, 1]} : vector<28x168xf32> to vector<1x168xf32>
    %454 = arith.maximumf %452, %453 : vector<1x168xf32>
    %455 = vector.extract_strided_slice %454 {offsets = [0, 0], sizes = [1, 84], strides = [1, 1]} : vector<1x168xf32> to vector<1x84xf32>
    %456 = vector.extract_strided_slice %454 {offsets = [0, 84], sizes = [1, 84], strides = [1, 1]} : vector<1x168xf32> to vector<1x84xf32>
    %457 = arith.maximumf %455, %456 : vector<1x84xf32>
    %c0_233 = arith.constant 0 : index
    %c0_234 = arith.constant 0 : index
    %458 = vector.load %arg3[%c0_233, %c0_234] : memref<1x84xf32, #tpu.memory_space<vmem>>, vector<1x84xf32>
    %459 = arith.addf %457, %458 : vector<1x84xf32>
    %cst_235 = arith.constant 0.000000e+00 : f32
    %460 = vector.broadcast %cst_235 : f32 to vector<1x84xf32>
    %461 = arith.maximumf %459, %460 : vector<1x84xf32>
    %c26 = arith.constant 26 : index
    %c0_236 = arith.constant 0 : index
    %462 = vector.load %arg13[%c26, %c0_236] : memref<28x84xf32, #tpu.memory_space<vmem>>, vector<1x84xf32>
    tpu.vector_store %arg13[%c26, %c0_236], %461 {strides = array<i32>} : memref<28x84xf32, #tpu.memory_space<vmem>>, vector<1x84xf32>,
    %463 = vector.extract_strided_slice %319 {offsets = [26, 0], sizes = [1, 168], strides = [1, 1]} : vector<28x168xf32> to vector<1x168xf32>
    %464 = vector.extract_strided_slice %319 {offsets = [27, 0], sizes = [1, 168], strides = [1, 1]} : vector<28x168xf32> to vector<1x168xf32>
    %465 = arith.maximumf %463, %464 : vector<1x168xf32>
    %466 = vector.extract_strided_slice %465 {offsets = [0, 0], sizes = [1, 84], strides = [1, 1]} : vector<1x168xf32> to vector<1x84xf32>
    %467 = vector.extract_strided_slice %465 {offsets = [0, 84], sizes = [1, 84], strides = [1, 1]} : vector<1x168xf32> to vector<1x84xf32>
    %468 = arith.maximumf %466, %467 : vector<1x84xf32>
    %c0_237 = arith.constant 0 : index
    %c0_238 = arith.constant 0 : index
    %469 = vector.load %arg3[%c0_237, %c0_238] : memref<1x84xf32, #tpu.memory_space<vmem>>, vector<1x84xf32>
    %470 = arith.addf %468, %469 : vector<1x84xf32>
    %cst_239 = arith.constant 0.000000e+00 : f32
    %471 = vector.broadcast %cst_239 : f32 to vector<1x84xf32>
    %472 = arith.maximumf %470, %471 : vector<1x84xf32>
    %c27 = arith.constant 27 : index
    %c0_240 = arith.constant 0 : index
    %473 = vector.load %arg13[%c27, %c0_240] : memref<28x84xf32, #tpu.memory_space<vmem>>, vector<1x84xf32>
    tpu.vector_store %arg13[%c27, %c0_240], %472 {strides = array<i32>} : memref<28x84xf32, #tpu.memory_space<vmem>>, vector<1x84xf32>,
    %cst_241 = arith.constant 0.000000e+00 : f32
    %474 = vector.broadcast %cst_241 : f32 to vector<10x160xf32>
    %c14_242 = arith.constant 14 : index
    %c0_243 = arith.constant 0 : index
    %475 = vector.load %arg13[%c14_242, %c0_243] : memref<28x84xf32, #tpu.memory_space<vmem>>, vector<10x84xf32>
    %c0_244 = arith.constant 0 : index
    %c0_245 = arith.constant 0 : index
    %c0_246 = arith.constant 0 : index
    %476 = vector.load %arg4[%c0_244, %c0_245, %c0_246] : memref<5x84x160xf32, #tpu.memory_space<vmem>>, vector<1x84x160xf32>
    %477 = vector.shape_cast %476 : vector<1x84x160xf32> to vector<84x160xf32>
    %cst_247 = arith.constant dense<0.000000e+00> : vector<10x160xf32>
    %478 = tpu.matmul %475, %477, %cst_247 {dimension_numbers = #tpu.dot_dimension_numbers<[1], [0], [0], [1], [0, 0, 1, 1], [], []>} : vector<10x84xf32>, vector<84x160xf32>, vector<10x160xf32> -> vector<10x160xf32>
    %479 = arith.addf %474, %478 : vector<10x160xf32>
    %c15_248 = arith.constant 15 : index
    %c0_249 = arith.constant 0 : index
    %480 = vector.load %arg13[%c15_248, %c0_249] : memref<28x84xf32, #tpu.memory_space<vmem>>, vector<10x84xf32>
    %c1_250 = arith.constant 1 : index
    %c0_251 = arith.constant 0 : index
    %c0_252 = arith.constant 0 : index
    %481 = vector.load %arg4[%c1_250, %c0_251, %c0_252] : memref<5x84x160xf32, #tpu.memory_space<vmem>>, vector<1x84x160xf32>
    %482 = vector.shape_cast %481 : vector<1x84x160xf32> to vector<84x160xf32>
    %cst_253 = arith.constant dense<0.000000e+00> : vector<10x160xf32>
    %483 = tpu.matmul %480, %482, %cst_253 {dimension_numbers = #tpu.dot_dimension_numbers<[1], [0], [0], [1], [0, 0, 1, 1], [], []>} : vector<10x84xf32>, vector<84x160xf32>, vector<10x160xf32> -> vector<10x160xf32>
    %484 = arith.addf %479, %483 : vector<10x160xf32>
    %c16_254 = arith.constant 16 : index
    %c0_255 = arith.constant 0 : index
    %485 = vector.load %arg13[%c16_254, %c0_255] : memref<28x84xf32, #tpu.memory_space<vmem>>, vector<10x84xf32>
    %c2_256 = arith.constant 2 : index
    %c0_257 = arith.constant 0 : index
    %c0_258 = arith.constant 0 : index
    %486 = vector.load %arg4[%c2_256, %c0_257, %c0_258] : memref<5x84x160xf32, #tpu.memory_space<vmem>>, vector<1x84x160xf32>
    %487 = vector.shape_cast %486 : vector<1x84x160xf32> to vector<84x160xf32>
    %cst_259 = arith.constant dense<0.000000e+00> : vector<10x160xf32>
    %488 = tpu.matmul %485, %487, %cst_259 {dimension_numbers = #tpu.dot_dimension_numbers<[1], [0], [0], [1], [0, 0, 1, 1], [], []>} : vector<10x84xf32>, vector<84x160xf32>, vector<10x160xf32> -> vector<10x160xf32>
    %489 = arith.addf %484, %488 : vector<10x160xf32>
    %c17_260 = arith.constant 17 : index
    %c0_261 = arith.constant 0 : index
    %490 = vector.load %arg13[%c17_260, %c0_261] : memref<28x84xf32, #tpu.memory_space<vmem>>, vector<10x84xf32>
    %c3_262 = arith.constant 3 : index
    %c0_263 = arith.constant 0 : index
    %c0_264 = arith.constant 0 : index
    %491 = vector.load %arg4[%c3_262, %c0_263, %c0_264] : memref<5x84x160xf32, #tpu.memory_space<vmem>>, vector<1x84x160xf32>
    %492 = vector.shape_cast %491 : vector<1x84x160xf32> to vector<84x160xf32>
    %cst_265 = arith.constant dense<0.000000e+00> : vector<10x160xf32>
    %493 = tpu.matmul %490, %492, %cst_265 {dimension_numbers = #tpu.dot_dimension_numbers<[1], [0], [0], [1], [0, 0, 1, 1], [], []>} : vector<10x84xf32>, vector<84x160xf32>, vector<10x160xf32> -> vector<10x160xf32>
    %494 = arith.addf %489, %493 : vector<10x160xf32>
    %c18_266 = arith.constant 18 : index
    %c0_267 = arith.constant 0 : index
    %495 = vector.load %arg13[%c18_266, %c0_267] : memref<28x84xf32, #tpu.memory_space<vmem>>, vector<10x84xf32>
    %c4_268 = arith.constant 4 : index
    %c0_269 = arith.constant 0 : index
    %c0_270 = arith.constant 0 : index
    %496 = vector.load %arg4[%c4_268, %c0_269, %c0_270] : memref<5x84x160xf32, #tpu.memory_space<vmem>>, vector<1x84x160xf32>
    %497 = vector.shape_cast %496 : vector<1x84x160xf32> to vector<84x160xf32>
    %cst_271 = arith.constant dense<0.000000e+00> : vector<10x160xf32>
    %498 = tpu.matmul %495, %497, %cst_271 {dimension_numbers = #tpu.dot_dimension_numbers<[1], [0], [0], [1], [0, 0, 1, 1], [], []>} : vector<10x84xf32>, vector<84x160xf32>, vector<10x160xf32> -> vector<10x160xf32>
    %499 = arith.addf %494, %498 : vector<10x160xf32>
    %c0_272 = arith.constant 0 : index
    %c0_273 = arith.constant 0 : index
    %500 = vector.load %arg7[%c0_272, %c0_273] : memref<1x120xf32, #tpu.memory_space<vmem>>, vector<1x120xf32>
    %501 = vector.extract_strided_slice %499 {offsets = [0, 0], sizes = [1, 160], strides = [1, 1]} : vector<10x160xf32> to vector<1x160xf32>
    %502 = vector.extract_strided_slice %499 {offsets = [1, 0], sizes = [1, 160], strides = [1, 1]} : vector<10x160xf32> to vector<1x160xf32>
    %503 = arith.maximumf %501, %502 : vector<1x160xf32>
    %504 = vector.extract_strided_slice %503 {offsets = [0, 0], sizes = [1, 80], strides = [1, 1]} : vector<1x160xf32> to vector<1x80xf32>
    %505 = vector.extract_strided_slice %503 {offsets = [0, 80], sizes = [1, 80], strides = [1, 1]} : vector<1x160xf32> to vector<1x80xf32>
    %506 = arith.maximumf %504, %505 : vector<1x80xf32>
    %c0_274 = arith.constant 0 : index
    %c0_275 = arith.constant 0 : index
    %507 = vector.load %arg5[%c0_274, %c0_275] : memref<1x80xf32, #tpu.memory_space<vmem>>, vector<1x80xf32>
    %508 = arith.addf %506, %507 : vector<1x80xf32>
    %cst_276 = arith.constant 0.000000e+00 : f32
    %509 = vector.broadcast %cst_276 : f32 to vector<1x80xf32>
    %510 = arith.maximumf %508, %509 : vector<1x80xf32>
    %c0_277 = arith.constant 0 : index
    %c0_278 = arith.constant 0 : index
    %c0_279 = arith.constant 0 : index
    %511 = vector.load %arg6[%c0_277, %c0_278, %c0_279] : memref<5x80x120xf32, #tpu.memory_space<vmem>>, vector<1x80x120xf32>
    %512 = vector.shape_cast %511 : vector<1x80x120xf32> to vector<80x120xf32>
    %cst_280 = arith.constant dense<0.000000e+00> : vector<1x120xf32>
    %513 = tpu.matmul %510, %512, %cst_280 {dimension_numbers = #tpu.dot_dimension_numbers<[1], [0], [0], [1], [0, 0, 1, 1], [], []>} : vector<1x80xf32>, vector<80x120xf32>, vector<1x120xf32> -> vector<1x120xf32>
    %514 = arith.addf %500, %513 : vector<1x120xf32>
    %515 = vector.extract_strided_slice %499 {offsets = [2, 0], sizes = [1, 160], strides = [1, 1]} : vector<10x160xf32> to vector<1x160xf32>
    %516 = vector.extract_strided_slice %499 {offsets = [3, 0], sizes = [1, 160], strides = [1, 1]} : vector<10x160xf32> to vector<1x160xf32>
    %517 = arith.maximumf %515, %516 : vector<1x160xf32>
    %518 = vector.extract_strided_slice %517 {offsets = [0, 0], sizes = [1, 80], strides = [1, 1]} : vector<1x160xf32> to vector<1x80xf32>
    %519 = vector.extract_strided_slice %517 {offsets = [0, 80], sizes = [1, 80], strides = [1, 1]} : vector<1x160xf32> to vector<1x80xf32>
    %520 = arith.maximumf %518, %519 : vector<1x80xf32>
    %c0_281 = arith.constant 0 : index
    %c0_282 = arith.constant 0 : index
    %521 = vector.load %arg5[%c0_281, %c0_282] : memref<1x80xf32, #tpu.memory_space<vmem>>, vector<1x80xf32>
    %522 = arith.addf %520, %521 : vector<1x80xf32>
    %cst_283 = arith.constant 0.000000e+00 : f32
    %523 = vector.broadcast %cst_283 : f32 to vector<1x80xf32>
    %524 = arith.maximumf %522, %523 : vector<1x80xf32>
    %c1_284 = arith.constant 1 : index
    %c0_285 = arith.constant 0 : index
    %c0_286 = arith.constant 0 : index
    %525 = vector.load %arg6[%c1_284, %c0_285, %c0_286] : memref<5x80x120xf32, #tpu.memory_space<vmem>>, vector<1x80x120xf32>
    %526 = vector.shape_cast %525 : vector<1x80x120xf32> to vector<80x120xf32>
    %cst_287 = arith.constant dense<0.000000e+00> : vector<1x120xf32>
    %527 = tpu.matmul %524, %526, %cst_287 {dimension_numbers = #tpu.dot_dimension_numbers<[1], [0], [0], [1], [0, 0, 1, 1], [], []>} : vector<1x80xf32>, vector<80x120xf32>, vector<1x120xf32> -> vector<1x120xf32>
    %528 = arith.addf %514, %527 : vector<1x120xf32>
    %529 = vector.extract_strided_slice %499 {offsets = [4, 0], sizes = [1, 160], strides = [1, 1]} : vector<10x160xf32> to vector<1x160xf32>
    %530 = vector.extract_strided_slice %499 {offsets = [5, 0], sizes = [1, 160], strides = [1, 1]} : vector<10x160xf32> to vector<1x160xf32>
    %531 = arith.maximumf %529, %530 : vector<1x160xf32>
    %532 = vector.extract_strided_slice %531 {offsets = [0, 0], sizes = [1, 80], strides = [1, 1]} : vector<1x160xf32> to vector<1x80xf32>
    %533 = vector.extract_strided_slice %531 {offsets = [0, 80], sizes = [1, 80], strides = [1, 1]} : vector<1x160xf32> to vector<1x80xf32>
    %534 = arith.maximumf %532, %533 : vector<1x80xf32>
    %c0_288 = arith.constant 0 : index
    %c0_289 = arith.constant 0 : index
    %535 = vector.load %arg5[%c0_288, %c0_289] : memref<1x80xf32, #tpu.memory_space<vmem>>, vector<1x80xf32>
    %536 = arith.addf %534, %535 : vector<1x80xf32>
    %cst_290 = arith.constant 0.000000e+00 : f32
    %537 = vector.broadcast %cst_290 : f32 to vector<1x80xf32>
    %538 = arith.maximumf %536, %537 : vector<1x80xf32>
    %c2_291 = arith.constant 2 : index
    %c0_292 = arith.constant 0 : index
    %c0_293 = arith.constant 0 : index
    %539 = vector.load %arg6[%c2_291, %c0_292, %c0_293] : memref<5x80x120xf32, #tpu.memory_space<vmem>>, vector<1x80x120xf32>
    %540 = vector.shape_cast %539 : vector<1x80x120xf32> to vector<80x120xf32>
    %cst_294 = arith.constant dense<0.000000e+00> : vector<1x120xf32>
    %541 = tpu.matmul %538, %540, %cst_294 {dimension_numbers = #tpu.dot_dimension_numbers<[1], [0], [0], [1], [0, 0, 1, 1], [], []>} : vector<1x80xf32>, vector<80x120xf32>, vector<1x120xf32> -> vector<1x120xf32>
    %542 = arith.addf %528, %541 : vector<1x120xf32>
    %543 = vector.extract_strided_slice %499 {offsets = [6, 0], sizes = [1, 160], strides = [1, 1]} : vector<10x160xf32> to vector<1x160xf32>
    %544 = vector.extract_strided_slice %499 {offsets = [7, 0], sizes = [1, 160], strides = [1, 1]} : vector<10x160xf32> to vector<1x160xf32>
    %545 = arith.maximumf %543, %544 : vector<1x160xf32>
    %546 = vector.extract_strided_slice %545 {offsets = [0, 0], sizes = [1, 80], strides = [1, 1]} : vector<1x160xf32> to vector<1x80xf32>
    %547 = vector.extract_strided_slice %545 {offsets = [0, 80], sizes = [1, 80], strides = [1, 1]} : vector<1x160xf32> to vector<1x80xf32>
    %548 = arith.maximumf %546, %547 : vector<1x80xf32>
    %c0_295 = arith.constant 0 : index
    %c0_296 = arith.constant 0 : index
    %549 = vector.load %arg5[%c0_295, %c0_296] : memref<1x80xf32, #tpu.memory_space<vmem>>, vector<1x80xf32>
    %550 = arith.addf %548, %549 : vector<1x80xf32>
    %cst_297 = arith.constant 0.000000e+00 : f32
    %551 = vector.broadcast %cst_297 : f32 to vector<1x80xf32>
    %552 = arith.maximumf %550, %551 : vector<1x80xf32>
    %c3_298 = arith.constant 3 : index
    %c0_299 = arith.constant 0 : index
    %c0_300 = arith.constant 0 : index
    %553 = vector.load %arg6[%c3_298, %c0_299, %c0_300] : memref<5x80x120xf32, #tpu.memory_space<vmem>>, vector<1x80x120xf32>
    %554 = vector.shape_cast %553 : vector<1x80x120xf32> to vector<80x120xf32>
    %cst_301 = arith.constant dense<0.000000e+00> : vector<1x120xf32>
    %555 = tpu.matmul %552, %554, %cst_301 {dimension_numbers = #tpu.dot_dimension_numbers<[1], [0], [0], [1], [0, 0, 1, 1], [], []>} : vector<1x80xf32>, vector<80x120xf32>, vector<1x120xf32> -> vector<1x120xf32>
    %556 = arith.addf %542, %555 : vector<1x120xf32>
    %557 = vector.extract_strided_slice %499 {offsets = [8, 0], sizes = [1, 160], strides = [1, 1]} : vector<10x160xf32> to vector<1x160xf32>
    %558 = vector.extract_strided_slice %499 {offsets = [9, 0], sizes = [1, 160], strides = [1, 1]} : vector<10x160xf32> to vector<1x160xf32>
    %559 = arith.maximumf %557, %558 : vector<1x160xf32>
    %560 = vector.extract_strided_slice %559 {offsets = [0, 0], sizes = [1, 80], strides = [1, 1]} : vector<1x160xf32> to vector<1x80xf32>
    %561 = vector.extract_strided_slice %559 {offsets = [0, 80], sizes = [1, 80], strides = [1, 1]} : vector<1x160xf32> to vector<1x80xf32>
    %562 = arith.maximumf %560, %561 : vector<1x80xf32>
    %c0_302 = arith.constant 0 : index
    %c0_303 = arith.constant 0 : index
    %563 = vector.load %arg5[%c0_302, %c0_303] : memref<1x80xf32, #tpu.memory_space<vmem>>, vector<1x80xf32>
    %564 = arith.addf %562, %563 : vector<1x80xf32>
    %cst_304 = arith.constant 0.000000e+00 : f32
    %565 = vector.broadcast %cst_304 : f32 to vector<1x80xf32>
    %566 = arith.maximumf %564, %565 : vector<1x80xf32>
    %c4_305 = arith.constant 4 : index
    %c0_306 = arith.constant 0 : index
    %c0_307 = arith.constant 0 : index
    %567 = vector.load %arg6[%c4_305, %c0_306, %c0_307] : memref<5x80x120xf32, #tpu.memory_space<vmem>>, vector<1x80x120xf32>
    %568 = vector.shape_cast %567 : vector<1x80x120xf32> to vector<80x120xf32>
    %cst_308 = arith.constant dense<0.000000e+00> : vector<1x120xf32>
    %569 = tpu.matmul %566, %568, %cst_308 {dimension_numbers = #tpu.dot_dimension_numbers<[1], [0], [0], [1], [0, 0, 1, 1], [], []>} : vector<1x80xf32>, vector<80x120xf32>, vector<1x120xf32> -> vector<1x120xf32>
    %570 = arith.addf %556, %569 : vector<1x120xf32>
    %cst_309 = arith.constant 0.000000e+00 : f32
    %571 = vector.broadcast %cst_309 : f32 to vector<1x120xf32>
    %572 = arith.maximumf %570, %571 : vector<1x120xf32>
    %c0_310 = arith.constant 0 : index
    %c0_311 = arith.constant 0 : index
    %573 = vector.load %arg8[%c0_310, %c0_311] : memref<120x84xf32, #tpu.memory_space<vmem>>, vector<120x84xf32>
    %cst_312 = arith.constant dense<0.000000e+00> : vector<1x84xf32>
    %574 = tpu.matmul %572, %573, %cst_312 {dimension_numbers = #tpu.dot_dimension_numbers<[1], [0], [0], [1], [0, 0, 1, 1], [], []>} : vector<1x120xf32>, vector<120x84xf32>, vector<1x84xf32> -> vector<1x84xf32>
    %c0_313 = arith.constant 0 : index
    %c0_314 = arith.constant 0 : index
    %575 = vector.load %arg9[%c0_313, %c0_314] : memref<1x84xf32, #tpu.memory_space<vmem>>, vector<1x84xf32>
    %576 = arith.addf %574, %575 : vector<1x84xf32>
    %cst_315 = arith.constant 0.000000e+00 : f32
    %577 = vector.broadcast %cst_315 : f32 to vector<1x84xf32>
    %578 = arith.maximumf %576, %577 : vector<1x84xf32>
    %c0_316 = arith.constant 0 : index
    %c0_317 = arith.constant 0 : index
    %579 = vector.load %arg10[%c0_316, %c0_317] : memref<84x10xf32, #tpu.memory_space<vmem>>, vector<84x10xf32>
    %cst_318 = arith.constant dense<0.000000e+00> : vector<1x10xf32>
    %580 = tpu.matmul %578, %579, %cst_318 {dimension_numbers = #tpu.dot_dimension_numbers<[1], [0], [0], [1], [0, 0, 1, 1], [], []>} : vector<1x84xf32>, vector<84x10xf32>, vector<1x10xf32> -> vector<1x10xf32>
    %c0_319 = arith.constant 0 : index
    %c0_320 = arith.constant 0 : index
    %581 = vector.load %arg11[%c0_319, %c0_320] : memref<1x10xf32, #tpu.memory_space<vmem>>, vector<1x10xf32>
    %582 = arith.addf %580, %581 : vector<1x10xf32>
    %c1_321 = arith.constant 1 : index
    %c0_322 = arith.constant 0 : index
    %583 = vector.load %arg12[%c1_321, %c0_322] : memref<2x10xf32, #tpu.memory_space<vmem>>, vector<1x10xf32>
    tpu.vector_store %arg12[%c1_321, %c0_322], %582 {strides = array<i32>} : memref<2x10xf32, #tpu.memory_space<vmem>>, vector<1x10xf32>,
    return
  }
  func.func @transform_0(%arg0: i32) -> (i32, i32, i32) {
    %c0_i32 = arith.constant 0 : i32
    %c0_i32_0 = arith.constant 0 : i32
    %c0_i32_1 = arith.constant 0 : i32
    %c0_i32_2 = arith.constant 0 : i32
    return %c0_i32, %c0_i32_0, %c0_i32_1 : i32, i32, i32
  }
  func.func @transform_1(%arg0: i32) -> (i32, i32, i32) {
    %c0_i32 = arith.constant 0 : i32
    %c0_i32_0 = arith.constant 0 : i32
    %c0_i32_1 = arith.constant 0 : i32
    %c0_i32_2 = arith.constant 0 : i32
    return %c0_i32, %c0_i32_0, %c0_i32_1 : i32, i32, i32
  }
  func.func @transform_2(%arg0: i32) -> (i32, i32) {
    %c0_i32 = arith.constant 0 : i32
    %c0_i32_0 = arith.constant 0 : i32
    %c0_i32_1 = arith.constant 0 : i32
    return %c0_i32, %c0_i32_0 : i32, i32
  }
  func.func @transform_3(%arg0: i32) -> (i32, i32, i32) {
    %c0_i32 = arith.constant 0 : i32
    %c0_i32_0 = arith.constant 0 : i32
    %c0_i32_1 = arith.constant 0 : i32
    %c0_i32_2 = arith.constant 0 : i32
    return %c0_i32, %c0_i32_0, %c0_i32_1 : i32, i32, i32
  }
  func.func @transform_4(%arg0: i32) -> (i32, i32) {
    %c0_i32 = arith.constant 0 : i32
    %c0_i32_0 = arith.constant 0 : i32
    %c0_i32_1 = arith.constant 0 : i32
    return %c0_i32, %c0_i32_0 : i32, i32
  }
  func.func @transform_5(%arg0: i32) -> (i32, i32, i32) {
    %c0_i32 = arith.constant 0 : i32
    %c0_i32_0 = arith.constant 0 : i32
    %c0_i32_1 = arith.constant 0 : i32
    %c0_i32_2 = arith.constant 0 : i32
    return %c0_i32, %c0_i32_0, %c0_i32_1 : i32, i32, i32
  }
  func.func @transform_6(%arg0: i32) -> (i32, i32) {
    %c0_i32 = arith.constant 0 : i32
    %c0_i32_0 = arith.constant 0 : i32
    %c0_i32_1 = arith.constant 0 : i32
    return %c0_i32, %c0_i32_0 : i32, i32
  }
  func.func @transform_7(%arg0: i32) -> (i32, i32) {
    %c0_i32 = arith.constant 0 : i32
    %c0_i32_0 = arith.constant 0 : i32
    %c0_i32_1 = arith.constant 0 : i32
    return %c0_i32, %c0_i32_0 : i32, i32
  }
  func.func @transform_8(%arg0: i32) -> (i32, i32) {
    %c0_i32 = arith.constant 0 : i32
    %c0_i32_0 = arith.constant 0 : i32
    %c0_i32_1 = arith.constant 0 : i32
    return %c0_i32, %c0_i32_0 : i32, i32
  }
  func.func @transform_9(%arg0: i32) -> (i32, i32) {
    %c0_i32 = arith.constant 0 : i32
    %c0_i32_0 = arith.constant 0 : i32
    %c0_i32_1 = arith.constant 0 : i32
    return %c0_i32, %c0_i32_0 : i32, i32
  }
  func.func @transform_10(%arg0: i32) -> (i32, i32) {
    %c0_i32 = arith.constant 0 : i32
    %c0_i32_0 = arith.constant 0 : i32
    %c0_i32_1 = arith.constant 0 : i32
    return %c0_i32, %c0_i32_0 : i32, i32
  }
  func.func @transform_11(%arg0: i32) -> (i32, i32) {
    %c0_i32 = arith.constant 0 : i32
    %c0_i32_0 = arith.constant 0 : i32
    %c0_i32_1 = arith.constant 0 : i32
    return %c0_i32, %c0_i32_0 : i32, i32
  }
}

</mosaic_0001>

<llo_original>
// kernel: net_forward.1
$region0: #{net_forward.1}
  #allocation0 [shape = 'u32[]', space=smem, size = 0x4, offset = 0x4, fixed_abs, tag = 'smem constant byte address 0x4 - core index']
  #allocation1 [shape = 'u32[144,128]{1,0:T(1,128)}', space=vmem, size = 0x12000, scoped, tag = 'internal scratch']
  #allocation2 [shape = 'f32[28,84]{1,0:T(8,128)}', space=vmem, size = 0x4000, scoped, tag = 'scratch operand']
  %s0 = inlined_call_operand.vmem [shape: f32[2,32,32], index: 0, kind: input, shape index: {}]
  %s1 = inlined_call_operand.vmem [shape: f32[5,32,168], index: 1, kind: input, shape index: {}]
  %s2 = inlined_call_operand.vmem [shape: f32[1,84], index: 2, kind: input, shape index: {}]
  %s3 = inlined_call_operand.vmem [shape: f32[5,84,160], index: 3, kind: input, shape index: {}]
  %s4 = inlined_call_operand.vmem [shape: f32[1,80], index: 4, kind: input, shape index: {}]
  %s5 = inlined_call_operand.vmem [shape: f32[5,80,120], index: 5, kind: input, shape index: {}]
  %s6 = inlined_call_operand.vmem [shape: f32[1,120], index: 6, kind: input, shape index: {}]
  %s7 = inlined_call_operand.vmem [shape: f32[120,84], index: 7, kind: input, shape index: {}]
  %s8 = inlined_call_operand.vmem [shape: f32[1,84], index: 8, kind: input, shape index: {}]
  %s9 = inlined_call_operand.vmem [shape: f32[84,10], index: 9, kind: input, shape index: {}]
  %s10 = inlined_call_operand.vmem [shape: f32[1,10], index: 10, kind: input, shape index: {}]
  %s11 = inlined_call_operand.hbm [shape: f32[2,10], index: 11, kind: output, shape index: {}]
  %s12 = sld [smem:[#allocation0]]
  $region54: #{net_forward.1} parent=0
    _
  %s14 = ssub.s32 1, %s12
  %s15 = scalar_select 0, %s14, %s12
  $region1: #{net_forward.1} parent=0
    #allocation3 [shape = 'u8[1024]{0}', space=vmem, size = 0x400, scoped, tag = 'output window, operand 0, single buffered']
    #allocation4 [shape = 's32[1]{0}', space=sflag, size = 0x4, scoped, tag = 'scoped memory for net_forward.1']
    %16 = vsyncpa [#allocation4], 0
    // Predicated region
    $region2: #{net_forward.1} parent=1 // pred_check
      _
    $region3: #{net_forward.1} parent=1 // pred_check_branch
      %18 = sbr.rel (0) target = $region5
    $region4: #{net_forward.1} parent=1 // pred_region
      _
    $region5: #{net_forward.1} parent=1 // pred_fallthru
      _
    // Predicated region
    $region6: #{net_forward.1} parent=1 // pred_check
      _
    $region7: #{net_forward.1} parent=1 // pred_check_branch
      %20 = sbr.rel (0) target = $region9
    $region8: #{net_forward.1} parent=1 // pred_region
      _
    $region9: #{net_forward.1} parent=1 // pred_fallthru
      _
    // Predicated region
    $region10: #{net_forward.1} parent=1 // pred_check
      _
    $region11: #{net_forward.1} parent=1 // pred_check_branch
      %22 = sbr.rel (0) target = $region13
    $region12: #{net_forward.1} parent=1 // pred_region
      _
    $region13: #{net_forward.1} parent=1 // pred_fallthru
      _
    // Predicated region
    $region14: #{net_forward.1} parent=1 // pred_check
      _
    $region15: #{net_forward.1} parent=1 // pred_check_branch
      %24 = sbr.rel (0) target = $region17
    $region16: #{net_forward.1} parent=1 // pred_region
      _
    $region17: #{net_forward.1} parent=1 // pred_fallthru
      _
    // Predicated region
    $region18: #{net_forward.1} parent=1 // pred_check
      _
    $region19: #{net_forward.1} parent=1 // pred_check_branch
      %26 = sbr.rel (0) target = $region21
    $region20: #{net_forward.1} parent=1 // pred_region
      _
    $region21: #{net_forward.1} parent=1 // pred_fallthru
      _
    // Predicated region
    $region22: #{net_forward.1} parent=1 // pred_check
      _
    $region23: #{net_forward.1} parent=1 // pred_check_branch
      %28 = sbr.rel (0) target = $region25
    $region24: #{net_forward.1} parent=1 // pred_region
      _
    $region25: #{net_forward.1} parent=1 // pred_fallthru
      _
    // Predicated region
    $region26: #{net_forward.1} parent=1 // pred_check
      _
    $region27: #{net_forward.1} parent=1 // pred_check_branch
      %30 = sbr.rel (0) target = $region29
    $region28: #{net_forward.1} parent=1 // pred_region
      _
    $region29: #{net_forward.1} parent=1 // pred_fallthru
      _
    // Predicated region
    $region30: #{net_forward.1} parent=1 // pred_check
      _
    $region31: #{net_forward.1} parent=1 // pred_check_branch
      %32 = sbr.rel (0) target = $region33
    $region32: #{net_forward.1} parent=1 // pred_region
      _
    $region33: #{net_forward.1} parent=1 // pred_fallthru
      _
    // Predicated region
    $region34: #{net_forward.1} parent=1 // pred_check
      _
    $region35: #{net_forward.1} parent=1 // pred_check_branch
      %34 = sbr.rel (0) target = $region37
    $region36: #{net_forward.1} parent=1 // pred_region
      _
    $region37: #{net_forward.1} parent=1 // pred_fallthru
      _
    // Predicated region
    $region38: #{net_forward.1} parent=1 // pred_check
      _
    $region39: #{net_forward.1} parent=1 // pred_check_branch
      %36 = sbr.rel (0) target = $region41
    $region40: #{net_forward.1} parent=1 // pred_region
      _
    $region41: #{net_forward.1} parent=1 // pred_fallthru
      _
    // Predicated region
    $region42: #{net_forward.1} parent=1 // pred_check
      _
    $region43: #{net_forward.1} parent=1 // pred_check_branch
      %38 = sbr.rel (0) target = $region45
    $region44: #{net_forward.1} parent=1 // pred_region
      _
    $region45: #{net_forward.1} parent=1 // pred_fallthru
      _
    %v39 = vld [vmem:[%s0] sm:$0xff]
    %v40 = vld [vmem:[%s0 + $0x8] sm:$0xff]
    %v41 = vld [vmem:[%s0 + $0x10] sm:$0xff]
    %v42 = vld [vmem:[%s0 + $0x18] sm:$0xff]
    %v43 = vld [vmem:[%s1] sm:$0xff]
    %v44 = vld [vmem:[%s1 + $0x8] sm:$0xff]
    %v45 = vld [vmem:[%s1 + $0x10] sm:$0xff]
    %v46 = vld [vmem:[%s1 + $0x18] sm:$0xff]
    %v47 = vld [vmem:[%s1 + $0x20] sm:$0xff]
    %v48 = vld [vmem:[%s1 + $0x28] sm:$0xff]
    %v49 = vld [vmem:[%s1 + $0x30] sm:$0xff]
    %v50 = vld [vmem:[%s1 + $0x38] sm:$0xff]
    %s51 = scalar_lea.vmem %s1, 64
    %v52 = vld [vmem:[%s51] sm:$0xff]
    %v53 = vld [vmem:[%s51 + $0x8] sm:$0xff]
    %v54 = vld [vmem:[%s51 + $0x10] sm:$0xff]
    %v55 = vld [vmem:[%s51 + $0x18] sm:$0xff]
    %v56 = vld [vmem:[%s51 + $0x20] sm:$0xff]
    %v57 = vld [vmem:[%s51 + $0x28] sm:$0xff]
    %v58 = vld [vmem:[%s51 + $0x30] sm:$0xff]
    %v59 = vld [vmem:[%s51 + $0x38] sm:$0xff]
    %vm64 = vcmask 1046528
    %v65 = vrot.slane %v39, 1
    %v66 = vrot.slane %v40, 1
    %v67 = vsel %vm64, %v65, %v66
    %v68 = vrot.slane %v41, 1
    %v69 = vsel %vm64, %v66, %v68
    %v70 = vrot.slane %v42, 1
    %v71 = vsel %vm64, %v68, %v70
    %vm72 = vcmask 261120
    %v73 = vsel %vm72, %v67, 0
    %v75 = vsel %vm72, %v69, 0
    %v77 = vsel %vm72, %v71, 0
    %v79 = vsel %vm72, %v70, 0
    %81 = vmatprep.subr.mxu0 %v53
    %82 = vmatpush1.msra.mxu0 %v52
    %83 = vmatprep.subr.mxu0 %v55
    %84 = vmatpush1.msra.mxu0 %v54
    %85 = vmatprep.subr.mxu0 %v57
    %86 = vmatpush1.msra.mxu0 %v56
    %87 = vmatprep.subr.mxu0 %v59
    %88 = vmatpush1.msra.mxu0 %v58
    %89 = vmatprep.subr.mxu0 0.0
    %90 = vmatpush1.msra.mxu0 0.0
    %91 = vmatprep.subr.mxu0 0.0
    %92 = vmatpush1.msra.mxu0 0.0
    %93 = vmatprep.subr.mxu0 0.0
    %94 = vmatpush1.msra.mxu0 0.0
    %95 = vmatprep.subr.mxu0 0.0
    %96 = vmatpush1.msra.mxu0 0.0
    %97 = vmatprep.subr.mxu0 0.0
    %98 = vmatpush1.msra.mxu0 0.0
    %99 = vmatprep.subr.mxu0 0.0
    %100 = vmatpush1.msra.mxu0 0.0
    %101 = vmatprep.subr.mxu0 0.0
    %102 = vmatpush1.msra.mxu0 0.0
    %103 = vmatprep.subr.mxu0 0.0
    %104 = vmatpush1.msra.mxu0 0.0
    %105 = vmatprep.subr.mxu0 0.0
    %106 = vmatpush1.msra.mxu0 0.0
    %107 = vmatprep.subr.mxu0 0.0
    %108 = vmatpush1.msra.mxu0 0.0
    %109 = vmatprep.subr.mxu0 0.0
    %110 = vmatpush1.msra.mxu0 0.0
    %111 = vmatprep.subr.mxu0 0.0
    %112 = vmatpush1.msra.mxu0 0.0
    %113 = vmatprep.subr.mxu0 0.0
    %114 = vmatpush1.msra.mxu0 0.0
    %115 = vmatprep.subr.mxu0 0.0
    %116 = vmatpush1.msra.mxu0 0.0
    %117 = vmatprep.subr.mxu0 0.0
    %118 = vmatpush1.msra.mxu0 0.0
    %119 = vmatprep.subr.mxu0 0.0
    %120 = vmatpush1.msra.mxu0 0.0
    %121 = vmatprep.subr.mxu0 0.0
    %122 = vmatpush1.msra.mxu0 0.0
    %123 = vmatprep.subr.mxu0 0.0
    %124 = vmatpush1.msra.mxu0 0.0
    %125 = vmatprep.subr.mxu0 0.0
    %126 = vmatpush1.msra.mxu0 0.0
    %127 = vmatprep.subr.mxu0 0.0
    %128 = vmatpush1.msra.mxu0 0.0
    %129 = vmatprep.subr.mxu0 0.0
    %130 = vmatpush1.msra.mxu0 0.0
    %131 = vmatprep.subr.mxu0 0.0
    %132 = vmatpush1.msra.mxu0 0.0
    %133 = vmatprep.subr.mxu0 0.0
    %134 = vmatpush1.msra.mxu0 0.0
    %135 = vmatprep.subr.mxu0 0.0
    %136 = vmatpush1.msra.mxu0 0.0
    %137 = vmatprep.subr.mxu0 0.0
    %138 = vmatpush1.msra.mxu0 0.0
    %139 = vmatprep.subr.mxu0 0.0
    %140 = vmatpush1.msra.mxu0 0.0
    %141 = vmatprep.subr.mxu0 0.0
    %142 = vmatpush1.msra.mxu0 0.0
    %143 = vmatprep.subr.mxu0 0.0
    %144 = vmatpush1.msra.mxu0 0.0
    %145 = vmatprep.mubr.f32.mxu0 0.0
    %146 = vmatmul.mubr.f32.gmra.mrb[0].mxu0 %v73
    %v147 = vpop.f32.mrb[0].mxu0
    %v148 = vadd.f32 0.0, %v147
    %v149 = vpop.f32.mrb[0].mxu0
    %v150 = vadd.f32 0.0, %v149
    %151 = vmatprep.mubr.f32.mxu0 0.0
    %152 = vmatmul.mubr.f32.gmra.mrb[0].mxu0 %v75
    %v153 = vpop.f32.mrb[0].mxu0
    %v154 = vadd.f32 0.0, %v153
    %v155 = vpop.f32.mrb[0].mxu0
    %v156 = vadd.f32 0.0, %v155
    %157 = vmatprep.mubr.f32.mxu0 0.0
    %158 = vmatmul.mubr.f32.gmra.mrb[0].mxu0 %v77
    %v159 = vpop.f32.mrb[0].mxu0
    %v160 = vadd.f32 0.0, %v159
    %v161 = vpop.f32.mrb[0].mxu0
    %v162 = vadd.f32 0.0, %v161
    %163 = vmatprep.mubr.f32.mxu0 0.0
    %164 = vmatmul.mubr.f32.gmra.mrb[0].mxu0 %v79
    %v165 = vpop.f32.mrb[0].mxu0
    %v166 = vadd.f32 0.0, %v165
    %v167 = vpop.f32.mrb[0].mxu0
    %v168 = vadd.f32 0.0, %v167
    %169 = vdwg.mxu0
    %v170 = vsel %vm72, %v39, 0
    %v172 = vsel %vm72, %v40, 0
    %v174 = vsel %vm72, %v41, 0
    %v176 = vsel %vm72, %v42, 0
    %178 = vmatprep.subr.mxu0 %v44
    %179 = vmatpush1.msra.mxu0 %v43
    %180 = vmatprep.subr.mxu0 %v46
    %181 = vmatpush1.msra.mxu0 %v45
    %182 = vmatprep.subr.mxu0 %v48
    %183 = vmatpush1.msra.mxu0 %v47
    %184 = vmatprep.subr.mxu0 %v50
    %185 = vmatpush1.msra.mxu0 %v49
    %186 = vmatprep.subr.mxu0 0.0
    %187 = vmatpush1.msra.mxu0 0.0
    %188 = vmatprep.subr.mxu0 0.0
    %189 = vmatpush1.msra.mxu0 0.0
    %190 = vmatprep.subr.mxu0 0.0
    %191 = vmatpush1.msra.mxu0 0.0
    %192 = vmatprep.subr.mxu0 0.0
    %193 = vmatpush1.msra.mxu0 0.0
    %194 = vmatprep.subr.mxu0 0.0
    %195 = vmatpush1.msra.mxu0 0.0
    %196 = vmatprep.subr.mxu0 0.0
    %197 = vmatpush1.msra.mxu0 0.0
    %198 = vmatprep.subr.mxu0 0.0
    %199 = vmatpush1.msra.mxu0 0.0
    %200 = vmatprep.subr.mxu0 0.0
    %201 = vmatpush1.msra.mxu0 0.0
    %202 = vmatprep.subr.mxu0 0.0
    %203 = vmatpush1.msra.mxu0 0.0
    %204 = vmatprep.subr.mxu0 0.0
    %205 = vmatpush1.msra.mxu0 0.0
    %206 = vmatprep.subr.mxu0 0.0
    %207 = vmatpush1.msra.mxu0 0.0
    %208 = vmatprep.subr.mxu0 0.0
    %209 = vmatpush1.msra.mxu0 0.0
    %210 = vmatprep.subr.mxu0 0.0
    %211 = vmatpush1.msra.mxu0 0.0
    %212 = vmatprep.subr.mxu0 0.0
    %213 = vmatpush1.msra.mxu0 0.0
    %214 = vmatprep.subr.mxu0 0.0
    %215 = vmatpush1.msra.mxu0 0.0
    %216 = vmatprep.subr.mxu0 0.0
    %217 = vmatpush1.msra.mxu0 0.0
    %218 = vmatprep.subr.mxu0 0.0
    %219 = vmatpush1.msra.mxu0 0.0
    %220 = vmatprep.subr.mxu0 0.0
    %221 = vmatpush1.msra.mxu0 0.0
    %222 = vmatprep.subr.mxu0 0.0
    %223 = vmatpush1.msra.mxu0 0.0
    %224 = vmatprep.subr.mxu0 0.0
    %225 = vmatpush1.msra.mxu0 0.0
    %226 = vmatprep.subr.mxu0 0.0
    %227 = vmatpush1.msra.mxu0 0.0
    %228 = vmatprep.subr.mxu0 0.0
    %229 = vmatpush1.msra.mxu0 0.0
    %230 = vmatprep.subr.mxu0 0.0
    %231 = vmatpush1.msra.mxu0 0.0
    %232 = vmatprep.subr.mxu0 0.0
    %233 = vmatpush1.msra.mxu0 0.0
    %234 = vmatprep.subr.mxu0 0.0
    %235 = vmatpush1.msra.mxu0 0.0
    %236 = vmatprep.subr.mxu0 0.0
    %237 = vmatpush1.msra.mxu0 0.0
    %238 = vmatprep.subr.mxu0 0.0
    %239 = vmatpush1.msra.mxu0 0.0
    %240 = vmatprep.subr.mxu0 0.0
    %241 = vmatpush1.msra.mxu0 0.0
    %242 = vmatprep.mubr.f32.mxu0 0.0
    %243 = vmatmul.mubr.f32.gmra.mrb[0].mxu0 %v170
    %v244 = vpop.f32.mrb[0].mxu0
    %v245 = vadd.f32 %v148, %v244
    %v246 = vpop.f32.mrb[0].mxu0
    %v247 = vadd.f32 %v150, %v246
    %248 = vmatprep.mubr.f32.mxu0 0.0
    %249 = vmatmul.mubr.f32.gmra.mrb[0].mxu0 %v172
    %v250 = vpop.f32.mrb[0].mxu0
    %v251 = vadd.f32 %v154, %v250
    %v252 = vpop.f32.mrb[0].mxu0
    %v253 = vadd.f32 %v156, %v252
    %254 = vmatprep.mubr.f32.mxu0 0.0
    %255 = vmatmul.mubr.f32.gmra.mrb[0].mxu0 %v174
    %v256 = vpop.f32.mrb[0].mxu0
    %v257 = vadd.f32 %v160, %v256
    %v258 = vpop.f32.mrb[0].mxu0
    %v259 = vadd.f32 %v162, %v258
    %260 = vmatprep.mubr.f32.mxu0 0.0
    %261 = vmatmul.mubr.f32.gmra.mrb[0].mxu0 %v176
    %v262 = vpop.f32.mrb[0].mxu0
    %v263 = vadd.f32 %v166, %v262
    %v264 = vpop.f32.mrb[0].mxu0
    %v265 = vadd.f32 %v168, %v264
    %266 = vdwg.mxu0
    %s267 = scalar_lea.vmem %s1, 128
    %v268 = vld [vmem:[%s267] sm:$0xff]
    %v269 = vld [vmem:[%s267 + $0x8] sm:$0xff]
    %v270 = vld [vmem:[%s267 + $0x10] sm:$0xff]
    %v271 = vld [vmem:[%s267 + $0x18] sm:$0xff]
    %v272 = vld [vmem:[%s267 + $0x20] sm:$0xff]
    %v273 = vld [vmem:[%s267 + $0x28] sm:$0xff]
    %v274 = vld [vmem:[%s267 + $0x30] sm:$0xff]
    %v275 = vld [vmem:[%s267 + $0x38] sm:$0xff]
    %vm276 = vcmask 1045504
    %v277 = vrot.slane %v39, 2
    %v278 = vrot.slane %v40, 2
    %v279 = vsel %vm276, %v277, %v278
    %v280 = vrot.slane %v41, 2
    %v281 = vsel %vm276, %v278, %v280
    %v282 = vrot.slane %v42, 2
    %v283 = vsel %vm276, %v280, %v282
    %v284 = vsel %vm72, %v279, 0
    %v286 = vsel %vm72, %v281, 0
    %v288 = vsel %vm72, %v283, 0
    %v290 = vsel %vm72, %v282, 0
    %292 = vmatprep.subr.mxu0 %v269
    %293 = vmatpush1.msra.mxu0 %v268
    %294 = vmatprep.subr.mxu0 %v271
    %295 = vmatpush1.msra.mxu0 %v270
    %296 = vmatprep.subr.mxu0 %v273
    %297 = vmatpush1.msra.mxu0 %v272
    %298 = vmatprep.subr.mxu0 %v275
    %299 = vmatpush1.msra.mxu0 %v274
    %300 = vmatprep.subr.mxu0 0.0
    %301 = vmatpush1.msra.mxu0 0.0
    %302 = vmatprep.subr.mxu0 0.0
    %303 = vmatpush1.msra.mxu0 0.0
    %304 = vmatprep.subr.mxu0 0.0
    %305 = vmatpush1.msra.mxu0 0.0
    %306 = vmatprep.subr.mxu0 0.0
    %307 = vmatpush1.msra.mxu0 0.0
    %308 = vmatprep.subr.mxu0 0.0
    %309 = vmatpush1.msra.mxu0 0.0
    %310 = vmatprep.subr.mxu0 0.0
    %311 = vmatpush1.msra.mxu0 0.0
    %312 = vmatprep.subr.mxu0 0.0
    %313 = vmatpush1.msra.mxu0 0.0
    %314 = vmatprep.subr.mxu0 0.0
    %315 = vmatpush1.msra.mxu0 0.0
    %316 = vmatprep.subr.mxu0 0.0
    %317 = vmatpush1.msra.mxu0 0.0
    %318 = vmatprep.subr.mxu0 0.0
    %319 = vmatpush1.msra.mxu0 0.0
    %320 = vmatprep.subr.mxu0 0.0
    %321 = vmatpush1.msra.mxu0 0.0
    %322 = vmatprep.subr.mxu0 0.0
    %323 = vmatpush1.msra.mxu0 0.0
    %324 = vmatprep.subr.mxu0 0.0
    %325 = vmatpush1.msra.mxu0 0.0
    %326 = vmatprep.subr.mxu0 0.0
    %327 = vmatpush1.msra.mxu0 0.0
    %328 = vmatprep.subr.mxu0 0.0
    %329 = vmatpush1.msra.mxu0 0.0
    %330 = vmatprep.subr.mxu0 0.0
    %331 = vmatpush1.msra.mxu0 0.0
    %332 = vmatprep.subr.mxu0 0.0
    %333 = vmatpush1.msra.mxu0 0.0
    %334 = vmatprep.subr.mxu0 0.0
    %335 = vmatpush1.msra.mxu0 0.0
    %336 = vmatprep.subr.mxu0 0.0
    %337 = vmatpush1.msra.mxu0 0.0
    %338 = vmatprep.subr.mxu0 0.0
    %339 = vmatpush1.msra.mxu0 0.0
    %340 = vmatprep.subr.mxu0 0.0
    %341 = vmatpush1.msra.mxu0 0.0
    %342 = vmatprep.subr.mxu0 0.0
    %343 = vmatpush1.msra.mxu0 0.0
    %344 = vmatprep.subr.mxu0 0.0
    %345 = vmatpush1.msra.mxu0 0.0
    %346 = vmatprep.subr.mxu0 0.0
    %347 = vmatpush1.msra.mxu0 0.0
    %348 = vmatprep.subr.mxu0 0.0
    %349 = vmatpush1.msra.mxu0 0.0
    %350 = vmatprep.subr.mxu0 0.0
    %351 = vmatpush1.msra.mxu0 0.0
    %352 = vmatprep.subr.mxu0 0.0
    %353 = vmatpush1.msra.mxu0 0.0
    %354 = vmatprep.subr.mxu0 0.0
    %355 = vmatpush1.msra.mxu0 0.0
    %356 = vmatprep.mubr.f32.mxu0 0.0
    %357 = vmatmul.mubr.f32.gmra.mrb[0].mxu0 %v284
    %v358 = vpop.f32.mrb[0].mxu0
    %v359 = vadd.f32 0.0, %v358
    %v360 = vpop.f32.mrb[0].mxu0
    %v361 = vadd.f32 0.0, %v360
    %362 = vmatprep.mubr.f32.mxu0 0.0
    %363 = vmatmul.mubr.f32.gmra.mrb[0].mxu0 %v286
    %v364 = vpop.f32.mrb[0].mxu0
    %v365 = vadd.f32 0.0, %v364
    %v366 = vpop.f32.mrb[0].mxu0
    %v367 = vadd.f32 0.0, %v366
    %368 = vmatprep.mubr.f32.mxu0 0.0
    %369 = vmatmul.mubr.f32.gmra.mrb[0].mxu0 %v288
    %v370 = vpop.f32.mrb[0].mxu0
    %v371 = vadd.f32 0.0, %v370
    %v372 = vpop.f32.mrb[0].mxu0
    %v373 = vadd.f32 0.0, %v372
    %374 = vmatprep.mubr.f32.mxu0 0.0
    %375 = vmatmul.mubr.f32.gmra.mrb[0].mxu0 %v290
    %v376 = vpop.f32.mrb[0].mxu0
    %v377 = vadd.f32 0.0, %v376
    %v378 = vpop.f32.mrb[0].mxu0
    %v379 = vadd.f32 0.0, %v378
    %380 = vdwg.mxu0
    %v381 = vadd.f32 %v245, %v359
    %v382 = vadd.f32 %v247, %v361
    %v383 = vadd.f32 %v251, %v365
    %v384 = vadd.f32 %v253, %v367
    %v385 = vadd.f32 %v257, %v371
    %v386 = vadd.f32 %v259, %v373
    %v387 = vadd.f32 %v263, %v377
    %v388 = vadd.f32 %v265, %v379
    %s389 = scalar_lea.vmem %s1, 192
    %v390 = vld [vmem:[%s389] sm:$0xff]
    %v391 = vld [vmem:[%s389 + $0x8] sm:$0xff]
    %v392 = vld [vmem:[%s389 + $0x10] sm:$0xff]
    %v393 = vld [vmem:[%s389 + $0x18] sm:$0xff]
    %v394 = vld [vmem:[%s389 + $0x20] sm:$0xff]
    %v395 = vld [vmem:[%s389 + $0x28] sm:$0xff]
    %v396 = vld [vmem:[%s389 + $0x30] sm:$0xff]
    %v397 = vld [vmem:[%s389 + $0x38] sm:$0xff]
    %vm398 = vcmask 1044480
    %v399 = vrot.slane %v39, 3
    %v400 = vrot.slane %v40, 3
    %v401 = vsel %vm398, %v399, %v400
    %v402 = vrot.slane %v41, 3
    %v403 = vsel %vm398, %v400, %v402
    %v404 = vrot.slane %v42, 3
    %v405 = vsel %vm398, %v402, %v404
    %v406 = vsel %vm72, %v401, 0
    %v408 = vsel %vm72, %v403, 0
    %v410 = vsel %vm72, %v405, 0
    %v412 = vsel %vm72, %v404, 0
    %414 = vmatprep.subr.mxu0 %v391
    %415 = vmatpush1.msra.mxu0 %v390
    %416 = vmatprep.subr.mxu0 %v393
    %417 = vmatpush1.msra.mxu0 %v392
    %418 = vmatprep.subr.mxu0 %v395
    %419 = vmatpush1.msra.mxu0 %v394
    %420 = vmatprep.subr.mxu0 %v397
    %421 = vmatpush1.msra.mxu0 %v396
    %422 = vmatprep.subr.mxu0 0.0
    %423 = vmatpush1.msra.mxu0 0.0
    %424 = vmatprep.subr.mxu0 0.0
    %425 = vmatpush1.msra.mxu0 0.0
    %426 = vmatprep.subr.mxu0 0.0
    %427 = vmatpush1.msra.mxu0 0.0
    %428 = vmatprep.subr.mxu0 0.0
    %429 = vmatpush1.msra.mxu0 0.0
    %430 = vmatprep.subr.mxu0 0.0
    %431 = vmatpush1.msra.mxu0 0.0
    %432 = vmatprep.subr.mxu0 0.0
    %433 = vmatpush1.msra.mxu0 0.0
    %434 = vmatprep.subr.mxu0 0.0
    %435 = vmatpush1.msra.mxu0 0.0
    %436 = vmatprep.subr.mxu0 0.0
    %437 = vmatpush1.msra.mxu0 0.0
    %438 = vmatprep.subr.mxu0 0.0
    %439 = vmatpush1.msra.mxu0 0.0
    %440 = vmatprep.subr.mxu0 0.0
    %441 = vmatpush1.msra.mxu0 0.0
    %442 = vmatprep.subr.mxu0 0.0
    %443 = vmatpush1.msra.mxu0 0.0
    %444 = vmatprep.subr.mxu0 0.0
    %445 = vmatpush1.msra.mxu0 0.0
    %446 = vmatprep.subr.mxu0 0.0
    %447 = vmatpush1.msra.mxu0 0.0
    %448 = vmatprep.subr.mxu0 0.0
    %449 = vmatpush1.msra.mxu0 0.0
    %450 = vmatprep.subr.mxu0 0.0
    %451 = vmatpush1.msra.mxu0 0.0
    %452 = vmatprep.subr.mxu0 0.0
    %453 = vmatpush1.msra.mxu0 0.0
    %454 = vmatprep.subr.mxu0 0.0
    %455 = vmatpush1.msra.mxu0 0.0
    %456 = vmatprep.subr.mxu0 0.0
    %457 = vmatpush1.msra.mxu0 0.0
    %458 = vmatprep.subr.mxu0 0.0
    %459 = vmatpush1.msra.mxu0 0.0
    %460 = vmatprep.subr.mxu0 0.0
    %461 = vmatpush1.msra.mxu0 0.0
    %462 = vmatprep.subr.mxu0 0.0
    %463 = vmatpush1.msra.mxu0 0.0
    %464 = vmatprep.subr.mxu0 0.0
    %465 = vmatpush1.msra.mxu0 0.0
    %466 = vmatprep.subr.mxu0 0.0
    %467 = vmatpush1.msra.mxu0 0.0
    %468 = vmatprep.subr.mxu0 0.0
    %469 = vmatpush1.msra.mxu0 0.0
    %470 = vmatprep.subr.mxu0 0.0
    %471 = vmatpush1.msra.mxu0 0.0
    %472 = vmatprep.subr.mxu0 0.0
    %473 = vmatpush1.msra.mxu0 0.0
    %474 = vmatprep.subr.mxu0 0.0
    %475 = vmatpush1.msra.mxu0 0.0
    %476 = vmatprep.subr.mxu0 0.0
    %477 = vmatpush1.msra.mxu0 0.0
    %478 = vmatprep.mubr.f32.mxu0 0.0
    %479 = vmatmul.mubr.f32.gmra.mrb[0].mxu0 %v406
    %v480 = vpop.f32.mrb[0].mxu0
    %v481 = vadd.f32 0.0, %v480
    %v482 = vpop.f32.mrb[0].mxu0
    %v483 = vadd.f32 0.0, %v482
    %484 = vmatprep.mubr.f32.mxu0 0.0
    %485 = vmatmul.mubr.f32.gmra.mrb[0].mxu0 %v408
    %v486 = vpop.f32.mrb[0].mxu0
    %v487 = vadd.f32 0.0, %v486
    %v488 = vpop.f32.mrb[0].mxu0
    %v489 = vadd.f32 0.0, %v488
    %490 = vmatprep.mubr.f32.mxu0 0.0
    %491 = vmatmul.mubr.f32.gmra.mrb[0].mxu0 %v410
    %v492 = vpop.f32.mrb[0].mxu0
    %v493 = vadd.f32 0.0, %v492
    %v494 = vpop.f32.mrb[0].mxu0
    %v495 = vadd.f32 0.0, %v494
    %496 = vmatprep.mubr.f32.mxu0 0.0
    %497 = vmatmul.mubr.f32.gmra.mrb[0].mxu0 %v412
    %v498 = vpop.f32.mrb[0].mxu0
    %v499 = vadd.f32 0.0, %v498
    %v500 = vpop.f32.mrb[0].mxu0
    %v501 = vadd.f32 0.0, %v500
    %502 = vdwg.mxu0
    %v503 = vadd.f32 %v381, %v481
    %v504 = vadd.f32 %v382, %v483
    %v505 = vadd.f32 %v383, %v487
    %v506 = vadd.f32 %v384, %v489
    %v507 = vadd.f32 %v385, %v493
    %v508 = vadd.f32 %v386, %v495
    %v509 = vadd.f32 %v387, %v499
    %v510 = vadd.f32 %v388, %v501
    %s511 = scalar_lea.vmem %s1, 256
    %v512 = vld [vmem:[%s511] sm:$0xff]
    %v513 = vld [vmem:[%s511 + $0x8] sm:$0xff]
    %v514 = vld [vmem:[%s511 + $0x10] sm:$0xff]
    %v515 = vld [vmem:[%s511 + $0x18] sm:$0xff]
    %v516 = vld [vmem:[%s511 + $0x20] sm:$0xff]
    %v517 = vld [vmem:[%s511 + $0x28] sm:$0xff]
    %v518 = vld [vmem:[%s511 + $0x30] sm:$0xff]
    %v519 = vld [vmem:[%s511 + $0x38] sm:$0xff]
    %vm520 = vcmask 1043456
    %v521 = vrot.slane %v39, 4
    %v522 = vrot.slane %v40, 4
    %v523 = vsel %vm520, %v521, %v522
    %v524 = vrot.slane %v41, 4
    %v525 = vsel %vm520, %v522, %v524
    %v526 = vrot.slane %v42, 4
    %v527 = vsel %vm520, %v524, %v526
    %v528 = vsel %vm72, %v523, 0
    %v530 = vsel %vm72, %v525, 0
    %v532 = vsel %vm72, %v527, 0
    %v534 = vsel %vm72, %v526, 0
    %536 = vmatprep.subr.mxu0 %v513
    %537 = vmatpush1.msra.mxu0 %v512
    %538 = vmatprep.subr.mxu0 %v515
    %539 = vmatpush1.msra.mxu0 %v514
    %540 = vmatprep.subr.mxu0 %v517
    %541 = vmatpush1.msra.mxu0 %v516
    %542 = vmatprep.subr.mxu0 %v519
    %543 = vmatpush1.msra.mxu0 %v518
    %544 = vmatprep.subr.mxu0 0.0
    %545 = vmatpush1.msra.mxu0 0.0
    %546 = vmatprep.subr.mxu0 0.0
    %547 = vmatpush1.msra.mxu0 0.0
    %548 = vmatprep.subr.mxu0 0.0
    %549 = vmatpush1.msra.mxu0 0.0
    %550 = vmatprep.subr.mxu0 0.0
    %551 = vmatpush1.msra.mxu0 0.0
    %552 = vmatprep.subr.mxu0 0.0
    %553 = vmatpush1.msra.mxu0 0.0
    %554 = vmatprep.subr.mxu0 0.0
    %555 = vmatpush1.msra.mxu0 0.0
    %556 = vmatprep.subr.mxu0 0.0
    %557 = vmatpush1.msra.mxu0 0.0
    %558 = vmatprep.subr.mxu0 0.0
    %559 = vmatpush1.msra.mxu0 0.0
    %560 = vmatprep.subr.mxu0 0.0
    %561 = vmatpush1.msra.mxu0 0.0
    %562 = vmatprep.subr.mxu0 0.0
    %563 = vmatpush1.msra.mxu0 0.0
    %564 = vmatprep.subr.mxu0 0.0
    %565 = vmatpush1.msra.mxu0 0.0
    %566 = vmatprep.subr.mxu0 0.0
    %567 = vmatpush1.msra.mxu0 0.0
    %568 = vmatprep.subr.mxu0 0.0
    %569 = vmatpush1.msra.mxu0 0.0
    %570 = vmatprep.subr.mxu0 0.0
    %571 = vmatpush1.msra.mxu0 0.0
    %572 = vmatprep.subr.mxu0 0.0
    %573 = vmatpush1.msra.mxu0 0.0
    %574 = vmatprep.subr.mxu0 0.0
    %575 = vmatpush1.msra.mxu0 0.0
    %576 = vmatprep.subr.mxu0 0.0
    %577 = vmatpush1.msra.mxu0 0.0
    %578 = vmatprep.subr.mxu0 0.0
    %579 = vmatpush1.msra.mxu0 0.0
    %580 = vmatprep.subr.mxu0 0.0
    %581 = vmatpush1.msra.mxu0 0.0
    %582 = vmatprep.subr.mxu0 0.0
    %583 = vmatpush1.msra.mxu0 0.0
    %584 = vmatprep.subr.mxu0 0.0
    %585 = vmatpush1.msra.mxu0 0.0
    %586 = vmatprep.subr.mxu0 0.0
    %587 = vmatpush1.msra.mxu0 0.0
    %588 = vmatprep.subr.mxu0 0.0
    %589 = vmatpush1.msra.mxu0 0.0
    %590 = vmatprep.subr.mxu0 0.0
    %591 = vmatpush1.msra.mxu0 0.0
    %592 = vmatprep.subr.mxu0 0.0
    %593 = vmatpush1.msra.mxu0 0.0
    %594 = vmatprep.subr.mxu0 0.0
    %595 = vmatpush1.msra.mxu0 0.0
    %596 = vmatprep.subr.mxu0 0.0
    %597 = vmatpush1.msra.mxu0 0.0
    %598 = vmatprep.subr.mxu0 0.0
    %599 = vmatpush1.msra.mxu0 0.0
    %600 = vmatprep.mubr.f32.mxu0 0.0
    %601 = vmatmul.mubr.f32.gmra.mrb[0].mxu0 %v528
    %v602 = vpop.f32.mrb[0].mxu0
    %v603 = vadd.f32 0.0, %v602
    %v604 = vpop.f32.mrb[0].mxu0
    %v605 = vadd.f32 0.0, %v604
    %606 = vmatprep.mubr.f32.mxu0 0.0
    %607 = vmatmul.mubr.f32.gmra.mrb[0].mxu0 %v530
    %v608 = vpop.f32.mrb[0].mxu0
    %v609 = vadd.f32 0.0, %v608
    %v610 = vpop.f32.mrb[0].mxu0
    %v611 = vadd.f32 0.0, %v610
    %612 = vmatprep.mubr.f32.mxu0 0.0
    %613 = vmatmul.mubr.f32.gmra.mrb[0].mxu0 %v532
    %v614 = vpop.f32.mrb[0].mxu0
    %v615 = vadd.f32 0.0, %v614
    %v616 = vpop.f32.mrb[0].mxu0
    %v617 = vadd.f32 0.0, %v616
    %618 = vmatprep.mubr.f32.mxu0 0.0
    %619 = vmatmul.mubr.f32.gmra.mrb[0].mxu0 %v534
    %v620 = vpop.f32.mrb[0].mxu0
    %v621 = vadd.f32 0.0, %v620
    %v622 = vpop.f32.mrb[0].mxu0
    %v623 = vadd.f32 0.0, %v622
    %624 = vdwg.mxu0
    %v625 = vadd.f32 %v503, %v603
    %v626 = vadd.f32 %v504, %v605
    %v627 = vadd.f32 %v505, %v609
    %v628 = vadd.f32 %v506, %v611
    %v629 = vadd.f32 %v507, %v615
    %v630 = vadd.f32 %v508, %v617
    %v631 = vadd.f32 %v509, %v621
    %v632 = vadd.f32 %v510, %v623
    %v635 = vrot.slane %v625, 1
    %v636 = vrot.slane %v626, 1
    %v639 = vmax.f32 %v625, %v635
    %v640 = vmax.f32 %v626, %v636
    %643 = vrot.lane.b32.xlu0 %v639, 44
    %v644 = vpop.permute.xlu0 %643
    %645 = vrot.lane.b32.xlu0 %v640, 44
    %v646 = vpop.permute.xlu0 %645
    %vm647 = vcmask 359424
    %v648 = vsel %vm647, %v644, %v646
    %v650 = vmax.f32 %v639, %v648
    %v651 = vld [vmem:[%s2] sm:$0x1]
    %v652 = vadd.f32 %v650, %v651
    %v653 = vmax.f32 %v652, 0.0
    %vm654 = vcmask 679936
    %655 = vst.msk [vmem:[#allocation2] sm:$0x1] %vm654, %v653
    %v656 = vld [vmem:[%s2] sm:$0x1]
    %v658 = vlaneseq
    %v659 = vshrl.u32 %v658, 7
    %v660 = vsub.s32 0, %v659
    %v661 = vrot.slane %v656, %v660
    %v663 = vadd.f32 %v650, %v661
    %v664 = vmax.f32 %v663, 0.0
    %vm665 = vcmask 681986
    %666 = vst.msk [vmem:[#allocation2 - $0x1] sm:$0x4] %vm665, %v664
    %v667 = vld [vmem:[%s2] sm:$0x1]
    %v669 = vlaneseq
    %v670 = vshrl.u32 %v669, 7
    %v671 = vsub.s32 0, %v670
    %v672 = vrot.slane %v667, %v671
    %v674 = vadd.f32 %v650, %v672
    %v675 = vmax.f32 %v674, 0.0
    %vm676 = vcmask 684036
    %677 = vst.msk [vmem:[#allocation2 - $0x2] sm:$0x10] %vm676, %v675
    %v678 = vld [vmem:[%s2] sm:$0x1]
    %v680 = vlaneseq
    %v681 = vshrl.u32 %v680, 7
    %v682 = vsub.s32 0, %v681
    %v683 = vrot.slane %v678, %v682
    %v685 = vadd.f32 %v650, %v683
    %v686 = vmax.f32 %v685, 0.0
    %vm687 = vcmask 686086
    %688 = vst.msk [vmem:[#allocation2 - $0x3] sm:$0x40] %vm687, %v686
    %v691 = vrot.slane %v627, 1
    %v692 = vrot.slane %v628, 1
    %v695 = vmax.f32 %v627, %v691
    %v696 = vmax.f32 %v628, %v692
    %699 = vrot.lane.b32.xlu0 %v695, 44
    %v700 = vpop.permute.xlu0 %699
    %701 = vrot.lane.b32.xlu0 %v696, 44
    %v702 = vpop.permute.xlu0 %701
    %v703 = vsel %vm647, %v700, %v702
    %v705 = vmax.f32 %v695, %v703
    %v706 = vld [vmem:[%s2] sm:$0x1]
    %v707 = vadd.f32 %v705, %v706
    %v708 = vmax.f32 %v707, 0.0
    %709 = vst.msk [vmem:[#allocation2 + $0x4] sm:$0x1] %vm654, %v708
    %v710 = vld [vmem:[%s2] sm:$0x1]
    %v712 = vlaneseq
    %v713 = vshrl.u32 %v712, 7
    %v714 = vsub.s32 0, %v713
    %v715 = vrot.slane %v710, %v714
    %v717 = vadd.f32 %v705, %v715
    %v718 = vmax.f32 %v717, 0.0
    %719 = vst.msk [vmem:[#allocation2 + $0x3] sm:$0x4] %vm665, %v718
    %v720 = vld [vmem:[%s2] sm:$0x1]
    %v722 = vlaneseq
    %v723 = vshrl.u32 %v722, 7
    %v724 = vsub.s32 0, %v723
    %v725 = vrot.slane %v720, %v724
    %v727 = vadd.f32 %v705, %v725
    %v728 = vmax.f32 %v727, 0.0
    %729 = vst.msk [vmem:[#allocation2 + $0x2] sm:$0x10] %vm676, %v728
    %v730 = vld [vmem:[%s2] sm:$0x1]
    %v732 = vlaneseq
    %v733 = vshrl.u32 %v732, 7
    %v734 = vsub.s32 0, %v733
    %v735 = vrot.slane %v730, %v734
    %v737 = vadd.f32 %v705, %v735
    %v738 = vmax.f32 %v737, 0.0
    %739 = vst.msk [vmem:[#allocation2 + $0x1] sm:$0x40] %vm687, %v738
    %v742 = vrot.slane %v629, 1
    %v743 = vrot.slane %v630, 1
    %v746 = vmax.f32 %v629, %v742
    %v747 = vmax.f32 %v630, %v743
    %750 = vrot.lane.b32.xlu0 %v746, 44
    %v751 = vpop.permute.xlu0 %750
    %752 = vrot.lane.b32.xlu0 %v747, 44
    %v753 = vpop.permute.xlu0 %752
    %v754 = vsel %vm647, %v751, %v753
    %v756 = vmax.f32 %v746, %v754
    %v757 = vld [vmem:[%s2] sm:$0x1]
    %v758 = vadd.f32 %v756, %v757
    %v759 = vmax.f32 %v758, 0.0
    %760 = vst.msk [vmem:[#allocation2 + $0x8] sm:$0x1] %vm654, %v759
    %v761 = vld [vmem:[%s2] sm:$0x1]
    %v763 = vlaneseq
    %v764 = vshrl.u32 %v763, 7
    %v765 = vsub.s32 0, %v764
    %v766 = vrot.slane %v761, %v765
    %v768 = vadd.f32 %v756, %v766
    %v769 = vmax.f32 %v768, 0.0
    %770 = vst.msk [vmem:[#allocation2 + $0x7] sm:$0x4] %vm665, %v769
    %v771 = vld [vmem:[%s2] sm:$0x1]
    %v773 = vlaneseq
    %v774 = vshrl.u32 %v773, 7
    %v775 = vsub.s32 0, %v774
    %v776 = vrot.slane %v771, %v775
    %v778 = vadd.f32 %v756, %v776
    %v779 = vmax.f32 %v778, 0.0
    %780 = vst.msk [vmem:[#allocation2 + $0x6] sm:$0x10] %vm676, %v779
    %v781 = vld [vmem:[%s2] sm:$0x1]
    %v783 = vlaneseq
    %v784 = vshrl.u32 %v783, 7
    %v785 = vsub.s32 0, %v784
    %v786 = vrot.slane %v781, %v785
    %v788 = vadd.f32 %v756, %v786
    %v789 = vmax.f32 %v788, 0.0
    %790 = vst.msk [vmem:[#allocation2 + $0x5] sm:$0x40] %vm687, %v789
    %v793 = vrot.slane %v631, 1
    %v794 = vrot.slane %v632, 1
    %v797 = vmax.f32 %v631, %v793
    %v798 = vmax.f32 %v632, %v794
    %801 = vrot.lane.b32.xlu0 %v797, 44
    %v802 = vpop.permute.xlu0 %801
    %803 = vrot.lane.b32.xlu0 %v798, 44
    %v804 = vpop.permute.xlu0 %803
    %v805 = vsel %vm647, %v802, %v804
    %v807 = vmax.f32 %v797, %v805
    %v808 = vld [vmem:[%s2] sm:$0x1]
    %v809 = vadd.f32 %v807, %v808
    %v810 = vmax.f32 %v809, 0.0
    %811 = vst.msk [vmem:[#allocation2 + $0xc] sm:$0x1] %vm654, %v810
    %v812 = vld [vmem:[%s2] sm:$0x1]
    %v814 = vlaneseq
    %v815 = vshrl.u32 %v814, 7
    %v816 = vsub.s32 0, %v815
    %v817 = vrot.slane %v812, %v816
    %v819 = vadd.f32 %v807, %v817
    %v820 = vmax.f32 %v819, 0.0
    %821 = vst.msk [vmem:[#allocation2 + $0xb] sm:$0x4] %vm665, %v820
    %v822 = vld [vmem:[#allocation2] sm:$0xff]
    %v823 = vld [vmem:[#allocation2 + $0x8] sm:$0x3]
    %v824 = vld [vmem:[%s3] sm:$0xff]
    %v825 = vld [vmem:[%s3 + $0x8] sm:$0xff]
    %v826 = vld [vmem:[%s3 + $0x10] sm:$0xff]
    %v827 = vld [vmem:[%s3 + $0x18] sm:$0xff]
    %v828 = vld [vmem:[%s3 + $0x20] sm:$0xff]
    %v829 = vld [vmem:[%s3 + $0x28] sm:$0xff]
    %v830 = vld [vmem:[%s3 + $0x30] sm:$0xff]
    %v831 = vld [vmem:[%s3 + $0x38] sm:$0xff]
    %v832 = vld [vmem:[%s3 + $0x40] sm:$0xff]
    %v833 = vld [vmem:[%s3 + $0x48] sm:$0xff]
    %v834 = vld [vmem:[%s3 + $0x50] sm:$0xff]
    %v835 = vld [vmem:[%s3 + $0x58] sm:$0xff]
    %v836 = vld [vmem:[%s3 + $0x60] sm:$0xff]
    %v837 = vld [vmem:[%s3 + $0x68] sm:$0xff]
    %v838 = vld [vmem:[%s3 + $0x70] sm:$0xff]
    %v839 = vld [vmem:[%s3 + $0x78] sm:$0xff]
    %v840 = vld [vmem:[%s3 + $0x80] sm:$0xff]
    %v841 = vld [vmem:[%s3 + $0x88] sm:$0xff]
    %v842 = vld [vmem:[%s3 + $0x90] sm:$0xff]
    %v843 = vld [vmem:[%s3 + $0x98] sm:$0xff]
    %v844 = vld [vmem:[%s3 + $0xa0] sm:$0xf]
    %v845 = vld [vmem:[%s3 + $0xa8] sm:$0xf]
    %v846 = vld [vmem:[#allocation2 + $0x1] sm:$0xff]
    %v847 = vld [vmem:[#allocation2 + $0x9] sm:$0x3]
    %s848 = scalar_lea.vmem %s3, 176
    %v849 = vld [vmem:[%s848] sm:$0xff]
    %v850 = vld [vmem:[%s848 + $0x8] sm:$0xff]
    %v851 = vld [vmem:[%s848 + $0x10] sm:$0xff]
    %v852 = vld [vmem:[%s848 + $0x18] sm:$0xff]
    %v853 = vld [vmem:[%s848 + $0x20] sm:$0xff]
    %v854 = vld [vmem:[%s848 + $0x28] sm:$0xff]
    %v855 = vld [vmem:[%s848 + $0x30] sm:$0xff]
    %v856 = vld [vmem:[%s848 + $0x38] sm:$0xff]
    %v857 = vld [vmem:[%s848 + $0x40] sm:$0xff]
    %v858 = vld [vmem:[%s848 + $0x48] sm:$0xff]
    %v859 = vld [vmem:[%s848 + $0x50] sm:$0xff]
    %v860 = vld [vmem:[%s848 + $0x58] sm:$0xff]
    %v861 = vld [vmem:[%s848 + $0x60] sm:$0xff]
    %v862 = vld [vmem:[%s848 + $0x68] sm:$0xff]
    %v863 = vld [vmem:[%s848 + $0x70] sm:$0xff]
    %v864 = vld [vmem:[%s848 + $0x78] sm:$0xff]
    %v865 = vld [vmem:[%s848 + $0x80] sm:$0xff]
    %v866 = vld [vmem:[%s848 + $0x88] sm:$0xff]
    %v867 = vld [vmem:[%s848 + $0x90] sm:$0xff]
    %v868 = vld [vmem:[%s848 + $0x98] sm:$0xff]
    %v869 = vld [vmem:[%s848 + $0xa0] sm:$0xf]
    %v870 = vld [vmem:[%s848 + $0xa8] sm:$0xf]
    %vm871 = vcmask 687104
    %v873 = vsel %vm871, %v846, 0
    %v876 = vsel %vm871, %v847, 0
    %v879 = vsel %vm520, %v869, 0
    %v882 = vsel %vm520, %v870, 0
    %884 = vmatprep.subr.mxu0 %v850
    %885 = vmatpush1.msra.mxu0 %v849
    %886 = vmatprep.subr.mxu0 %v852
    %887 = vmatpush1.msra.mxu0 %v851
    %888 = vmatprep.subr.mxu0 %v854
    %889 = vmatpush1.msra.mxu0 %v853
    %890 = vmatprep.subr.mxu0 %v856
    %891 = vmatpush1.msra.mxu0 %v855
    %892 = vmatprep.subr.mxu0 %v858
    %893 = vmatpush1.msra.mxu0 %v857
    %894 = vmatprep.subr.mxu0 %v860
    %895 = vmatpush1.msra.mxu0 %v859
    %896 = vmatprep.subr.mxu0 %v862
    %897 = vmatpush1.msra.mxu0 %v861
    %898 = vmatprep.subr.mxu0 %v864
    %899 = vmatpush1.msra.mxu0 %v863
    %900 = vmatprep.subr.mxu0 %v866
    %901 = vmatpush1.msra.mxu0 %v865
    %902 = vmatprep.subr.mxu0 %v868
    %903 = vmatpush1.msra.mxu0 %v867
    %904 = vmatprep.subr.mxu0 %v882
    %905 = vmatpush1.msra.mxu0 %v879
    %906 = vmatprep.subr.mxu0 0.0
    %907 = vmatpush1.msra.mxu0 0.0
    %908 = vmatprep.subr.mxu0 0.0
    %909 = vmatpush1.msra.mxu0 0.0
    %910 = vmatprep.subr.mxu0 0.0
    %911 = vmatpush1.msra.mxu0 0.0
    %912 = vmatprep.subr.mxu0 0.0
    %913 = vmatpush1.msra.mxu0 0.0
    %914 = vmatprep.subr.mxu0 0.0
    %915 = vmatpush1.msra.mxu0 0.0
    %916 = vmatprep.subr.mxu0 0.0
    %917 = vmatpush1.msra.mxu0 0.0
    %918 = vmatprep.subr.mxu0 0.0
    %919 = vmatpush1.msra.mxu0 0.0
    %920 = vmatprep.subr.mxu0 0.0
    %921 = vmatpush1.msra.mxu0 0.0
    %922 = vmatprep.subr.mxu0 0.0
    %923 = vmatpush1.msra.mxu0 0.0
    %924 = vmatprep.subr.mxu0 0.0
    %925 = vmatpush1.msra.mxu0 0.0
    %926 = vmatprep.subr.mxu0 0.0
    %927 = vmatpush1.msra.mxu0 0.0
    %928 = vmatprep.subr.mxu0 0.0
    %929 = vmatpush1.msra.mxu0 0.0
    %930 = vmatprep.subr.mxu0 0.0
    %931 = vmatpush1.msra.mxu0 0.0
    %932 = vmatprep.subr.mxu0 0.0
    %933 = vmatpush1.msra.mxu0 0.0
    %934 = vmatprep.subr.mxu0 0.0
    %935 = vmatpush1.msra.mxu0 0.0
    %936 = vmatprep.subr.mxu0 0.0
    %937 = vmatpush1.msra.mxu0 0.0
    %938 = vmatprep.subr.mxu0 0.0
    %939 = vmatpush1.msra.mxu0 0.0
    %940 = vmatprep.subr.mxu0 0.0
    %941 = vmatpush1.msra.mxu0 0.0
    %942 = vmatprep.subr.mxu0 0.0
    %943 = vmatpush1.msra.mxu0 0.0
    %944 = vmatprep.subr.mxu0 0.0
    %945 = vmatpush1.msra.mxu0 0.0
    %946 = vmatprep.subr.mxu0 0.0
    %947 = vmatpush1.msra.mxu0 0.0
    %948 = vmatprep.mubr.f32.mxu0 0.0
    %949 = vmatmul.mubr.f32.gmra.mrb[0].mxu0 %v873
    %v950 = vpop.f32.mrb[0].mxu0
    %v951 = vadd.f32 0.0, %v950
    %v952 = vpop.f32.mrb[0].mxu0
    %v953 = vadd.f32 0.0, %v952
    %954 = vmatprep.mubr.f32.mxu0 0.0
    %955 = vmatmul.mubr.f32.gmra.mrb[0].mxu0 %v876
    %v956 = vpop.f32.mrb[0].mxu0
    %v957 = vadd.f32 0.0, %v956
    %v958 = vpop.f32.mrb[0].mxu0
    %v959 = vadd.f32 0.0, %v958
    %960 = vdwg.mxu0
    %v962 = vsel %vm871, %v822, 0
    %v965 = vsel %vm871, %v823, 0
    %v968 = vsel %vm520, %v844, 0
    %v971 = vsel %vm520, %v845, 0
    %973 = vmatprep.subr.mxu0 %v825
    %974 = vmatpush1.msra.mxu0 %v824
    %975 = vmatprep.subr.mxu0 %v827
    %976 = vmatpush1.msra.mxu0 %v826
    %977 = vmatprep.subr.mxu0 %v829
    %978 = vmatpush1.msra.mxu0 %v828
    %979 = vmatprep.subr.mxu0 %v831
    %980 = vmatpush1.msra.mxu0 %v830
    %981 = vmatprep.subr.mxu0 %v833
    %982 = vmatpush1.msra.mxu0 %v832
    %983 = vmatprep.subr.mxu0 %v835
    %984 = vmatpush1.msra.mxu0 %v834
    %985 = vmatprep.subr.mxu0 %v837
    %986 = vmatpush1.msra.mxu0 %v836
    %987 = vmatprep.subr.mxu0 %v839
    %988 = vmatpush1.msra.mxu0 %v838
    %989 = vmatprep.subr.mxu0 %v841
    %990 = vmatpush1.msra.mxu0 %v840
    %991 = vmatprep.subr.mxu0 %v843
    %992 = vmatpush1.msra.mxu0 %v842
    %993 = vmatprep.subr.mxu0 %v971
    %994 = vmatpush1.msra.mxu0 %v968
    %995 = vmatprep.subr.mxu0 0.0
    %996 = vmatpush1.msra.mxu0 0.0
    %997 = vmatprep.subr.mxu0 0.0
    %998 = vmatpush1.msra.mxu0 0.0
    %999 = vmatprep.subr.mxu0 0.0
    %1000 = vmatpush1.msra.mxu0 0.0
    %1001 = vmatprep.subr.mxu0 0.0
    %1002 = vmatpush1.msra.mxu0 0.0
    %1003 = vmatprep.subr.mxu0 0.0
    %1004 = vmatpush1.msra.mxu0 0.0
    %1005 = vmatprep.subr.mxu0 0.0
    %1006 = vmatpush1.msra.mxu0 0.0
    %1007 = vmatprep.subr.mxu0 0.0
    %1008 = vmatpush1.msra.mxu0 0.0
    %1009 = vmatprep.subr.mxu0 0.0
    %1010 = vmatpush1.msra.mxu0 0.0
    %1011 = vmatprep.subr.mxu0 0.0
    %1012 = vmatpush1.msra.mxu0 0.0
    %1013 = vmatprep.subr.mxu0 0.0
    %1014 = vmatpush1.msra.mxu0 0.0
    %1015 = vmatprep.subr.mxu0 0.0
    %1016 = vmatpush1.msra.mxu0 0.0
    %1017 = vmatprep.subr.mxu0 0.0
    %1018 = vmatpush1.msra.mxu0 0.0
    %1019 = vmatprep.subr.mxu0 0.0
    %1020 = vmatpush1.msra.mxu0 0.0
    %1021 = vmatprep.subr.mxu0 0.0
    %1022 = vmatpush1.msra.mxu0 0.0
    %1023 = vmatprep.subr.mxu0 0.0
    %1024 = vmatpush1.msra.mxu0 0.0
    %1025 = vmatprep.subr.mxu0 0.0
    %1026 = vmatpush1.msra.mxu0 0.0
    %1027 = vmatprep.subr.mxu0 0.0
    %1028 = vmatpush1.msra.mxu0 0.0
    %1029 = vmatprep.subr.mxu0 0.0
    %1030 = vmatpush1.msra.mxu0 0.0
    %1031 = vmatprep.subr.mxu0 0.0
    %1032 = vmatpush1.msra.mxu0 0.0
    %1033 = vmatprep.subr.mxu0 0.0
    %1034 = vmatpush1.msra.mxu0 0.0
    %1035 = vmatprep.subr.mxu0 0.0
    %1036 = vmatpush1.msra.mxu0 0.0
    %1037 = vmatprep.mubr.f32.mxu0 0.0
    %1038 = vmatmul.mubr.f32.gmra.mrb[0].mxu0 %v962
    %v1039 = vpop.f32.mrb[0].mxu0
    %v1040 = vadd.f32 %v951, %v1039
    %v1041 = vpop.f32.mrb[0].mxu0
    %v1042 = vadd.f32 %v953, %v1041
    %1043 = vmatprep.mubr.f32.mxu0 0.0
    %1044 = vmatmul.mubr.f32.gmra.mrb[0].mxu0 %v965
    %v1045 = vpop.f32.mrb[0].mxu0
    %v1046 = vadd.f32 %v957, %v1045
    %v1047 = vpop.f32.mrb[0].mxu0
    %v1048 = vadd.f32 %v959, %v1047
    %1049 = vdwg.mxu0
    %v1050 = vld [vmem:[#allocation2 + $0x2] sm:$0xff]
    %v1051 = vld [vmem:[#allocation2 + $0xa] sm:$0x3]
    %s1052 = scalar_lea.vmem %s3, 352
    %v1053 = vld [vmem:[%s1052] sm:$0xff]
    %v1054 = vld [vmem:[%s1052 + $0x8] sm:$0xff]
    %v1055 = vld [vmem:[%s1052 + $0x10] sm:$0xff]
    %v1056 = vld [vmem:[%s1052 + $0x18] sm:$0xff]
    %v1057 = vld [vmem:[%s1052 + $0x20] sm:$0xff]
    %v1058 = vld [vmem:[%s1052 + $0x28] sm:$0xff]
    %v1059 = vld [vmem:[%s1052 + $0x30] sm:$0xff]
    %v1060 = vld [vmem:[%s1052 + $0x38] sm:$0xff]
    %v1061 = vld [vmem:[%s1052 + $0x40] sm:$0xff]
    %v1062 = vld [vmem:[%s1052 + $0x48] sm:$0xff]
    %v1063 = vld [vmem:[%s1052 + $0x50] sm:$0xff]
    %v1064 = vld [vmem:[%s1052 + $0x58] sm:$0xff]
    %v1065 = vld [vmem:[%s1052 + $0x60] sm:$0xff]
    %v1066 = vld [vmem:[%s1052 + $0x68] sm:$0xff]
    %v1067 = vld [vmem:[%s1052 + $0x70] sm:$0xff]
    %v1068 = vld [vmem:[%s1052 + $0x78] sm:$0xff]
    %v1069 = vld [vmem:[%s1052 + $0x80] sm:$0xff]
    %v1070 = vld [vmem:[%s1052 + $0x88] sm:$0xff]
    %v1071 = vld [vmem:[%s1052 + $0x90] sm:$0xff]
    %v1072 = vld [vmem:[%s1052 + $0x98] sm:$0xff]
    %v1073 = vld [vmem:[%s1052 + $0xa0] sm:$0xf]
    %v1074 = vld [vmem:[%s1052 + $0xa8] sm:$0xf]
    %v1076 = vsel %vm871, %v1050, 0
    %v1079 = vsel %vm871, %v1051, 0
    %v1082 = vsel %vm520, %v1073, 0
    %v1085 = vsel %vm520, %v1074, 0
    %1087 = vmatprep.subr.mxu0 %v1054
    %1088 = vmatpush1.msra.mxu0 %v1053
    %1089 = vmatprep.subr.mxu0 %v1056
    %1090 = vmatpush1.msra.mxu0 %v1055
    %1091 = vmatprep.subr.mxu0 %v1058
    %1092 = vmatpush1.msra.mxu0 %v1057
    %1093 = vmatprep.subr.mxu0 %v1060
    %1094 = vmatpush1.msra.mxu0 %v1059
    %1095 = vmatprep.subr.mxu0 %v1062
    %1096 = vmatpush1.msra.mxu0 %v1061
    %1097 = vmatprep.subr.mxu0 %v1064
    %1098 = vmatpush1.msra.mxu0 %v1063
    %1099 = vmatprep.subr.mxu0 %v1066
    %1100 = vmatpush1.msra.mxu0 %v1065
    %1101 = vmatprep.subr.mxu0 %v1068
    %1102 = vmatpush1.msra.mxu0 %v1067
    %1103 = vmatprep.subr.mxu0 %v1070
    %1104 = vmatpush1.msra.mxu0 %v1069
    %1105 = vmatprep.subr.mxu0 %v1072
    %1106 = vmatpush1.msra.mxu0 %v1071
    %1107 = vmatprep.subr.mxu0 %v1085
    %1108 = vmatpush1.msra.mxu0 %v1082
    %1109 = vmatprep.subr.mxu0 0.0
    %1110 = vmatpush1.msra.mxu0 0.0
    %1111 = vmatprep.subr.mxu0 0.0
    %1112 = vmatpush1.msra.mxu0 0.0
    %1113 = vmatprep.subr.mxu0 0.0
    %1114 = vmatpush1.msra.mxu0 0.0
    %1115 = vmatprep.subr.mxu0 0.0
    %1116 = vmatpush1.msra.mxu0 0.0
    %1117 = vmatprep.subr.mxu0 0.0
    %1118 = vmatpush1.msra.mxu0 0.0
    %1119 = vmatprep.subr.mxu0 0.0
    %1120 = vmatpush1.msra.mxu0 0.0
    %1121 = vmatprep.subr.mxu0 0.0
    %1122 = vmatpush1.msra.mxu0 0.0
    %1123 = vmatprep.subr.mxu0 0.0
    %1124 = vmatpush1.msra.mxu0 0.0
    %1125 = vmatprep.subr.mxu0 0.0
    %1126 = vmatpush1.msra.mxu0 0.0
    %1127 = vmatprep.subr.mxu0 0.0
    %1128 = vmatpush1.msra.mxu0 0.0
    %1129 = vmatprep.subr.mxu0 0.0
    %1130 = vmatpush1.msra.mxu0 0.0
    %1131 = vmatprep.subr.mxu0 0.0
    %1132 = vmatpush1.msra.mxu0 0.0
    %1133 = vmatprep.subr.mxu0 0.0
    %1134 = vmatpush1.msra.mxu0 0.0
    %1135 = vmatprep.subr.mxu0 0.0
    %1136 = vmatpush1.msra.mxu0 0.0
    %1137 = vmatprep.subr.mxu0 0.0
    %1138 = vmatpush1.msra.mxu0 0.0
    %1139 = vmatprep.subr.mxu0 0.0
    %1140 = vmatpush1.msra.mxu0 0.0
    %1141 = vmatprep.subr.mxu0 0.0
    %1142 = vmatpush1.msra.mxu0 0.0
    %1143 = vmatprep.subr.mxu0 0.0
    %1144 = vmatpush1.msra.mxu0 0.0
    %1145 = vmatprep.subr.mxu0 0.0
    %1146 = vmatpush1.msra.mxu0 0.0
    %1147 = vmatprep.subr.mxu0 0.0
    %1148 = vmatpush1.msra.mxu0 0.0
    %1149 = vmatprep.subr.mxu0 0.0
    %1150 = vmatpush1.msra.mxu0 0.0
    %1151 = vmatprep.mubr.f32.mxu0 0.0
    %1152 = vmatmul.mubr.f32.gmra.mrb[0].mxu0 %v1076
    %v1153 = vpop.f32.mrb[0].mxu0
    %v1154 = vadd.f32 0.0, %v1153
    %v1155 = vpop.f32.mrb[0].mxu0
    %v1156 = vadd.f32 0.0, %v1155
    %1157 = vmatprep.mubr.f32.mxu0 0.0
    %1158 = vmatmul.mubr.f32.gmra.mrb[0].mxu0 %v1079
    %v1159 = vpop.f32.mrb[0].mxu0
    %v1160 = vadd.f32 0.0, %v1159
    %v1161 = vpop.f32.mrb[0].mxu0
    %v1162 = vadd.f32 0.0, %v1161
    %1163 = vdwg.mxu0
    %v1164 = vadd.f32 %v1040, %v1154
    %v1165 = vadd.f32 %v1042, %v1156
    %v1166 = vadd.f32 %v1046, %v1160
    %v1167 = vadd.f32 %v1048, %v1162
    %v1168 = vld [vmem:[#allocation2 + $0x3] sm:$0xff]
    %v1169 = vld [vmem:[#allocation2 + $0xb] sm:$0x3]
    %s1170 = scalar_lea.vmem %s3, 528
    %v1171 = vld [vmem:[%s1170] sm:$0xff]
    %v1172 = vld [vmem:[%s1170 + $0x8] sm:$0xff]
    %v1173 = vld [vmem:[%s1170 + $0x10] sm:$0xff]
    %v1174 = vld [vmem:[%s1170 + $0x18] sm:$0xff]
    %v1175 = vld [vmem:[%s1170 + $0x20] sm:$0xff]
    %v1176 = vld [vmem:[%s1170 + $0x28] sm:$0xff]
    %v1177 = vld [vmem:[%s1170 + $0x30] sm:$0xff]
    %v1178 = vld [vmem:[%s1170 + $0x38] sm:$0xff]
    %v1179 = vld [vmem:[%s1170 + $0x40] sm:$0xff]
    %v1180 = vld [vmem:[%s1170 + $0x48] sm:$0xff]
    %v1181 = vld [vmem:[%s1170 + $0x50] sm:$0xff]
    %v1182 = vld [vmem:[%s1170 + $0x58] sm:$0xff]
    %v1183 = vld [vmem:[%s1170 + $0x60] sm:$0xff]
    %v1184 = vld [vmem:[%s1170 + $0x68] sm:$0xff]
    %v1185 = vld [vmem:[%s1170 + $0x70] sm:$0xff]
    %v1186 = vld [vmem:[%s1170 + $0x78] sm:$0xff]
    %v1187 = vld [vmem:[%s1170 + $0x80] sm:$0xff]
    %v1188 = vld [vmem:[%s1170 + $0x88] sm:$0xff]
    %v1189 = vld [vmem:[%s1170 + $0x90] sm:$0xff]
    %v1190 = vld [vmem:[%s1170 + $0x98] sm:$0xff]
    %v1191 = vld [vmem:[%s1170 + $0xa0] sm:$0xf]
    %v1192 = vld [vmem:[%s1170 + $0xa8] sm:$0xf]
    %v1194 = vsel %vm871, %v1168, 0
    %v1197 = vsel %vm871, %v1169, 0
    %v1200 = vsel %vm520, %v1191, 0
    %v1203 = vsel %vm520, %v1192, 0
    %1205 = vmatprep.subr.mxu0 %v1172
    %1206 = vmatpush1.msra.mxu0 %v1171
    %1207 = vmatprep.subr.mxu0 %v1174
    %1208 = vmatpush1.msra.mxu0 %v1173
    %1209 = vmatprep.subr.mxu0 %v1176
    %1210 = vmatpush1.msra.mxu0 %v1175
    %1211 = vmatprep.subr.mxu0 %v1178
    %1212 = vmatpush1.msra.mxu0 %v1177
    %1213 = vmatprep.subr.mxu0 %v1180
    %1214 = vmatpush1.msra.mxu0 %v1179
    %1215 = vmatprep.subr.mxu0 %v1182
    %1216 = vmatpush1.msra.mxu0 %v1181
    %1217 = vmatprep.subr.mxu0 %v1184
    %1218 = vmatpush1.msra.mxu0 %v1183
    %1219 = vmatprep.subr.mxu0 %v1186
    %1220 = vmatpush1.msra.mxu0 %v1185
    %1221 = vmatprep.subr.mxu0 %v1188
    %1222 = vmatpush1.msra.mxu0 %v1187
    %1223 = vmatprep.subr.mxu0 %v1190
    %1224 = vmatpush1.msra.mxu0 %v1189
    %1225 = vmatprep.subr.mxu0 %v1203
    %1226 = vmatpush1.msra.mxu0 %v1200
    %1227 = vmatprep.subr.mxu0 0.0
    %1228 = vmatpush1.msra.mxu0 0.0
    %1229 = vmatprep.subr.mxu0 0.0
    %1230 = vmatpush1.msra.mxu0 0.0
    %1231 = vmatprep.subr.mxu0 0.0
    %1232 = vmatpush1.msra.mxu0 0.0
    %1233 = vmatprep.subr.mxu0 0.0
    %1234 = vmatpush1.msra.mxu0 0.0
    %1235 = vmatprep.subr.mxu0 0.0
    %1236 = vmatpush1.msra.mxu0 0.0
    %1237 = vmatprep.subr.mxu0 0.0
    %1238 = vmatpush1.msra.mxu0 0.0
    %1239 = vmatprep.subr.mxu0 0.0
    %1240 = vmatpush1.msra.mxu0 0.0
    %1241 = vmatprep.subr.mxu0 0.0
    %1242 = vmatpush1.msra.mxu0 0.0
    %1243 = vmatprep.subr.mxu0 0.0
    %1244 = vmatpush1.msra.mxu0 0.0
    %1245 = vmatprep.subr.mxu0 0.0
    %1246 = vmatpush1.msra.mxu0 0.0
    %1247 = vmatprep.subr.mxu0 0.0
    %1248 = vmatpush1.msra.mxu0 0.0
    %1249 = vmatprep.subr.mxu0 0.0
    %1250 = vmatpush1.msra.mxu0 0.0
    %1251 = vmatprep.subr.mxu0 0.0
    %1252 = vmatpush1.msra.mxu0 0.0
    %1253 = vmatprep.subr.mxu0 0.0
    %1254 = vmatpush1.msra.mxu0 0.0
    %1255 = vmatprep.subr.mxu0 0.0
    %1256 = vmatpush1.msra.mxu0 0.0
    %1257 = vmatprep.subr.mxu0 0.0
    %1258 = vmatpush1.msra.mxu0 0.0
    %1259 = vmatprep.subr.mxu0 0.0
    %1260 = vmatpush1.msra.mxu0 0.0
    %1261 = vmatprep.subr.mxu0 0.0
    %1262 = vmatpush1.msra.mxu0 0.0
    %1263 = vmatprep.subr.mxu0 0.0
    %1264 = vmatpush1.msra.mxu0 0.0
    %1265 = vmatprep.subr.mxu0 0.0
    %1266 = vmatpush1.msra.mxu0 0.0
    %1267 = vmatprep.subr.mxu0 0.0
    %1268 = vmatpush1.msra.mxu0 0.0
    %1269 = vmatprep.mubr.f32.mxu0 0.0
    %1270 = vmatmul.mubr.f32.gmra.mrb[0].mxu0 %v1194
    %v1271 = vpop.f32.mrb[0].mxu0
    %v1272 = vadd.f32 0.0, %v1271
    %v1273 = vpop.f32.mrb[0].mxu0
    %v1274 = vadd.f32 0.0, %v1273
    %1275 = vmatprep.mubr.f32.mxu0 0.0
    %1276 = vmatmul.mubr.f32.gmra.mrb[0].mxu0 %v1197
    %v1277 = vpop.f32.mrb[0].mxu0
    %v1278 = vadd.f32 0.0, %v1277
    %v1279 = vpop.f32.mrb[0].mxu0
    %v1280 = vadd.f32 0.0, %v1279
    %1281 = vdwg.mxu0
    %v1282 = vadd.f32 %v1164, %v1272
    %v1283 = vadd.f32 %v1165, %v1274
    %v1284 = vadd.f32 %v1166, %v1278
    %v1285 = vadd.f32 %v1167, %v1280
    %v1286 = vld [vmem:[#allocation2 + $0x4] sm:$0xff]
    %v1287 = vld [vmem:[#allocation2 + $0xc] sm:$0x3]
    %s1288 = scalar_lea.vmem %s3, 704
    %v1289 = vld [vmem:[%s1288] sm:$0xff]
    %v1290 = vld [vmem:[%s1288 + $0x8] sm:$0xff]
    %v1291 = vld [vmem:[%s1288 + $0x10] sm:$0xff]
    %v1292 = vld [vmem:[%s1288 + $0x18] sm:$0xff]
    %v1293 = vld [vmem:[%s1288 + $0x20] sm:$0xff]
    %v1294 = vld [vmem:[%s1288 + $0x28] sm:$0xff]
    %v1295 = vld [vmem:[%s1288 + $0x30] sm:$0xff]
    %v1296 = vld [vmem:[%s1288 + $0x38] sm:$0xff]
    %v1297 = vld [vmem:[%s1288 + $0x40] sm:$0xff]
    %v1298 = vld [vmem:[%s1288 + $0x48] sm:$0xff]
    %v1299 = vld [vmem:[%s1288 + $0x50] sm:$0xff]
    %v1300 = vld [vmem:[%s1288 + $0x58] sm:$0xff]
    %v1301 = vld [vmem:[%s1288 + $0x60] sm:$0xff]
    %v1302 = vld [vmem:[%s1288 + $0x68] sm:$0xff]
    %v1303 = vld [vmem:[%s1288 + $0x70] sm:$0xff]
    %v1304 = vld [vmem:[%s1288 + $0x78] sm:$0xff]
    %v1305 = vld [vmem:[%s1288 + $0x80] sm:$0xff]
    %v1306 = vld [vmem:[%s1288 + $0x88] sm:$0xff]
    %v1307 = vld [vmem:[%s1288 + $0x90] sm:$0xff]
    %v1308 = vld [vmem:[%s1288 + $0x98] sm:$0xff]
    %v1309 = vld [vmem:[%s1288 + $0xa0] sm:$0xf]
    %v1310 = vld [vmem:[%s1288 + $0xa8] sm:$0xf]
    %v1312 = vsel %vm871, %v1286, 0
    %v1315 = vsel %vm871, %v1287, 0
    %v1318 = vsel %vm520, %v1309, 0
    %v1321 = vsel %vm520, %v1310, 0
    %1323 = vmatprep.subr.mxu0 %v1290
    %1324 = vmatpush1.msra.mxu0 %v1289
    %1325 = vmatprep.subr.mxu0 %v1292
    %1326 = vmatpush1.msra.mxu0 %v1291
    %1327 = vmatprep.subr.mxu0 %v1294
    %1328 = vmatpush1.msra.mxu0 %v1293
    %1329 = vmatprep.subr.mxu0 %v1296
    %1330 = vmatpush1.msra.mxu0 %v1295
    %1331 = vmatprep.subr.mxu0 %v1298
    %1332 = vmatpush1.msra.mxu0 %v1297
    %1333 = vmatprep.subr.mxu0 %v1300
    %1334 = vmatpush1.msra.mxu0 %v1299
    %1335 = vmatprep.subr.mxu0 %v1302
    %1336 = vmatpush1.msra.mxu0 %v1301
    %1337 = vmatprep.subr.mxu0 %v1304
    %1338 = vmatpush1.msra.mxu0 %v1303
    %1339 = vmatprep.subr.mxu0 %v1306
    %1340 = vmatpush1.msra.mxu0 %v1305
    %1341 = vmatprep.subr.mxu0 %v1308
    %1342 = vmatpush1.msra.mxu0 %v1307
    %1343 = vmatprep.subr.mxu0 %v1321
    %1344 = vmatpush1.msra.mxu0 %v1318
    %1345 = vmatprep.subr.mxu0 0.0
    %1346 = vmatpush1.msra.mxu0 0.0
    %1347 = vmatprep.subr.mxu0 0.0
    %1348 = vmatpush1.msra.mxu0 0.0
    %1349 = vmatprep.subr.mxu0 0.0
    %1350 = vmatpush1.msra.mxu0 0.0
    %1351 = vmatprep.subr.mxu0 0.0
    %1352 = vmatpush1.msra.mxu0 0.0
    %1353 = vmatprep.subr.mxu0 0.0
    %1354 = vmatpush1.msra.mxu0 0.0
    %1355 = vmatprep.subr.mxu0 0.0
    %1356 = vmatpush1.msra.mxu0 0.0
    %1357 = vmatprep.subr.mxu0 0.0
    %1358 = vmatpush1.msra.mxu0 0.0
    %1359 = vmatprep.subr.mxu0 0.0
    %1360 = vmatpush1.msra.mxu0 0.0
    %1361 = vmatprep.subr.mxu0 0.0
    %1362 = vmatpush1.msra.mxu0 0.0
    %1363 = vmatprep.subr.mxu0 0.0
    %1364 = vmatpush1.msra.mxu0 0.0
    %1365 = vmatprep.subr.mxu0 0.0
    %1366 = vmatpush1.msra.mxu0 0.0
    %1367 = vmatprep.subr.mxu0 0.0
    %1368 = vmatpush1.msra.mxu0 0.0
    %1369 = vmatprep.subr.mxu0 0.0
    %1370 = vmatpush1.msra.mxu0 0.0
    %1371 = vmatprep.subr.mxu0 0.0
    %1372 = vmatpush1.msra.mxu0 0.0
    %1373 = vmatprep.subr.mxu0 0.0
    %1374 = vmatpush1.msra.mxu0 0.0
    %1375 = vmatprep.subr.mxu0 0.0
    %1376 = vmatpush1.msra.mxu0 0.0
    %1377 = vmatprep.subr.mxu0 0.0
    %1378 = vmatpush1.msra.mxu0 0.0
    %1379 = vmatprep.subr.mxu0 0.0
    %1380 = vmatpush1.msra.mxu0 0.0
    %1381 = vmatprep.subr.mxu0 0.0
    %1382 = vmatpush1.msra.mxu0 0.0
    %1383 = vmatprep.subr.mxu0 0.0
    %1384 = vmatpush1.msra.mxu0 0.0
    %1385 = vmatprep.subr.mxu0 0.0
    %1386 = vmatpush1.msra.mxu0 0.0
    %1387 = vmatprep.mubr.f32.mxu0 0.0
    %1388 = vmatmul.mubr.f32.gmra.mrb[0].mxu0 %v1312
    %v1389 = vpop.f32.mrb[0].mxu0
    %v1390 = vadd.f32 0.0, %v1389
    %v1391 = vpop.f32.mrb[0].mxu0
    %v1392 = vadd.f32 0.0, %v1391
    %1393 = vmatprep.mubr.f32.mxu0 0.0
    %1394 = vmatmul.mubr.f32.gmra.mrb[0].mxu0 %v1315
    %v1395 = vpop.f32.mrb[0].mxu0
    %v1396 = vadd.f32 0.0, %v1395
    %v1397 = vpop.f32.mrb[0].mxu0
    %v1398 = vadd.f32 0.0, %v1397
    %1399 = vdwg.mxu0
    %v1400 = vadd.f32 %v1282, %v1390
    %v1401 = vadd.f32 %v1283, %v1392
    %v1402 = vadd.f32 %v1284, %v1396
    %v1403 = vadd.f32 %v1285, %v1398
    %v1404 = vld [vmem:[%s6] sm:$0x1]
    %v1407 = vrot.slane %v1400, 1
    %v1408 = vrot.slane %v1401, 1
    %v1411 = vmax.f32 %v1400, %v1407
    %v1412 = vmax.f32 %v1401, %v1408
    %1415 = vrot.lane.b32.xlu0 %v1411, 48
    %v1416 = vpop.permute.xlu0 %1415
    %1417 = vrot.lane.b32.xlu0 %v1412, 48
    %v1418 = vpop.permute.xlu0 %1417
    %vm1419 = vcmask 392192
    %v1420 = vsel %vm1419, %v1416, %v1418
    %v1422 = vmax.f32 %v1411, %v1420
    %v1423 = vld [vmem:[%s4] sm:$0x1]
    %v1424 = vadd.f32 %v1422, %v1423
    %v1425 = vmax.f32 %v1424, 0.0
    %v1426 = vld [vmem:[%s5] sm:$0xff]
    %v1427 = vld [vmem:[%s5 + $0x8] sm:$0xff]
    %v1428 = vld [vmem:[%s5 + $0x10] sm:$0xff]
    %v1429 = vld [vmem:[%s5 + $0x18] sm:$0xff]
    %v1430 = vld [vmem:[%s5 + $0x20] sm:$0xff]
    %v1431 = vld [vmem:[%s5 + $0x28] sm:$0xff]
    %v1432 = vld [vmem:[%s5 + $0x30] sm:$0xff]
    %v1433 = vld [vmem:[%s5 + $0x38] sm:$0xff]
    %v1434 = vld [vmem:[%s5 + $0x40] sm:$0xff]
    %v1435 = vld [vmem:[%s5 + $0x48] sm:$0xff]
    %vm1436 = vcmask 654336
    %v1438 = vsel %vm1436, %v1425, 0
    %1440 = vmatprep.subr.mxu0 0.0
    %1441 = vmatpush1.msra.mxu0 %v1426
    %1442 = vmatprep.subr.mxu0 0.0
    %1443 = vmatpush1.msra.mxu0 %v1427
    %1444 = vmatprep.subr.mxu0 0.0
    %1445 = vmatpush1.msra.mxu0 %v1428
    %1446 = vmatprep.subr.mxu0 0.0
    %1447 = vmatpush1.msra.mxu0 %v1429
    %1448 = vmatprep.subr.mxu0 0.0
    %1449 = vmatpush1.msra.mxu0 %v1430
    %1450 = vmatprep.subr.mxu0 0.0
    %1451 = vmatpush1.msra.mxu0 %v1431
    %1452 = vmatprep.subr.mxu0 0.0
    %1453 = vmatpush1.msra.mxu0 %v1432
    %1454 = vmatprep.subr.mxu0 0.0
    %1455 = vmatpush1.msra.mxu0 %v1433
    %1456 = vmatprep.subr.mxu0 0.0
    %1457 = vmatpush1.msra.mxu0 %v1434
    %1458 = vmatprep.subr.mxu0 0.0
    %1459 = vmatpush1.msra.mxu0 %v1435
    %1460 = vmatprep.subr.mxu0 0.0
    %1461 = vmatpush1.msra.mxu0 0.0
    %1462 = vmatprep.subr.mxu0 0.0
    %1463 = vmatpush1.msra.mxu0 0.0
    %1464 = vmatprep.subr.mxu0 0.0
    %1465 = vmatpush1.msra.mxu0 0.0
    %1466 = vmatprep.subr.mxu0 0.0
    %1467 = vmatpush1.msra.mxu0 0.0
    %1468 = vmatprep.subr.mxu0 0.0
    %1469 = vmatpush1.msra.mxu0 0.0
    %1470 = vmatprep.subr.mxu0 0.0
    %1471 = vmatpush1.msra.mxu0 0.0
    %1472 = vmatprep.subr.mxu0 0.0
    %1473 = vmatpush1.msra.mxu0 0.0
    %1474 = vmatprep.subr.mxu0 0.0
    %1475 = vmatpush1.msra.mxu0 0.0
    %1476 = vmatprep.subr.mxu0 0.0
    %1477 = vmatpush1.msra.mxu0 0.0
    %1478 = vmatprep.subr.mxu0 0.0
    %1479 = vmatpush1.msra.mxu0 0.0
    %1480 = vmatprep.subr.mxu0 0.0
    %1481 = vmatpush1.msra.mxu0 0.0
    %1482 = vmatprep.subr.mxu0 0.0
    %1483 = vmatpush1.msra.mxu0 0.0
    %1484 = vmatprep.subr.mxu0 0.0
    %1485 = vmatpush1.msra.mxu0 0.0
    %1486 = vmatprep.subr.mxu0 0.0
    %1487 = vmatpush1.msra.mxu0 0.0
    %1488 = vmatprep.subr.mxu0 0.0
    %1489 = vmatpush1.msra.mxu0 0.0
    %1490 = vmatprep.subr.mxu0 0.0
    %1491 = vmatpush1.msra.mxu0 0.0
    %1492 = vmatprep.subr.mxu0 0.0
    %1493 = vmatpush1.msra.mxu0 0.0
    %1494 = vmatprep.subr.mxu0 0.0
    %1495 = vmatpush1.msra.mxu0 0.0
    %1496 = vmatprep.subr.mxu0 0.0
    %1497 = vmatpush1.msra.mxu0 0.0
    %1498 = vmatprep.subr.mxu0 0.0
    %1499 = vmatpush1.msra.mxu0 0.0
    %1500 = vmatprep.subr.mxu0 0.0
    %1501 = vmatpush1.msra.mxu0 0.0
    %1502 = vmatprep.subr.mxu0 0.0
    %1503 = vmatpush1.msra.mxu0 0.0
    %1504 = vmatprep.mubr.f32.mxu0 0.0
    %1505 = vmatmul.mubr.f32.gmra.mrb[0].mxu0 %v1438
    %v1506 = vpop.f32.mrb[0].mxu0
    %v1507 = vadd.f32 0.0, %v1506
    %v1508 = vpop.f32.mrb[0].mxu0
    %1509 = vdwg.mxu0
    %v1510 = vadd.f32 %v1404, %v1507
    %v1512 = vlaneseq
    %v1513 = vshrl.u32 %v1512, 7
    %v1514 = vsub.s32 0, %v1513
    %v1515 = vrot.slane %v1423, %v1514
    %v1517 = vadd.f32 %v1422, %v1515
    %v1518 = vmax.f32 %v1517, 0.0
    %s1519 = scalar_lea.vmem %s5, 80
    %v1520 = vld [vmem:[%s1519] sm:$0xff]
    %v1521 = vld [vmem:[%s1519 + $0x8] sm:$0xff]
    %v1522 = vld [vmem:[%s1519 + $0x10] sm:$0xff]
    %v1523 = vld [vmem:[%s1519 + $0x18] sm:$0xff]
    %v1524 = vld [vmem:[%s1519 + $0x20] sm:$0xff]
    %v1525 = vld [vmem:[%s1519 + $0x28] sm:$0xff]
    %v1526 = vld [vmem:[%s1519 + $0x30] sm:$0xff]
    %v1527 = vld [vmem:[%s1519 + $0x38] sm:$0xff]
    %v1528 = vld [vmem:[%s1519 + $0x40] sm:$0xff]
    %v1529 = vld [vmem:[%s1519 + $0x48] sm:$0xff]
    %v1531 = vrot.slane %v1518, 2
    %v1532 = vsel %vm1436, %v1531, 0
    %1534 = vmatprep.subr.mxu0 0.0
    %1535 = vmatpush1.msra.mxu0 %v1520
    %1536 = vmatprep.subr.mxu0 0.0
    %1537 = vmatpush1.msra.mxu0 %v1521
    %1538 = vmatprep.subr.mxu0 0.0
    %1539 = vmatpush1.msra.mxu0 %v1522
    %1540 = vmatprep.subr.mxu0 0.0
    %1541 = vmatpush1.msra.mxu0 %v1523
    %1542 = vmatprep.subr.mxu0 0.0
    %1543 = vmatpush1.msra.mxu0 %v1524
    %1544 = vmatprep.subr.mxu0 0.0
    %1545 = vmatpush1.msra.mxu0 %v1525
    %1546 = vmatprep.subr.mxu0 0.0
    %1547 = vmatpush1.msra.mxu0 %v1526
    %1548 = vmatprep.subr.mxu0 0.0
    %1549 = vmatpush1.msra.mxu0 %v1527
    %1550 = vmatprep.subr.mxu0 0.0
    %1551 = vmatpush1.msra.mxu0 %v1528
    %1552 = vmatprep.subr.mxu0 0.0
    %1553 = vmatpush1.msra.mxu0 %v1529
    %1554 = vmatprep.subr.mxu0 0.0
    %1555 = vmatpush1.msra.mxu0 0.0
    %1556 = vmatprep.subr.mxu0 0.0
    %1557 = vmatpush1.msra.mxu0 0.0
    %1558 = vmatprep.subr.mxu0 0.0
    %1559 = vmatpush1.msra.mxu0 0.0
    %1560 = vmatprep.subr.mxu0 0.0
    %1561 = vmatpush1.msra.mxu0 0.0
    %1562 = vmatprep.subr.mxu0 0.0
    %1563 = vmatpush1.msra.mxu0 0.0
    %1564 = vmatprep.subr.mxu0 0.0
    %1565 = vmatpush1.msra.mxu0 0.0
    %1566 = vmatprep.subr.mxu0 0.0
    %1567 = vmatpush1.msra.mxu0 0.0
    %1568 = vmatprep.subr.mxu0 0.0
    %1569 = vmatpush1.msra.mxu0 0.0
    %1570 = vmatprep.subr.mxu0 0.0
    %1571 = vmatpush1.msra.mxu0 0.0
    %1572 = vmatprep.subr.mxu0 0.0
    %1573 = vmatpush1.msra.mxu0 0.0
    %1574 = vmatprep.subr.mxu0 0.0
    %1575 = vmatpush1.msra.mxu0 0.0
    %1576 = vmatprep.subr.mxu0 0.0
    %1577 = vmatpush1.msra.mxu0 0.0
    %1578 = vmatprep.subr.mxu0 0.0
    %1579 = vmatpush1.msra.mxu0 0.0
    %1580 = vmatprep.subr.mxu0 0.0
    %1581 = vmatpush1.msra.mxu0 0.0
    %1582 = vmatprep.subr.mxu0 0.0
    %1583 = vmatpush1.msra.mxu0 0.0
    %1584 = vmatprep.subr.mxu0 0.0
    %1585 = vmatpush1.msra.mxu0 0.0
    %1586 = vmatprep.subr.mxu0 0.0
    %1587 = vmatpush1.msra.mxu0 0.0
    %1588 = vmatprep.subr.mxu0 0.0
    %1589 = vmatpush1.msra.mxu0 0.0
    %1590 = vmatprep.subr.mxu0 0.0
    %1591 = vmatpush1.msra.mxu0 0.0
    %1592 = vmatprep.subr.mxu0 0.0
    %1593 = vmatpush1.msra.mxu0 0.0
    %1594 = vmatprep.subr.mxu0 0.0
    %1595 = vmatpush1.msra.mxu0 0.0
    %1596 = vmatprep.subr.mxu0 0.0
    %1597 = vmatpush1.msra.mxu0 0.0
    %1598 = vmatprep.mubr.f32.mxu0 0.0
    %1599 = vmatmul.mubr.f32.gmra.mrb[0].mxu0 %v1532
    %v1600 = vpop.f32.mrb[0].mxu0
    %v1601 = vadd.f32 0.0, %v1600
    %v1602 = vpop.f32.mrb[0].mxu0
    %1603 = vdwg.mxu0
    %v1604 = vadd.f32 %v1510, %v1601
    %s1605 = scalar_lea.vmem %s5, 160
    %v1606 = vld [vmem:[%s1605] sm:$0xff]
    %v1607 = vld [vmem:[%s1605 + $0x8] sm:$0xff]
    %v1608 = vld [vmem:[%s1605 + $0x10] sm:$0xff]
    %v1609 = vld [vmem:[%s1605 + $0x18] sm:$0xff]
    %v1610 = vld [vmem:[%s1605 + $0x20] sm:$0xff]
    %v1611 = vld [vmem:[%s1605 + $0x28] sm:$0xff]
    %v1612 = vld [vmem:[%s1605 + $0x30] sm:$0xff]
    %v1613 = vld [vmem:[%s1605 + $0x38] sm:$0xff]
    %v1614 = vld [vmem:[%s1605 + $0x40] sm:$0xff]
    %v1615 = vld [vmem:[%s1605 + $0x48] sm:$0xff]
    %v1616 = vrot.slane %v1518, 4
    %v1617 = vsel %vm1436, %v1616, 0
    %1619 = vmatprep.subr.mxu0 0.0
    %1620 = vmatpush1.msra.mxu0 %v1606
    %1621 = vmatprep.subr.mxu0 0.0
    %1622 = vmatpush1.msra.mxu0 %v1607
    %1623 = vmatprep.subr.mxu0 0.0
    %1624 = vmatpush1.msra.mxu0 %v1608
    %1625 = vmatprep.subr.mxu0 0.0
    %1626 = vmatpush1.msra.mxu0 %v1609
    %1627 = vmatprep.subr.mxu0 0.0
    %1628 = vmatpush1.msra.mxu0 %v1610
    %1629 = vmatprep.subr.mxu0 0.0
    %1630 = vmatpush1.msra.mxu0 %v1611
    %1631 = vmatprep.subr.mxu0 0.0
    %1632 = vmatpush1.msra.mxu0 %v1612
    %1633 = vmatprep.subr.mxu0 0.0
    %1634 = vmatpush1.msra.mxu0 %v1613
    %1635 = vmatprep.subr.mxu0 0.0
    %1636 = vmatpush1.msra.mxu0 %v1614
    %1637 = vmatprep.subr.mxu0 0.0
    %1638 = vmatpush1.msra.mxu0 %v1615
    %1639 = vmatprep.subr.mxu0 0.0
    %1640 = vmatpush1.msra.mxu0 0.0
    %1641 = vmatprep.subr.mxu0 0.0
    %1642 = vmatpush1.msra.mxu0 0.0
    %1643 = vmatprep.subr.mxu0 0.0
    %1644 = vmatpush1.msra.mxu0 0.0
    %1645 = vmatprep.subr.mxu0 0.0
    %1646 = vmatpush1.msra.mxu0 0.0
    %1647 = vmatprep.subr.mxu0 0.0
    %1648 = vmatpush1.msra.mxu0 0.0
    %1649 = vmatprep.subr.mxu0 0.0
    %1650 = vmatpush1.msra.mxu0 0.0
    %1651 = vmatprep.subr.mxu0 0.0
    %1652 = vmatpush1.msra.mxu0 0.0
    %1653 = vmatprep.subr.mxu0 0.0
    %1654 = vmatpush1.msra.mxu0 0.0
    %1655 = vmatprep.subr.mxu0 0.0
    %1656 = vmatpush1.msra.mxu0 0.0
    %1657 = vmatprep.subr.mxu0 0.0
    %1658 = vmatpush1.msra.mxu0 0.0
    %1659 = vmatprep.subr.mxu0 0.0
    %1660 = vmatpush1.msra.mxu0 0.0
    %1661 = vmatprep.subr.mxu0 0.0
    %1662 = vmatpush1.msra.mxu0 0.0
    %1663 = vmatprep.subr.mxu0 0.0
    %1664 = vmatpush1.msra.mxu0 0.0
    %1665 = vmatprep.subr.mxu0 0.0
    %1666 = vmatpush1.msra.mxu0 0.0
    %1667 = vmatprep.subr.mxu0 0.0
    %1668 = vmatpush1.msra.mxu0 0.0
    %1669 = vmatprep.subr.mxu0 0.0
    %1670 = vmatpush1.msra.mxu0 0.0
    %1671 = vmatprep.subr.mxu0 0.0
    %1672 = vmatpush1.msra.mxu0 0.0
    %1673 = vmatprep.subr.mxu0 0.0
    %1674 = vmatpush1.msra.mxu0 0.0
    %1675 = vmatprep.subr.mxu0 0.0
    %1676 = vmatpush1.msra.mxu0 0.0
    %1677 = vmatprep.subr.mxu0 0.0
    %1678 = vmatpush1.msra.mxu0 0.0
    %1679 = vmatprep.subr.mxu0 0.0
    %1680 = vmatpush1.msra.mxu0 0.0
    %1681 = vmatprep.subr.mxu0 0.0
    %1682 = vmatpush1.msra.mxu0 0.0
    %1683 = vmatprep.mubr.f32.mxu0 0.0
    %1684 = vmatmul.mubr.f32.gmra.mrb[0].mxu0 %v1617
    %v1685 = vpop.f32.mrb[0].mxu0
    %v1686 = vadd.f32 0.0, %v1685
    %v1687 = vpop.f32.mrb[0].mxu0
    %1688 = vdwg.mxu0
    %v1689 = vadd.f32 %v1604, %v1686
    %s1690 = scalar_lea.vmem %s5, 240
    %v1691 = vld [vmem:[%s1690] sm:$0xff]
    %v1692 = vld [vmem:[%s1690 + $0x8] sm:$0xff]
    %v1693 = vld [vmem:[%s1690 + $0x10] sm:$0xff]
    %v1694 = vld [vmem:[%s1690 + $0x18] sm:$0xff]
    %v1695 = vld [vmem:[%s1690 + $0x20] sm:$0xff]
    %v1696 = vld [vmem:[%s1690 + $0x28] sm:$0xff]
    %v1697 = vld [vmem:[%s1690 + $0x30] sm:$0xff]
    %v1698 = vld [vmem:[%s1690 + $0x38] sm:$0xff]
    %v1699 = vld [vmem:[%s1690 + $0x40] sm:$0xff]
    %v1700 = vld [vmem:[%s1690 + $0x48] sm:$0xff]
    %v1701 = vrot.slane %v1518, 6
    %v1702 = vsel %vm1436, %v1701, 0
    %1704 = vmatprep.subr.mxu0 0.0
    %1705 = vmatpush1.msra.mxu0 %v1691
    %1706 = vmatprep.subr.mxu0 0.0
    %1707 = vmatpush1.msra.mxu0 %v1692
    %1708 = vmatprep.subr.mxu0 0.0
    %1709 = vmatpush1.msra.mxu0 %v1693
    %1710 = vmatprep.subr.mxu0 0.0
    %1711 = vmatpush1.msra.mxu0 %v1694
    %1712 = vmatprep.subr.mxu0 0.0
    %1713 = vmatpush1.msra.mxu0 %v1695
    %1714 = vmatprep.subr.mxu0 0.0
    %1715 = vmatpush1.msra.mxu0 %v1696
    %1716 = vmatprep.subr.mxu0 0.0
    %1717 = vmatpush1.msra.mxu0 %v1697
    %1718 = vmatprep.subr.mxu0 0.0
    %1719 = vmatpush1.msra.mxu0 %v1698
    %1720 = vmatprep.subr.mxu0 0.0
    %1721 = vmatpush1.msra.mxu0 %v1699
    %1722 = vmatprep.subr.mxu0 0.0
    %1723 = vmatpush1.msra.mxu0 %v1700
    %1724 = vmatprep.subr.mxu0 0.0
    %1725 = vmatpush1.msra.mxu0 0.0
    %1726 = vmatprep.subr.mxu0 0.0
    %1727 = vmatpush1.msra.mxu0 0.0
    %1728 = vmatprep.subr.mxu0 0.0
    %1729 = vmatpush1.msra.mxu0 0.0
    %1730 = vmatprep.subr.mxu0 0.0
    %1731 = vmatpush1.msra.mxu0 0.0
    %1732 = vmatprep.subr.mxu0 0.0
    %1733 = vmatpush1.msra.mxu0 0.0
    %1734 = vmatprep.subr.mxu0 0.0
    %1735 = vmatpush1.msra.mxu0 0.0
    %1736 = vmatprep.subr.mxu0 0.0
    %1737 = vmatpush1.msra.mxu0 0.0
    %1738 = vmatprep.subr.mxu0 0.0
    %1739 = vmatpush1.msra.mxu0 0.0
    %1740 = vmatprep.subr.mxu0 0.0
    %1741 = vmatpush1.msra.mxu0 0.0
    %1742 = vmatprep.subr.mxu0 0.0
    %1743 = vmatpush1.msra.mxu0 0.0
    %1744 = vmatprep.subr.mxu0 0.0
    %1745 = vmatpush1.msra.mxu0 0.0
    %1746 = vmatprep.subr.mxu0 0.0
    %1747 = vmatpush1.msra.mxu0 0.0
    %1748 = vmatprep.subr.mxu0 0.0
    %1749 = vmatpush1.msra.mxu0 0.0
    %1750 = vmatprep.subr.mxu0 0.0
    %1751 = vmatpush1.msra.mxu0 0.0
    %1752 = vmatprep.subr.mxu0 0.0
    %1753 = vmatpush1.msra.mxu0 0.0
    %1754 = vmatprep.subr.mxu0 0.0
    %1755 = vmatpush1.msra.mxu0 0.0
    %1756 = vmatprep.subr.mxu0 0.0
    %1757 = vmatpush1.msra.mxu0 0.0
    %1758 = vmatprep.subr.mxu0 0.0
    %1759 = vmatpush1.msra.mxu0 0.0
    %1760 = vmatprep.subr.mxu0 0.0
    %1761 = vmatpush1.msra.mxu0 0.0
    %1762 = vmatprep.subr.mxu0 0.0
    %1763 = vmatpush1.msra.mxu0 0.0
    %1764 = vmatprep.subr.mxu0 0.0
    %1765 = vmatpush1.msra.mxu0 0.0
    %1766 = vmatprep.subr.mxu0 0.0
    %1767 = vmatpush1.msra.mxu0 0.0
    %1768 = vmatprep.mubr.f32.mxu0 0.0
    %1769 = vmatmul.mubr.f32.gmra.mrb[0].mxu0 %v1702
    %v1770 = vpop.f32.mrb[0].mxu0
    %v1771 = vadd.f32 0.0, %v1770
    %v1772 = vpop.f32.mrb[0].mxu0
    %1773 = vdwg.mxu0
    %v1774 = vadd.f32 %v1689, %v1771
    %v1777 = vrot.slane %v1402, 1
    %v1778 = vrot.slane %v1403, 1
    %v1781 = vmax.f32 %v1402, %v1777
    %v1782 = vmax.f32 %v1403, %v1778
    %1785 = vrot.lane.b32.xlu0 %v1781, 48
    %v1786 = vpop.permute.xlu0 %1785
    %1787 = vrot.lane.b32.xlu0 %v1782, 48
    %v1788 = vpop.permute.xlu0 %1787
    %v1789 = vsel %vm1419, %v1786, %v1788
    %v1791 = vmax.f32 %v1781, %v1789
    %v1792 = vadd.f32 %v1791, %v1423
    %v1793 = vmax.f32 %v1792, 0.0
    %s1794 = scalar_lea.vmem %s5, 320
    %v1795 = vld [vmem:[%s1794] sm:$0xff]
    %v1796 = vld [vmem:[%s1794 + $0x8] sm:$0xff]
    %v1797 = vld [vmem:[%s1794 + $0x10] sm:$0xff]
    %v1798 = vld [vmem:[%s1794 + $0x18] sm:$0xff]
    %v1799 = vld [vmem:[%s1794 + $0x20] sm:$0xff]
    %v1800 = vld [vmem:[%s1794 + $0x28] sm:$0xff]
    %v1801 = vld [vmem:[%s1794 + $0x30] sm:$0xff]
    %v1802 = vld [vmem:[%s1794 + $0x38] sm:$0xff]
    %v1803 = vld [vmem:[%s1794 + $0x40] sm:$0xff]
    %v1804 = vld [vmem:[%s1794 + $0x48] sm:$0xff]
    %v1806 = vsel %vm1436, %v1793, 0
    %1808 = vmatprep.subr.mxu0 0.0
    %1809 = vmatpush1.msra.mxu0 %v1795
    %1810 = vmatprep.subr.mxu0 0.0
    %1811 = vmatpush1.msra.mxu0 %v1796
    %1812 = vmatprep.subr.mxu0 0.0
    %1813 = vmatpush1.msra.mxu0 %v1797
    %1814 = vmatprep.subr.mxu0 0.0
    %1815 = vmatpush1.msra.mxu0 %v1798
    %1816 = vmatprep.subr.mxu0 0.0
    %1817 = vmatpush1.msra.mxu0 %v1799
    %1818 = vmatprep.subr.mxu0 0.0
    %1819 = vmatpush1.msra.mxu0 %v1800
    %1820 = vmatprep.subr.mxu0 0.0
    %1821 = vmatpush1.msra.mxu0 %v1801
    %1822 = vmatprep.subr.mxu0 0.0
    %1823 = vmatpush1.msra.mxu0 %v1802
    %1824 = vmatprep.subr.mxu0 0.0
    %1825 = vmatpush1.msra.mxu0 %v1803
    %1826 = vmatprep.subr.mxu0 0.0
    %1827 = vmatpush1.msra.mxu0 %v1804
    %1828 = vmatprep.subr.mxu0 0.0
    %1829 = vmatpush1.msra.mxu0 0.0
    %1830 = vmatprep.subr.mxu0 0.0
    %1831 = vmatpush1.msra.mxu0 0.0
    %1832 = vmatprep.subr.mxu0 0.0
    %1833 = vmatpush1.msra.mxu0 0.0
    %1834 = vmatprep.subr.mxu0 0.0
    %1835 = vmatpush1.msra.mxu0 0.0
    %1836 = vmatprep.subr.mxu0 0.0
    %1837 = vmatpush1.msra.mxu0 0.0
    %1838 = vmatprep.subr.mxu0 0.0
    %1839 = vmatpush1.msra.mxu0 0.0
    %1840 = vmatprep.subr.mxu0 0.0
    %1841 = vmatpush1.msra.mxu0 0.0
    %1842 = vmatprep.subr.mxu0 0.0
    %1843 = vmatpush1.msra.mxu0 0.0
    %1844 = vmatprep.subr.mxu0 0.0
    %1845 = vmatpush1.msra.mxu0 0.0
    %1846 = vmatprep.subr.mxu0 0.0
    %1847 = vmatpush1.msra.mxu0 0.0
    %1848 = vmatprep.subr.mxu0 0.0
    %1849 = vmatpush1.msra.mxu0 0.0
    %1850 = vmatprep.subr.mxu0 0.0
    %1851 = vmatpush1.msra.mxu0 0.0
    %1852 = vmatprep.subr.mxu0 0.0
    %1853 = vmatpush1.msra.mxu0 0.0
    %1854 = vmatprep.subr.mxu0 0.0
    %1855 = vmatpush1.msra.mxu0 0.0
    %1856 = vmatprep.subr.mxu0 0.0
    %1857 = vmatpush1.msra.mxu0 0.0
    %1858 = vmatprep.subr.mxu0 0.0
    %1859 = vmatpush1.msra.mxu0 0.0
    %1860 = vmatprep.subr.mxu0 0.0
    %1861 = vmatpush1.msra.mxu0 0.0
    %1862 = vmatprep.subr.mxu0 0.0
    %1863 = vmatpush1.msra.mxu0 0.0
    %1864 = vmatprep.subr.mxu0 0.0
    %1865 = vmatpush1.msra.mxu0 0.0
    %1866 = vmatprep.subr.mxu0 0.0
    %1867 = vmatpush1.msra.mxu0 0.0
    %1868 = vmatprep.subr.mxu0 0.0
    %1869 = vmatpush1.msra.mxu0 0.0
    %1870 = vmatprep.subr.mxu0 0.0
    %1871 = vmatpush1.msra.mxu0 0.0
    %1872 = vmatprep.mubr.f32.mxu0 0.0
    %1873 = vmatmul.mubr.f32.gmra.mrb[0].mxu0 %v1806
    %v1874 = vpop.f32.mrb[0].mxu0
    %v1875 = vadd.f32 0.0, %v1874
    %v1876 = vpop.f32.mrb[0].mxu0
    %1877 = vdwg.mxu0
    %v1878 = vadd.f32 %v1774, %v1875
    %v1879 = vmax.f32 %v1878, 0.0
    %v1880 = vld [vmem:[%s7] sm:$0xff]
    %v1881 = vld [vmem:[%s7 + $0x8] sm:$0xff]
    %v1882 = vld [vmem:[%s7 + $0x10] sm:$0xff]
    %v1883 = vld [vmem:[%s7 + $0x18] sm:$0xff]
    %v1884 = vld [vmem:[%s7 + $0x20] sm:$0xff]
    %v1885 = vld [vmem:[%s7 + $0x28] sm:$0xff]
    %v1886 = vld [vmem:[%s7 + $0x30] sm:$0xff]
    %v1887 = vld [vmem:[%s7 + $0x38] sm:$0xff]
    %v1888 = vld [vmem:[%s7 + $0x40] sm:$0xff]
    %v1889 = vld [vmem:[%s7 + $0x48] sm:$0xff]
    %v1890 = vld [vmem:[%s7 + $0x50] sm:$0xff]
    %v1891 = vld [vmem:[%s7 + $0x58] sm:$0xff]
    %v1892 = vld [vmem:[%s7 + $0x60] sm:$0xff]
    %v1893 = vld [vmem:[%s7 + $0x68] sm:$0xff]
    %v1894 = vld [vmem:[%s7 + $0x70] sm:$0xff]
    %v1895 = vld [vmem:[%s8] sm:$0x1]
    %vm1896 = vcmask 982016
    %v1898 = vsel %vm1896, %v1879, 0
    %1900 = vmatprep.subr.mxu0 0.0
    %1901 = vmatpush1.msra.mxu0 %v1880
    %1902 = vmatprep.subr.mxu0 0.0
    %1903 = vmatpush1.msra.mxu0 %v1881
    %1904 = vmatprep.subr.mxu0 0.0
    %1905 = vmatpush1.msra.mxu0 %v1882
    %1906 = vmatprep.subr.mxu0 0.0
    %1907 = vmatpush1.msra.mxu0 %v1883
    %1908 = vmatprep.subr.mxu0 0.0
    %1909 = vmatpush1.msra.mxu0 %v1884
    %1910 = vmatprep.subr.mxu0 0.0
    %1911 = vmatpush1.msra.mxu0 %v1885
    %1912 = vmatprep.subr.mxu0 0.0
    %1913 = vmatpush1.msra.mxu0 %v1886
    %1914 = vmatprep.subr.mxu0 0.0
    %1915 = vmatpush1.msra.mxu0 %v1887
    %1916 = vmatprep.subr.mxu0 0.0
    %1917 = vmatpush1.msra.mxu0 %v1888
    %1918 = vmatprep.subr.mxu0 0.0
    %1919 = vmatpush1.msra.mxu0 %v1889
    %1920 = vmatprep.subr.mxu0 0.0
    %1921 = vmatpush1.msra.mxu0 %v1890
    %1922 = vmatprep.subr.mxu0 0.0
    %1923 = vmatpush1.msra.mxu0 %v1891
    %1924 = vmatprep.subr.mxu0 0.0
    %1925 = vmatpush1.msra.mxu0 %v1892
    %1926 = vmatprep.subr.mxu0 0.0
    %1927 = vmatpush1.msra.mxu0 %v1893
    %1928 = vmatprep.subr.mxu0 0.0
    %1929 = vmatpush1.msra.mxu0 %v1894
    %1930 = vmatprep.subr.mxu0 0.0
    %1931 = vmatpush1.msra.mxu0 0.0
    %1932 = vmatprep.subr.mxu0 0.0
    %1933 = vmatpush1.msra.mxu0 0.0
    %1934 = vmatprep.subr.mxu0 0.0
    %1935 = vmatpush1.msra.mxu0 0.0
    %1936 = vmatprep.subr.mxu0 0.0
    %1937 = vmatpush1.msra.mxu0 0.0
    %1938 = vmatprep.subr.mxu0 0.0
    %1939 = vmatpush1.msra.mxu0 0.0
    %1940 = vmatprep.subr.mxu0 0.0
    %1941 = vmatpush1.msra.mxu0 0.0
    %1942 = vmatprep.subr.mxu0 0.0
    %1943 = vmatpush1.msra.mxu0 0.0
    %1944 = vmatprep.subr.mxu0 0.0
    %1945 = vmatpush1.msra.mxu0 0.0
    %1946 = vmatprep.subr.mxu0 0.0
    %1947 = vmatpush1.msra.mxu0 0.0
    %1948 = vmatprep.subr.mxu0 0.0
    %1949 = vmatpush1.msra.mxu0 0.0
    %1950 = vmatprep.subr.mxu0 0.0
    %1951 = vmatpush1.msra.mxu0 0.0
    %1952 = vmatprep.subr.mxu0 0.0
    %1953 = vmatpush1.msra.mxu0 0.0
    %1954 = vmatprep.subr.mxu0 0.0
    %1955 = vmatpush1.msra.mxu0 0.0
    %1956 = vmatprep.subr.mxu0 0.0
    %1957 = vmatpush1.msra.mxu0 0.0
    %1958 = vmatprep.subr.mxu0 0.0
    %1959 = vmatpush1.msra.mxu0 0.0
    %1960 = vmatprep.subr.mxu0 0.0
    %1961 = vmatpush1.msra.mxu0 0.0
    %1962 = vmatprep.subr.mxu0 0.0
    %1963 = vmatpush1.msra.mxu0 0.0
    %1964 = vmatprep.mubr.f32.mxu0 0.0
    %1965 = vmatmul.mubr.f32.gmra.mrb[0].mxu0 %v1898
    %v1966 = vpop.f32.mrb[0].mxu0
    %v1967 = vadd.f32 %v1895, %v1966
    %v1968 = vpop.f32.mrb[0].mxu0
    %1969 = vdwg.mxu0
    %v1970 = vmax.f32 %v1967, 0.0
    %v1971 = vld [vmem:[%s9] sm:$0xff]
    %v1972 = vld [vmem:[%s9 + $0x8] sm:$0xff]
    %v1973 = vld [vmem:[%s9 + $0x10] sm:$0xff]
    %v1974 = vld [vmem:[%s9 + $0x18] sm:$0xff]
    %v1975 = vld [vmem:[%s9 + $0x20] sm:$0xff]
    %v1976 = vld [vmem:[%s9 + $0x28] sm:$0xff]
    %v1977 = vld [vmem:[%s9 + $0x30] sm:$0xff]
    %v1978 = vld [vmem:[%s9 + $0x38] sm:$0xff]
    %v1979 = vld [vmem:[%s9 + $0x40] sm:$0xff]
    %v1980 = vld [vmem:[%s9 + $0x48] sm:$0xff]
    %v1981 = vld [vmem:[%s9 + $0x50] sm:$0xf]
    %v1982 = vld [vmem:[%s10] sm:$0x1]
    %v1984 = vsel %vm871, %v1970, 0
    %v1987 = vsel %vm520, %v1981, 0
    %1989 = vmatprep.subr.mxu0 0.0
    %1990 = vmatpush1.msra.mxu0 %v1971
    %1991 = vmatprep.subr.mxu0 0.0
    %1992 = vmatpush1.msra.mxu0 %v1972
    %1993 = vmatprep.subr.mxu0 0.0
    %1994 = vmatpush1.msra.mxu0 %v1973
    %1995 = vmatprep.subr.mxu0 0.0
    %1996 = vmatpush1.msra.mxu0 %v1974
    %1997 = vmatprep.subr.mxu0 0.0
    %1998 = vmatpush1.msra.mxu0 %v1975
    %1999 = vmatprep.subr.mxu0 0.0
    %2000 = vmatpush1.msra.mxu0 %v1976
    %2001 = vmatprep.subr.mxu0 0.0
    %2002 = vmatpush1.msra.mxu0 %v1977
    %2003 = vmatprep.subr.mxu0 0.0
    %2004 = vmatpush1.msra.mxu0 %v1978
    %2005 = vmatprep.subr.mxu0 0.0
    %2006 = vmatpush1.msra.mxu0 %v1979
    %2007 = vmatprep.subr.mxu0 0.0
    %2008 = vmatpush1.msra.mxu0 %v1980
    %2009 = vmatprep.subr.mxu0 0.0
    %2010 = vmatpush1.msra.mxu0 %v1987
    %2011 = vmatprep.subr.mxu0 0.0
    %2012 = vmatpush1.msra.mxu0 0.0
    %2013 = vmatprep.subr.mxu0 0.0
    %2014 = vmatpush1.msra.mxu0 0.0
    %2015 = vmatprep.subr.mxu0 0.0
    %2016 = vmatpush1.msra.mxu0 0.0
    %2017 = vmatprep.subr.mxu0 0.0
    %2018 = vmatpush1.msra.mxu0 0.0
    %2019 = vmatprep.subr.mxu0 0.0
    %2020 = vmatpush1.msra.mxu0 0.0
    %2021 = vmatprep.subr.mxu0 0.0
    %2022 = vmatpush1.msra.mxu0 0.0
    %2023 = vmatprep.subr.mxu0 0.0
    %2024 = vmatpush1.msra.mxu0 0.0
    %2025 = vmatprep.subr.mxu0 0.0
    %2026 = vmatpush1.msra.mxu0 0.0
    %2027 = vmatprep.subr.mxu0 0.0
    %2028 = vmatpush1.msra.mxu0 0.0
    %2029 = vmatprep.subr.mxu0 0.0
    %2030 = vmatpush1.msra.mxu0 0.0
    %2031 = vmatprep.subr.mxu0 0.0
    %2032 = vmatpush1.msra.mxu0 0.0
    %2033 = vmatprep.subr.mxu0 0.0
    %2034 = vmatpush1.msra.mxu0 0.0
    %2035 = vmatprep.subr.mxu0 0.0
    %2036 = vmatpush1.msra.mxu0 0.0
    %2037 = vmatprep.subr.mxu0 0.0
    %2038 = vmatpush1.msra.mxu0 0.0
    %2039 = vmatprep.subr.mxu0 0.0
    %2040 = vmatpush1.msra.mxu0 0.0
    %2041 = vmatprep.subr.mxu0 0.0
    %2042 = vmatpush1.msra.mxu0 0.0
    %2043 = vmatprep.subr.mxu0 0.0
    %2044 = vmatpush1.msra.mxu0 0.0
    %2045 = vmatprep.subr.mxu0 0.0
    %2046 = vmatpush1.msra.mxu0 0.0
    %2047 = vmatprep.subr.mxu0 0.0
    %2048 = vmatpush1.msra.mxu0 0.0
    %2049 = vmatprep.subr.mxu0 0.0
    %2050 = vmatpush1.msra.mxu0 0.0
    %2051 = vmatprep.subr.mxu0 0.0
    %2052 = vmatpush1.msra.mxu0 0.0
    %2053 = vmatprep.mubr.f32.mxu0 0.0
    %2054 = vmatmul.mubr.f32.gmra.mrb[0].mxu0 %v1984
    %v2055 = vpop.f32.mrb[0].mxu0
    %v2056 = vadd.f32 %v1982, %v2055
    %v2057 = vpop.f32.mrb[0].mxu0
    %2058 = vdwg.mxu0
    %vm2059 = vcmask 73728
    %2060 = vst.msk [vmem:[#allocation3] sm:$0x1] %vm2059, %v2056
    %s2061 = scalar_lea.vmem %s0, 32
    %v2062 = vld [vmem:[%s2061] sm:$0xff]
    %v2063 = vld [vmem:[%s2061 + $0x8] sm:$0xff]
    %v2064 = vld [vmem:[%s2061 + $0x10] sm:$0xff]
    %v2065 = vld [vmem:[%s2061 + $0x18] sm:$0xff]
    %v2066 = vld [vmem:[%s1] sm:$0xff]
    %v2067 = vld [vmem:[%s1 + $0x8] sm:$0xff]
    %v2068 = vld [vmem:[%s1 + $0x10] sm:$0xff]
    %v2069 = vld [vmem:[%s1 + $0x18] sm:$0xff]
    %v2070 = vld [vmem:[%s1 + $0x20] sm:$0xff]
    %v2071 = vld [vmem:[%s1 + $0x28] sm:$0xff]
    %v2072 = vld [vmem:[%s1 + $0x30] sm:$0xff]
    %v2073 = vld [vmem:[%s1 + $0x38] sm:$0xff]
    %v2074 = vld [vmem:[%s51] sm:$0xff]
    %v2075 = vld [vmem:[%s51 + $0x8] sm:$0xff]
    %v2076 = vld [vmem:[%s51 + $0x10] sm:$0xff]
    %v2077 = vld [vmem:[%s51 + $0x18] sm:$0xff]
    %v2078 = vld [vmem:[%s51 + $0x20] sm:$0xff]
    %v2079 = vld [vmem:[%s51 + $0x28] sm:$0xff]
    %v2080 = vld [vmem:[%s51 + $0x30] sm:$0xff]
    %v2081 = vld [vmem:[%s51 + $0x38] sm:$0xff]
    %v2086 = vrot.slane %v2062, 1
    %v2087 = vrot.slane %v2063, 1
    %v2088 = vsel %vm64, %v2086, %v2087
    %v2089 = vrot.slane %v2064, 1
    %v2090 = vsel %vm64, %v2087, %v2089
    %v2091 = vrot.slane %v2065, 1
    %v2092 = vsel %vm64, %v2089, %v2091
    %v2093 = vsel %vm72, %v2088, 0
    %v2095 = vsel %vm72, %v2090, 0
    %v2097 = vsel %vm72, %v2092, 0
    %v2099 = vsel %vm72, %v2091, 0
    %2101 = vmatprep.subr.mxu0 %v2075
    %2102 = vmatpush1.msra.mxu0 %v2074
    %2103 = vmatprep.subr.mxu0 %v2077
    %2104 = vmatpush1.msra.mxu0 %v2076
    %2105 = vmatprep.subr.mxu0 %v2079
    %2106 = vmatpush1.msra.mxu0 %v2078
    %2107 = vmatprep.subr.mxu0 %v2081
    %2108 = vmatpush1.msra.mxu0 %v2080
    %2109 = vmatprep.subr.mxu0 0.0
    %2110 = vmatpush1.msra.mxu0 0.0
    %2111 = vmatprep.subr.mxu0 0.0
    %2112 = vmatpush1.msra.mxu0 0.0
    %2113 = vmatprep.subr.mxu0 0.0
    %2114 = vmatpush1.msra.mxu0 0.0
    %2115 = vmatprep.subr.mxu0 0.0
    %2116 = vmatpush1.msra.mxu0 0.0
    %2117 = vmatprep.subr.mxu0 0.0
    %2118 = vmatpush1.msra.mxu0 0.0
    %2119 = vmatprep.subr.mxu0 0.0
    %2120 = vmatpush1.msra.mxu0 0.0
    %2121 = vmatprep.subr.mxu0 0.0
    %2122 = vmatpush1.msra.mxu0 0.0
    %2123 = vmatprep.subr.mxu0 0.0
    %2124 = vmatpush1.msra.mxu0 0.0
    %2125 = vmatprep.subr.mxu0 0.0
    %2126 = vmatpush1.msra.mxu0 0.0
    %2127 = vmatprep.subr.mxu0 0.0
    %2128 = vmatpush1.msra.mxu0 0.0
    %2129 = vmatprep.subr.mxu0 0.0
    %2130 = vmatpush1.msra.mxu0 0.0
    %2131 = vmatprep.subr.mxu0 0.0
    %2132 = vmatpush1.msra.mxu0 0.0
    %2133 = vmatprep.subr.mxu0 0.0
    %2134 = vmatpush1.msra.mxu0 0.0
    %2135 = vmatprep.subr.mxu0 0.0
    %2136 = vmatpush1.msra.mxu0 0.0
    %2137 = vmatprep.subr.mxu0 0.0
    %2138 = vmatpush1.msra.mxu0 0.0
    %2139 = vmatprep.subr.mxu0 0.0
    %2140 = vmatpush1.msra.mxu0 0.0
    %2141 = vmatprep.subr.mxu0 0.0
    %2142 = vmatpush1.msra.mxu0 0.0
    %2143 = vmatprep.subr.mxu0 0.0
    %2144 = vmatpush1.msra.mxu0 0.0
    %2145 = vmatprep.subr.mxu0 0.0
    %2146 = vmatpush1.msra.mxu0 0.0
    %2147 = vmatprep.subr.mxu0 0.0
    %2148 = vmatpush1.msra.mxu0 0.0
    %2149 = vmatprep.subr.mxu0 0.0
    %2150 = vmatpush1.msra.mxu0 0.0
    %2151 = vmatprep.subr.mxu0 0.0
    %2152 = vmatpush1.msra.mxu0 0.0
    %2153 = vmatprep.subr.mxu0 0.0
    %2154 = vmatpush1.msra.mxu0 0.0
    %2155 = vmatprep.subr.mxu0 0.0
    %2156 = vmatpush1.msra.mxu0 0.0
    %2157 = vmatprep.subr.mxu0 0.0
    %2158 = vmatpush1.msra.mxu0 0.0
    %2159 = vmatprep.subr.mxu0 0.0
    %2160 = vmatpush1.msra.mxu0 0.0
    %2161 = vmatprep.subr.mxu0 0.0
    %2162 = vmatpush1.msra.mxu0 0.0
    %2163 = vmatprep.subr.mxu0 0.0
    %2164 = vmatpush1.msra.mxu0 0.0
    %2165 = vmatprep.mubr.f32.mxu0 0.0
    %2166 = vmatmul.mubr.f32.gmra.mrb[0].mxu0 %v2093
    %v2167 = vpop.f32.mrb[0].mxu0
    %v2168 = vadd.f32 0.0, %v2167
    %v2169 = vpop.f32.mrb[0].mxu0
    %v2170 = vadd.f32 0.0, %v2169
    %2171 = vmatprep.mubr.f32.mxu0 0.0
    %2172 = vmatmul.mubr.f32.gmra.mrb[0].mxu0 %v2095
    %v2173 = vpop.f32.mrb[0].mxu0
    %v2174 = vadd.f32 0.0, %v2173
    %v2175 = vpop.f32.mrb[0].mxu0
    %v2176 = vadd.f32 0.0, %v2175
    %2177 = vmatprep.mubr.f32.mxu0 0.0
    %2178 = vmatmul.mubr.f32.gmra.mrb[0].mxu0 %v2097
    %v2179 = vpop.f32.mrb[0].mxu0
    %v2180 = vadd.f32 0.0, %v2179
    %v2181 = vpop.f32.mrb[0].mxu0
    %v2182 = vadd.f32 0.0, %v2181
    %2183 = vmatprep.mubr.f32.mxu0 0.0
    %2184 = vmatmul.mubr.f32.gmra.mrb[0].mxu0 %v2099
    %v2185 = vpop.f32.mrb[0].mxu0
    %v2186 = vadd.f32 0.0, %v2185
    %v2187 = vpop.f32.mrb[0].mxu0
    %v2188 = vadd.f32 0.0, %v2187
    %2189 = vdwg.mxu0
    %v2190 = vsel %vm72, %v2062, 0
    %v2192 = vsel %vm72, %v2063, 0
    %v2194 = vsel %vm72, %v2064, 0
    %v2196 = vsel %vm72, %v2065, 0
    %2198 = vmatprep.subr.mxu0 %v2067
    %2199 = vmatpush1.msra.mxu0 %v2066
    %2200 = vmatprep.subr.mxu0 %v2069
    %2201 = vmatpush1.msra.mxu0 %v2068
    %2202 = vmatprep.subr.mxu0 %v2071
    %2203 = vmatpush1.msra.mxu0 %v2070
    %2204 = vmatprep.subr.mxu0 %v2073
    %2205 = vmatpush1.msra.mxu0 %v2072
    %2206 = vmatprep.subr.mxu0 0.0
    %2207 = vmatpush1.msra.mxu0 0.0
    %2208 = vmatprep.subr.mxu0 0.0
    %2209 = vmatpush1.msra.mxu0 0.0
    %2210 = vmatprep.subr.mxu0 0.0
    %2211 = vmatpush1.msra.mxu0 0.0
    %2212 = vmatprep.subr.mxu0 0.0
    %2213 = vmatpush1.msra.mxu0 0.0
    %2214 = vmatprep.subr.mxu0 0.0
    %2215 = vmatpush1.msra.mxu0 0.0
    %2216 = vmatprep.subr.mxu0 0.0
    %2217 = vmatpush1.msra.mxu0 0.0
    %2218 = vmatprep.subr.mxu0 0.0
    %2219 = vmatpush1.msra.mxu0 0.0
    %2220 = vmatprep.subr.mxu0 0.0
    %2221 = vmatpush1.msra.mxu0 0.0
    %2222 = vmatprep.subr.mxu0 0.0
    %2223 = vmatpush1.msra.mxu0 0.0
    %2224 = vmatprep.subr.mxu0 0.0
    %2225 = vmatpush1.msra.mxu0 0.0
    %2226 = vmatprep.subr.mxu0 0.0
    %2227 = vmatpush1.msra.mxu0 0.0
    %2228 = vmatprep.subr.mxu0 0.0
    %2229 = vmatpush1.msra.mxu0 0.0
    %2230 = vmatprep.subr.mxu0 0.0
    %2231 = vmatpush1.msra.mxu0 0.0
    %2232 = vmatprep.subr.mxu0 0.0
    %2233 = vmatpush1.msra.mxu0 0.0
    %2234 = vmatprep.subr.mxu0 0.0
    %2235 = vmatpush1.msra.mxu0 0.0
    %2236 = vmatprep.subr.mxu0 0.0
    %2237 = vmatpush1.msra.mxu0 0.0
    %2238 = vmatprep.subr.mxu0 0.0
    %2239 = vmatpush1.msra.mxu0 0.0
    %2240 = vmatprep.subr.mxu0 0.0
    %2241 = vmatpush1.msra.mxu0 0.0
    %2242 = vmatprep.subr.mxu0 0.0
    %2243 = vmatpush1.msra.mxu0 0.0
    %2244 = vmatprep.subr.mxu0 0.0
    %2245 = vmatpush1.msra.mxu0 0.0
    %2246 = vmatprep.subr.mxu0 0.0
    %2247 = vmatpush1.msra.mxu0 0.0
    %2248 = vmatprep.subr.mxu0 0.0
    %2249 = vmatpush1.msra.mxu0 0.0
    %2250 = vmatprep.subr.mxu0 0.0
    %2251 = vmatpush1.msra.mxu0 0.0
    %2252 = vmatprep.subr.mxu0 0.0
    %2253 = vmatpush1.msra.mxu0 0.0
    %2254 = vmatprep.subr.mxu0 0.0
    %2255 = vmatpush1.msra.mxu0 0.0
    %2256 = vmatprep.subr.mxu0 0.0
    %2257 = vmatpush1.msra.mxu0 0.0
    %2258 = vmatprep.subr.mxu0 0.0
    %2259 = vmatpush1.msra.mxu0 0.0
    %2260 = vmatprep.subr.mxu0 0.0
    %2261 = vmatpush1.msra.mxu0 0.0
    %2262 = vmatprep.mubr.f32.mxu0 0.0
    %2263 = vmatmul.mubr.f32.gmra.mrb[0].mxu0 %v2190
    %v2264 = vpop.f32.mrb[0].mxu0
    %v2265 = vadd.f32 %v2168, %v2264
    %v2266 = vpop.f32.mrb[0].mxu0
    %v2267 = vadd.f32 %v2170, %v2266
    %2268 = vmatprep.mubr.f32.mxu0 0.0
    %2269 = vmatmul.mubr.f32.gmra.mrb[0].mxu0 %v2192
    %v2270 = vpop.f32.mrb[0].mxu0
    %v2271 = vadd.f32 %v2174, %v2270
    %v2272 = vpop.f32.mrb[0].mxu0
    %v2273 = vadd.f32 %v2176, %v2272
    %2274 = vmatprep.mubr.f32.mxu0 0.0
    %2275 = vmatmul.mubr.f32.gmra.mrb[0].mxu0 %v2194
    %v2276 = vpop.f32.mrb[0].mxu0
    %v2277 = vadd.f32 %v2180, %v2276
    %v2278 = vpop.f32.mrb[0].mxu0
    %v2279 = vadd.f32 %v2182, %v2278
    %2280 = vmatprep.mubr.f32.mxu0 0.0
    %2281 = vmatmul.mubr.f32.gmra.mrb[0].mxu0 %v2196
    %v2282 = vpop.f32.mrb[0].mxu0
    %v2283 = vadd.f32 %v2186, %v2282
    %v2284 = vpop.f32.mrb[0].mxu0
    %v2285 = vadd.f32 %v2188, %v2284
    %2286 = vdwg.mxu0
    %v2287 = vld [vmem:[%s267] sm:$0xff]
    %v2288 = vld [vmem:[%s267 + $0x8] sm:$0xff]
    %v2289 = vld [vmem:[%s267 + $0x10] sm:$0xff]
    %v2290 = vld [vmem:[%s267 + $0x18] sm:$0xff]
    %v2291 = vld [vmem:[%s267 + $0x20] sm:$0xff]
    %v2292 = vld [vmem:[%s267 + $0x28] sm:$0xff]
    %v2293 = vld [vmem:[%s267 + $0x30] sm:$0xff]
    %v2294 = vld [vmem:[%s267 + $0x38] sm:$0xff]
    %v2295 = vrot.slane %v2062, 2
    %v2296 = vrot.slane %v2063, 2
    %v2297 = vsel %vm276, %v2295, %v2296
    %v2298 = vrot.slane %v2064, 2
    %v2299 = vsel %vm276, %v2296, %v2298
    %v2300 = vrot.slane %v2065, 2
    %v2301 = vsel %vm276, %v2298, %v2300
    %v2302 = vsel %vm72, %v2297, 0
    %v2304 = vsel %vm72, %v2299, 0
    %v2306 = vsel %vm72, %v2301, 0
    %v2308 = vsel %vm72, %v2300, 0
    %2310 = vmatprep.subr.mxu0 %v2288
    %2311 = vmatpush1.msra.mxu0 %v2287
    %2312 = vmatprep.subr.mxu0 %v2290
    %2313 = vmatpush1.msra.mxu0 %v2289
    %2314 = vmatprep.subr.mxu0 %v2292
    %2315 = vmatpush1.msra.mxu0 %v2291
    %2316 = vmatprep.subr.mxu0 %v2294
    %2317 = vmatpush1.msra.mxu0 %v2293
    %2318 = vmatprep.subr.mxu0 0.0
    %2319 = vmatpush1.msra.mxu0 0.0
    %2320 = vmatprep.subr.mxu0 0.0
    %2321 = vmatpush1.msra.mxu0 0.0
    %2322 = vmatprep.subr.mxu0 0.0
    %2323 = vmatpush1.msra.mxu0 0.0
    %2324 = vmatprep.subr.mxu0 0.0
    %2325 = vmatpush1.msra.mxu0 0.0
    %2326 = vmatprep.subr.mxu0 0.0
    %2327 = vmatpush1.msra.mxu0 0.0
    %2328 = vmatprep.subr.mxu0 0.0
    %2329 = vmatpush1.msra.mxu0 0.0
    %2330 = vmatprep.subr.mxu0 0.0
    %2331 = vmatpush1.msra.mxu0 0.0
    %2332 = vmatprep.subr.mxu0 0.0
    %2333 = vmatpush1.msra.mxu0 0.0
    %2334 = vmatprep.subr.mxu0 0.0
    %2335 = vmatpush1.msra.mxu0 0.0
    %2336 = vmatprep.subr.mxu0 0.0
    %2337 = vmatpush1.msra.mxu0 0.0
    %2338 = vmatprep.subr.mxu0 0.0
    %2339 = vmatpush1.msra.mxu0 0.0
    %2340 = vmatprep.subr.mxu0 0.0
    %2341 = vmatpush1.msra.mxu0 0.0
    %2342 = vmatprep.subr.mxu0 0.0
    %2343 = vmatpush1.msra.mxu0 0.0
    %2344 = vmatprep.subr.mxu0 0.0
    %2345 = vmatpush1.msra.mxu0 0.0
    %2346 = vmatprep.subr.mxu0 0.0
    %2347 = vmatpush1.msra.mxu0 0.0
    %2348 = vmatprep.subr.mxu0 0.0
    %2349 = vmatpush1.msra.mxu0 0.0
    %2350 = vmatprep.subr.mxu0 0.0
    %2351 = vmatpush1.msra.mxu0 0.0
    %2352 = vmatprep.subr.mxu0 0.0
    %2353 = vmatpush1.msra.mxu0 0.0
    %2354 = vmatprep.subr.mxu0 0.0
    %2355 = vmatpush1.msra.mxu0 0.0
    %2356 = vmatprep.subr.mxu0 0.0
    %2357 = vmatpush1.msra.mxu0 0.0
    %2358 = vmatprep.subr.mxu0 0.0
    %2359 = vmatpush1.msra.mxu0 0.0
    %2360 = vmatprep.subr.mxu0 0.0
    %2361 = vmatpush1.msra.mxu0 0.0
    %2362 = vmatprep.subr.mxu0 0.0
    %2363 = vmatpush1.msra.mxu0 0.0
    %2364 = vmatprep.subr.mxu0 0.0
    %2365 = vmatpush1.msra.mxu0 0.0
    %2366 = vmatprep.subr.mxu0 0.0
    %2367 = vmatpush1.msra.mxu0 0.0
    %2368 = vmatprep.subr.mxu0 0.0
    %2369 = vmatpush1.msra.mxu0 0.0
    %2370 = vmatprep.subr.mxu0 0.0
    %2371 = vmatpush1.msra.mxu0 0.0
    %2372 = vmatprep.subr.mxu0 0.0
    %2373 = vmatpush1.msra.mxu0 0.0
    %2374 = vmatprep.mubr.f32.mxu0 0.0
    %2375 = vmatmul.mubr.f32.gmra.mrb[0].mxu0 %v2302
    %v2376 = vpop.f32.mrb[0].mxu0
    %v2377 = vadd.f32 0.0, %v2376
    %v2378 = vpop.f32.mrb[0].mxu0
    %v2379 = vadd.f32 0.0, %v2378
    %2380 = vmatprep.mubr.f32.mxu0 0.0
    %2381 = vmatmul.mubr.f32.gmra.mrb[0].mxu0 %v2304
    %v2382 = vpop.f32.mrb[0].mxu0
    %v2383 = vadd.f32 0.0, %v2382
    %v2384 = vpop.f32.mrb[0].mxu0
    %v2385 = vadd.f32 0.0, %v2384
    %2386 = vmatprep.mubr.f32.mxu0 0.0
    %2387 = vmatmul.mubr.f32.gmra.mrb[0].mxu0 %v2306
    %v2388 = vpop.f32.mrb[0].mxu0
    %v2389 = vadd.f32 0.0, %v2388
    %v2390 = vpop.f32.mrb[0].mxu0
    %v2391 = vadd.f32 0.0, %v2390
    %2392 = vmatprep.mubr.f32.mxu0 0.0
    %2393 = vmatmul.mubr.f32.gmra.mrb[0].mxu0 %v2308
    %v2394 = vpop.f32.mrb[0].mxu0
    %v2395 = vadd.f32 0.0, %v2394
    %v2396 = vpop.f32.mrb[0].mxu0
    %v2397 = vadd.f32 0.0, %v2396
    %2398 = vdwg.mxu0
    %v2399 = vadd.f32 %v2265, %v2377
    %v2400 = vadd.f32 %v2267, %v2379
    %v2401 = vadd.f32 %v2271, %v2383
    %v2402 = vadd.f32 %v2273, %v2385
    %v2403 = vadd.f32 %v2277, %v2389
    %v2404 = vadd.f32 %v2279, %v2391
    %v2405 = vadd.f32 %v2283, %v2395
    %v2406 = vadd.f32 %v2285, %v2397
    %v2407 = vld [vmem:[%s389] sm:$0xff]
    %v2408 = vld [vmem:[%s389 + $0x8] sm:$0xff]
    %v2409 = vld [vmem:[%s389 + $0x10] sm:$0xff]
    %v2410 = vld [vmem:[%s389 + $0x18] sm:$0xff]
    %v2411 = vld [vmem:[%s389 + $0x20] sm:$0xff]
    %v2412 = vld [vmem:[%s389 + $0x28] sm:$0xff]
    %v2413 = vld [vmem:[%s389 + $0x30] sm:$0xff]
    %v2414 = vld [vmem:[%s389 + $0x38] sm:$0xff]
    %v2415 = vrot.slane %v2062, 3
    %v2416 = vrot.slane %v2063, 3
    %v2417 = vsel %vm398, %v2415, %v2416
    %v2418 = vrot.slane %v2064, 3
    %v2419 = vsel %vm398, %v2416, %v2418
    %v2420 = vrot.slane %v2065, 3
    %v2421 = vsel %vm398, %v2418, %v2420
    %v2422 = vsel %vm72, %v2417, 0
    %v2424 = vsel %vm72, %v2419, 0
    %v2426 = vsel %vm72, %v2421, 0
    %v2428 = vsel %vm72, %v2420, 0
    %2430 = vmatprep.subr.mxu0 %v2408
    %2431 = vmatpush1.msra.mxu0 %v2407
    %2432 = vmatprep.subr.mxu0 %v2410
    %2433 = vmatpush1.msra.mxu0 %v2409
    %2434 = vmatprep.subr.mxu0 %v2412
    %2435 = vmatpush1.msra.mxu0 %v2411
    %2436 = vmatprep.subr.mxu0 %v2414
    %2437 = vmatpush1.msra.mxu0 %v2413
    %2438 = vmatprep.subr.mxu0 0.0
    %2439 = vmatpush1.msra.mxu0 0.0
    %2440 = vmatprep.subr.mxu0 0.0
    %2441 = vmatpush1.msra.mxu0 0.0
    %2442 = vmatprep.subr.mxu0 0.0
    %2443 = vmatpush1.msra.mxu0 0.0
    %2444 = vmatprep.subr.mxu0 0.0
    %2445 = vmatpush1.msra.mxu0 0.0
    %2446 = vmatprep.subr.mxu0 0.0
    %2447 = vmatpush1.msra.mxu0 0.0
    %2448 = vmatprep.subr.mxu0 0.0
    %2449 = vmatpush1.msra.mxu0 0.0
    %2450 = vmatprep.subr.mxu0 0.0
    %2451 = vmatpush1.msra.mxu0 0.0
    %2452 = vmatprep.subr.mxu0 0.0
    %2453 = vmatpush1.msra.mxu0 0.0
    %2454 = vmatprep.subr.mxu0 0.0
    %2455 = vmatpush1.msra.mxu0 0.0
    %2456 = vmatprep.subr.mxu0 0.0
    %2457 = vmatpush1.msra.mxu0 0.0
    %2458 = vmatprep.subr.mxu0 0.0
    %2459 = vmatpush1.msra.mxu0 0.0
    %2460 = vmatprep.subr.mxu0 0.0
    %2461 = vmatpush1.msra.mxu0 0.0
    %2462 = vmatprep.subr.mxu0 0.0
    %2463 = vmatpush1.msra.mxu0 0.0
    %2464 = vmatprep.subr.mxu0 0.0
    %2465 = vmatpush1.msra.mxu0 0.0
    %2466 = vmatprep.subr.mxu0 0.0
    %2467 = vmatpush1.msra.mxu0 0.0
    %2468 = vmatprep.subr.mxu0 0.0
    %2469 = vmatpush1.msra.mxu0 0.0
    %2470 = vmatprep.subr.mxu0 0.0
    %2471 = vmatpush1.msra.mxu0 0.0
    %2472 = vmatprep.subr.mxu0 0.0
    %2473 = vmatpush1.msra.mxu0 0.0
    %2474 = vmatprep.subr.mxu0 0.0
    %2475 = vmatpush1.msra.mxu0 0.0
    %2476 = vmatprep.subr.mxu0 0.0
    %2477 = vmatpush1.msra.mxu0 0.0
    %2478 = vmatprep.subr.mxu0 0.0
    %2479 = vmatpush1.msra.mxu0 0.0
    %2480 = vmatprep.subr.mxu0 0.0
    %2481 = vmatpush1.msra.mxu0 0.0
    %2482 = vmatprep.subr.mxu0 0.0
    %2483 = vmatpush1.msra.mxu0 0.0
    %2484 = vmatprep.subr.mxu0 0.0
    %2485 = vmatpush1.msra.mxu0 0.0
    %2486 = vmatprep.subr.mxu0 0.0
    %2487 = vmatpush1.msra.mxu0 0.0
    %2488 = vmatprep.subr.mxu0 0.0
    %2489 = vmatpush1.msra.mxu0 0.0
    %2490 = vmatprep.subr.mxu0 0.0
    %2491 = vmatpush1.msra.mxu0 0.0
    %2492 = vmatprep.subr.mxu0 0.0
    %2493 = vmatpush1.msra.mxu0 0.0
    %2494 = vmatprep.mubr.f32.mxu0 0.0
    %2495 = vmatmul.mubr.f32.gmra.mrb[0].mxu0 %v2422
    %v2496 = vpop.f32.mrb[0].mxu0
    %v2497 = vadd.f32 0.0, %v2496
    %v2498 = vpop.f32.mrb[0].mxu0
    %v2499 = vadd.f32 0.0, %v2498
    %2500 = vmatprep.mubr.f32.mxu0 0.0
    %2501 = vmatmul.mubr.f32.gmra.mrb[0].mxu0 %v2424
    %v2502 = vpop.f32.mrb[0].mxu0
    %v2503 = vadd.f32 0.0, %v2502
    %v2504 = vpop.f32.mrb[0].mxu0
    %v2505 = vadd.f32 0.0, %v2504
    %2506 = vmatprep.mubr.f32.mxu0 0.0
    %2507 = vmatmul.mubr.f32.gmra.mrb[0].mxu0 %v2426
    %v2508 = vpop.f32.mrb[0].mxu0
    %v2509 = vadd.f32 0.0, %v2508
    %v2510 = vpop.f32.mrb[0].mxu0
    %v2511 = vadd.f32 0.0, %v2510
    %2512 = vmatprep.mubr.f32.mxu0 0.0
    %2513 = vmatmul.mubr.f32.gmra.mrb[0].mxu0 %v2428
    %v2514 = vpop.f32.mrb[0].mxu0
    %v2515 = vadd.f32 0.0, %v2514
    %v2516 = vpop.f32.mrb[0].mxu0
    %v2517 = vadd.f32 0.0, %v2516
    %2518 = vdwg.mxu0
    %v2519 = vadd.f32 %v2399, %v2497
    %v2520 = vadd.f32 %v2400, %v2499
    %v2521 = vadd.f32 %v2401, %v2503
    %v2522 = vadd.f32 %v2402, %v2505
    %v2523 = vadd.f32 %v2403, %v2509
    %v2524 = vadd.f32 %v2404, %v2511
    %v2525 = vadd.f32 %v2405, %v2515
    %v2526 = vadd.f32 %v2406, %v2517
    %v2527 = vld [vmem:[%s511] sm:$0xff]
    %v2528 = vld [vmem:[%s511 + $0x8] sm:$0xff]
    %v2529 = vld [vmem:[%s511 + $0x10] sm:$0xff]
    %v2530 = vld [vmem:[%s511 + $0x18] sm:$0xff]
    %v2531 = vld [vmem:[%s511 + $0x20] sm:$0xff]
    %v2532 = vld [vmem:[%s511 + $0x28] sm:$0xff]
    %v2533 = vld [vmem:[%s511 + $0x30] sm:$0xff]
    %v2534 = vld [vmem:[%s511 + $0x38] sm:$0xff]
    %v2535 = vrot.slane %v2062, 4
    %v2536 = vrot.slane %v2063, 4
    %v2537 = vsel %vm520, %v2535, %v2536
    %v2538 = vrot.slane %v2064, 4
    %v2539 = vsel %vm520, %v2536, %v2538
    %v2540 = vrot.slane %v2065, 4
    %v2541 = vsel %vm520, %v2538, %v2540
    %v2542 = vsel %vm72, %v2537, 0
    %v2544 = vsel %vm72, %v2539, 0
    %v2546 = vsel %vm72, %v2541, 0
    %v2548 = vsel %vm72, %v2540, 0
    %2550 = vmatprep.subr.mxu0 %v2528
    %2551 = vmatpush1.msra.mxu0 %v2527
    %2552 = vmatprep.subr.mxu0 %v2530
    %2553 = vmatpush1.msra.mxu0 %v2529
    %2554 = vmatprep.subr.mxu0 %v2532
    %2555 = vmatpush1.msra.mxu0 %v2531
    %2556 = vmatprep.subr.mxu0 %v2534
    %2557 = vmatpush1.msra.mxu0 %v2533
    %2558 = vmatprep.subr.mxu0 0.0
    %2559 = vmatpush1.msra.mxu0 0.0
    %2560 = vmatprep.subr.mxu0 0.0
    %2561 = vmatpush1.msra.mxu0 0.0
    %2562 = vmatprep.subr.mxu0 0.0
    %2563 = vmatpush1.msra.mxu0 0.0
    %2564 = vmatprep.subr.mxu0 0.0
    %2565 = vmatpush1.msra.mxu0 0.0
    %2566 = vmatprep.subr.mxu0 0.0
    %2567 = vmatpush1.msra.mxu0 0.0
    %2568 = vmatprep.subr.mxu0 0.0
    %2569 = vmatpush1.msra.mxu0 0.0
    %2570 = vmatprep.subr.mxu0 0.0
    %2571 = vmatpush1.msra.mxu0 0.0
    %2572 = vmatprep.subr.mxu0 0.0
    %2573 = vmatpush1.msra.mxu0 0.0
    %2574 = vmatprep.subr.mxu0 0.0
    %2575 = vmatpush1.msra.mxu0 0.0
    %2576 = vmatprep.subr.mxu0 0.0
    %2577 = vmatpush1.msra.mxu0 0.0
    %2578 = vmatprep.subr.mxu0 0.0
    %2579 = vmatpush1.msra.mxu0 0.0
    %2580 = vmatprep.subr.mxu0 0.0
    %2581 = vmatpush1.msra.mxu0 0.0
    %2582 = vmatprep.subr.mxu0 0.0
    %2583 = vmatpush1.msra.mxu0 0.0
    %2584 = vmatprep.subr.mxu0 0.0
    %2585 = vmatpush1.msra.mxu0 0.0
    %2586 = vmatprep.subr.mxu0 0.0
    %2587 = vmatpush1.msra.mxu0 0.0
    %2588 = vmatprep.subr.mxu0 0.0
    %2589 = vmatpush1.msra.mxu0 0.0
    %2590 = vmatprep.subr.mxu0 0.0
    %2591 = vmatpush1.msra.mxu0 0.0
    %2592 = vmatprep.subr.mxu0 0.0
    %2593 = vmatpush1.msra.mxu0 0.0
    %2594 = vmatprep.subr.mxu0 0.0
    %2595 = vmatpush1.msra.mxu0 0.0
    %2596 = vmatprep.subr.mxu0 0.0
    %2597 = vmatpush1.msra.mxu0 0.0
    %2598 = vmatprep.subr.mxu0 0.0
    %2599 = vmatpush1.msra.mxu0 0.0
    %2600 = vmatprep.subr.mxu0 0.0
    %2601 = vmatpush1.msra.mxu0 0.0
    %2602 = vmatprep.subr.mxu0 0.0
    %2603 = vmatpush1.msra.mxu0 0.0
    %2604 = vmatprep.subr.mxu0 0.0
    %2605 = vmatpush1.msra.mxu0 0.0
    %2606 = vmatprep.subr.mxu0 0.0
    %2607 = vmatpush1.msra.mxu0 0.0
    %2608 = vmatprep.subr.mxu0 0.0
    %2609 = vmatpush1.msra.mxu0 0.0
    %2610 = vmatprep.subr.mxu0 0.0
    %2611 = vmatpush1.msra.mxu0 0.0
    %2612 = vmatprep.subr.mxu0 0.0
    %2613 = vmatpush1.msra.mxu0 0.0
    %2614 = vmatprep.mubr.f32.mxu0 0.0
    %2615 = vmatmul.mubr.f32.gmra.mrb[0].mxu0 %v2542
    %v2616 = vpop.f32.mrb[0].mxu0
    %v2617 = vadd.f32 0.0, %v2616
    %v2618 = vpop.f32.mrb[0].mxu0
    %v2619 = vadd.f32 0.0, %v2618
    %2620 = vmatprep.mubr.f32.mxu0 0.0
    %2621 = vmatmul.mubr.f32.gmra.mrb[0].mxu0 %v2544
    %v2622 = vpop.f32.mrb[0].mxu0
    %v2623 = vadd.f32 0.0, %v2622
    %v2624 = vpop.f32.mrb[0].mxu0
    %v2625 = vadd.f32 0.0, %v2624
    %2626 = vmatprep.mubr.f32.mxu0 0.0
    %2627 = vmatmul.mubr.f32.gmra.mrb[0].mxu0 %v2546
    %v2628 = vpop.f32.mrb[0].mxu0
    %v2629 = vadd.f32 0.0, %v2628
    %v2630 = vpop.f32.mrb[0].mxu0
    %v2631 = vadd.f32 0.0, %v2630
    %2632 = vmatprep.mubr.f32.mxu0 0.0
    %2633 = vmatmul.mubr.f32.gmra.mrb[0].mxu0 %v2548
    %v2634 = vpop.f32.mrb[0].mxu0
    %v2635 = vadd.f32 0.0, %v2634
    %v2636 = vpop.f32.mrb[0].mxu0
    %v2637 = vadd.f32 0.0, %v2636
    %2638 = vdwg.mxu0
    %v2639 = vadd.f32 %v2519, %v2617
    %v2640 = vadd.f32 %v2520, %v2619
    %v2641 = vadd.f32 %v2521, %v2623
    %v2642 = vadd.f32 %v2522, %v2625
    %v2643 = vadd.f32 %v2523, %v2629
    %v2644 = vadd.f32 %v2524, %v2631
    %v2645 = vadd.f32 %v2525, %v2635
    %v2646 = vadd.f32 %v2526, %v2637
    %v2649 = vrot.slane %v2639, 1
    %v2650 = vrot.slane %v2640, 1
    %v2653 = vmax.f32 %v2639, %v2649
    %v2654 = vmax.f32 %v2640, %v2650
    %2657 = vrot.lane.b32.xlu0 %v2653, 44
    %v2658 = vpop.permute.xlu0 %2657
    %2659 = vrot.lane.b32.xlu0 %v2654, 44
    %v2660 = vpop.permute.xlu0 %2659
    %v2661 = vsel %vm647, %v2658, %v2660
    %v2663 = vmax.f32 %v2653, %v2661
    %v2664 = vld [vmem:[%s2] sm:$0x1]
    %v2665 = vadd.f32 %v2663, %v2664
    %v2666 = vmax.f32 %v2665, 0.0
    %2667 = vst.msk [vmem:[#allocation2 + $0xe] sm:$0x1] %vm654, %v2666
    %v2668 = vld [vmem:[%s2] sm:$0x1]
    %v2670 = vlaneseq
    %v2671 = vshrl.u32 %v2670, 7
    %v2672 = vsub.s32 0, %v2671
    %v2673 = vrot.slane %v2668, %v2672
    %v2675 = vadd.f32 %v2663, %v2673
    %v2676 = vmax.f32 %v2675, 0.0
    %2677 = vst.msk [vmem:[#allocation2 + $0xd] sm:$0x4] %vm665, %v2676
    %v2678 = vld [vmem:[%s2] sm:$0x1]
    %v2680 = vlaneseq
    %v2681 = vshrl.u32 %v2680, 7
    %v2682 = vsub.s32 0, %v2681
    %v2683 = vrot.slane %v2678, %v2682
    %v2685 = vadd.f32 %v2663, %v2683
    %v2686 = vmax.f32 %v2685, 0.0
    %2687 = vst.msk [vmem:[#allocation2 + $0xc] sm:$0x10] %vm676, %v2686
    %v2688 = vld [vmem:[%s2] sm:$0x1]
    %v2690 = vlaneseq
    %v2691 = vshrl.u32 %v2690, 7
    %v2692 = vsub.s32 0, %v2691
    %v2693 = vrot.slane %v2688, %v2692
    %v2695 = vadd.f32 %v2663, %v2693
    %v2696 = vmax.f32 %v2695, 0.0
    %2697 = vst.msk [vmem:[#allocation2 + $0xb] sm:$0x40] %vm687, %v2696
    %v2700 = vrot.slane %v2641, 1
    %v2701 = vrot.slane %v2642, 1
    %v2704 = vmax.f32 %v2641, %v2700
    %v2705 = vmax.f32 %v2642, %v2701
    %2708 = vrot.lane.b32.xlu0 %v2704, 44
    %v2709 = vpop.permute.xlu0 %2708
    %2710 = vrot.lane.b32.xlu0 %v2705, 44
    %v2711 = vpop.permute.xlu0 %2710
    %v2712 = vsel %vm647, %v2709, %v2711
    %v2714 = vmax.f32 %v2704, %v2712
    %v2715 = vld [vmem:[%s2] sm:$0x1]
    %v2716 = vadd.f32 %v2714, %v2715
    %v2717 = vmax.f32 %v2716, 0.0
    %2718 = vst.msk [vmem:[#allocation2 + $0x12] sm:$0x1] %vm654, %v2717
    %v2719 = vld [vmem:[%s2] sm:$0x1]
    %v2721 = vlaneseq
    %v2722 = vshrl.u32 %v2721, 7
    %v2723 = vsub.s32 0, %v2722
    %v2724 = vrot.slane %v2719, %v2723
    %v2726 = vadd.f32 %v2714, %v2724
    %v2727 = vmax.f32 %v2726, 0.0
    %2728 = vst.msk [vmem:[#allocation2 + $0x11] sm:$0x4] %vm665, %v2727
    %v2729 = vld [vmem:[%s2] sm:$0x1]
    %v2731 = vlaneseq
    %v2732 = vshrl.u32 %v2731, 7
    %v2733 = vsub.s32 0, %v2732
    %v2734 = vrot.slane %v2729, %v2733
    %v2736 = vadd.f32 %v2714, %v2734
    %v2737 = vmax.f32 %v2736, 0.0
    %2738 = vst.msk [vmem:[#allocation2 + $0x10] sm:$0x10] %vm676, %v2737
    %v2739 = vld [vmem:[%s2] sm:$0x1]
    %v2741 = vlaneseq
    %v2742 = vshrl.u32 %v2741, 7
    %v2743 = vsub.s32 0, %v2742
    %v2744 = vrot.slane %v2739, %v2743
    %v2746 = vadd.f32 %v2714, %v2744
    %v2747 = vmax.f32 %v2746, 0.0
    %2748 = vst.msk [vmem:[#allocation2 + $0xf] sm:$0x40] %vm687, %v2747
    %v2751 = vrot.slane %v2643, 1
    %v2752 = vrot.slane %v2644, 1
    %v2755 = vmax.f32 %v2643, %v2751
    %v2756 = vmax.f32 %v2644, %v2752
    %2759 = vrot.lane.b32.xlu0 %v2755, 44
    %v2760 = vpop.permute.xlu0 %2759
    %2761 = vrot.lane.b32.xlu0 %v2756, 44
    %v2762 = vpop.permute.xlu0 %2761
    %v2763 = vsel %vm647, %v2760, %v2762
    %v2765 = vmax.f32 %v2755, %v2763
    %v2766 = vld [vmem:[%s2] sm:$0x1]
    %v2767 = vadd.f32 %v2765, %v2766
    %v2768 = vmax.f32 %v2767, 0.0
    %2769 = vst.msk [vmem:[#allocation2 + $0x16] sm:$0x1] %vm654, %v2768
    %v2770 = vld [vmem:[%s2] sm:$0x1]
    %v2772 = vlaneseq
    %v2773 = vshrl.u32 %v2772, 7
    %v2774 = vsub.s32 0, %v2773
    %v2775 = vrot.slane %v2770, %v2774
    %v2777 = vadd.f32 %v2765, %v2775
    %v2778 = vmax.f32 %v2777, 0.0
    %2779 = vst.msk [vmem:[#allocation2 + $0x15] sm:$0x4] %vm665, %v2778
    %v2780 = vld [vmem:[%s2] sm:$0x1]
    %v2782 = vlaneseq
    %v2783 = vshrl.u32 %v2782, 7
    %v2784 = vsub.s32 0, %v2783
    %v2785 = vrot.slane %v2780, %v2784
    %v2787 = vadd.f32 %v2765, %v2785
    %v2788 = vmax.f32 %v2787, 0.0
    %2789 = vst.msk [vmem:[#allocation2 + $0x14] sm:$0x10] %vm676, %v2788
    %v2790 = vld [vmem:[%s2] sm:$0x1]
    %v2792 = vlaneseq
    %v2793 = vshrl.u32 %v2792, 7
    %v2794 = vsub.s32 0, %v2793
    %v2795 = vrot.slane %v2790, %v2794
    %v2797 = vadd.f32 %v2765, %v2795
    %v2798 = vmax.f32 %v2797, 0.0
    %2799 = vst.msk [vmem:[#allocation2 + $0x13] sm:$0x40] %vm687, %v2798
    %v2802 = vrot.slane %v2645, 1
    %v2803 = vrot.slane %v2646, 1
    %v2806 = vmax.f32 %v2645, %v2802
    %v2807 = vmax.f32 %v2646, %v2803
    %2810 = vrot.lane.b32.xlu0 %v2806, 44
    %v2811 = vpop.permute.xlu0 %2810
    %2812 = vrot.lane.b32.xlu0 %v2807, 44
    %v2813 = vpop.permute.xlu0 %2812
    %v2814 = vsel %vm647, %v2811, %v2813
    %v2816 = vmax.f32 %v2806, %v2814
    %v2817 = vld [vmem:[%s2] sm:$0x1]
    %v2818 = vadd.f32 %v2816, %v2817
    %v2819 = vmax.f32 %v2818, 0.0
    %2820 = vst.msk [vmem:[#allocation2 + $0x1a] sm:$0x1] %vm654, %v2819
    %v2821 = vld [vmem:[%s2] sm:$0x1]
    %v2823 = vlaneseq
    %v2824 = vshrl.u32 %v2823, 7
    %v2825 = vsub.s32 0, %v2824
    %v2826 = vrot.slane %v2821, %v2825
    %v2828 = vadd.f32 %v2816, %v2826
    %v2829 = vmax.f32 %v2828, 0.0
    %2830 = vst.msk [vmem:[#allocation2 + $0x19] sm:$0x4] %vm665, %v2829
    %v2831 = vld [vmem:[#allocation2 + $0xe] sm:$0xff]
    %v2832 = vld [vmem:[#allocation2 + $0x16] sm:$0x3]
    %v2833 = vld [vmem:[%s3] sm:$0xff]
    %v2834 = vld [vmem:[%s3 + $0x8] sm:$0xff]
    %v2835 = vld [vmem:[%s3 + $0x10] sm:$0xff]
    %v2836 = vld [vmem:[%s3 + $0x18] sm:$0xff]
    %v2837 = vld [vmem:[%s3 + $0x20] sm:$0xff]
    %v2838 = vld [vmem:[%s3 + $0x28] sm:$0xff]
    %v2839 = vld [vmem:[%s3 + $0x30] sm:$0xff]
    %v2840 = vld [vmem:[%s3 + $0x38] sm:$0xff]
    %v2841 = vld [vmem:[%s3 + $0x40] sm:$0xff]
    %v2842 = vld [vmem:[%s3 + $0x48] sm:$0xff]
    %v2843 = vld [vmem:[%s3 + $0x50] sm:$0xff]
    %v2844 = vld [vmem:[%s3 + $0x58] sm:$0xff]
    %v2845 = vld [vmem:[%s3 + $0x60] sm:$0xff]
    %v2846 = vld [vmem:[%s3 + $0x68] sm:$0xff]
    %v2847 = vld [vmem:[%s3 + $0x70] sm:$0xff]
    %v2848 = vld [vmem:[%s3 + $0x78] sm:$0xff]
    %v2849 = vld [vmem:[%s3 + $0x80] sm:$0xff]
    %v2850 = vld [vmem:[%s3 + $0x88] sm:$0xff]
    %v2851 = vld [vmem:[%s3 + $0x90] sm:$0xff]
    %v2852 = vld [vmem:[%s3 + $0x98] sm:$0xff]
    %v2853 = vld [vmem:[%s3 + $0xa0] sm:$0xf]
    %v2854 = vld [vmem:[%s3 + $0xa8] sm:$0xf]
    %v2855 = vld [vmem:[#allocation2 + $0xf] sm:$0xff]
    %v2856 = vld [vmem:[#allocation2 + $0x17] sm:$0x3]
    %v2857 = vld [vmem:[%s848] sm:$0xff]
    %v2858 = vld [vmem:[%s848 + $0x8] sm:$0xff]
    %v2859 = vld [vmem:[%s848 + $0x10] sm:$0xff]
    %v2860 = vld [vmem:[%s848 + $0x18] sm:$0xff]
    %v2861 = vld [vmem:[%s848 + $0x20] sm:$0xff]
    %v2862 = vld [vmem:[%s848 + $0x28] sm:$0xff]
    %v2863 = vld [vmem:[%s848 + $0x30] sm:$0xff]
    %v2864 = vld [vmem:[%s848 + $0x38] sm:$0xff]
    %v2865 = vld [vmem:[%s848 + $0x40] sm:$0xff]
    %v2866 = vld [vmem:[%s848 + $0x48] sm:$0xff]
    %v2867 = vld [vmem:[%s848 + $0x50] sm:$0xff]
    %v2868 = vld [vmem:[%s848 + $0x58] sm:$0xff]
    %v2869 = vld [vmem:[%s848 + $0x60] sm:$0xff]
    %v2870 = vld [vmem:[%s848 + $0x68] sm:$0xff]
    %v2871 = vld [vmem:[%s848 + $0x70] sm:$0xff]
    %v2872 = vld [vmem:[%s848 + $0x78] sm:$0xff]
    %v2873 = vld [vmem:[%s848 + $0x80] sm:$0xff]
    %v2874 = vld [vmem:[%s848 + $0x88] sm:$0xff]
    %v2875 = vld [vmem:[%s848 + $0x90] sm:$0xff]
    %v2876 = vld [vmem:[%s848 + $0x98] sm:$0xff]
    %v2877 = vld [vmem:[%s848 + $0xa0] sm:$0xf]
    %v2878 = vld [vmem:[%s848 + $0xa8] sm:$0xf]
    %v2880 = vsel %vm871, %v2855, 0
    %v2883 = vsel %vm871, %v2856, 0
    %v2886 = vsel %vm520, %v2877, 0
    %v2889 = vsel %vm520, %v2878, 0
    %2891 = vmatprep.subr.mxu0 %v2858
    %2892 = vmatpush1.msra.mxu0 %v2857
    %2893 = vmatprep.subr.mxu0 %v2860
    %2894 = vmatpush1.msra.mxu0 %v2859
    %2895 = vmatprep.subr.mxu0 %v2862
    %2896 = vmatpush1.msra.mxu0 %v2861
    %2897 = vmatprep.subr.mxu0 %v2864
    %2898 = vmatpush1.msra.mxu0 %v2863
    %2899 = vmatprep.subr.mxu0 %v2866
    %2900 = vmatpush1.msra.mxu0 %v2865
    %2901 = vmatprep.subr.mxu0 %v2868
    %2902 = vmatpush1.msra.mxu0 %v2867
    %2903 = vmatprep.subr.mxu0 %v2870
    %2904 = vmatpush1.msra.mxu0 %v2869
    %2905 = vmatprep.subr.mxu0 %v2872
    %2906 = vmatpush1.msra.mxu0 %v2871
    %2907 = vmatprep.subr.mxu0 %v2874
    %2908 = vmatpush1.msra.mxu0 %v2873
    %2909 = vmatprep.subr.mxu0 %v2876
    %2910 = vmatpush1.msra.mxu0 %v2875
    %2911 = vmatprep.subr.mxu0 %v2889
    %2912 = vmatpush1.msra.mxu0 %v2886
    %2913 = vmatprep.subr.mxu0 0.0
    %2914 = vmatpush1.msra.mxu0 0.0
    %2915 = vmatprep.subr.mxu0 0.0
    %2916 = vmatpush1.msra.mxu0 0.0
    %2917 = vmatprep.subr.mxu0 0.0
    %2918 = vmatpush1.msra.mxu0 0.0
    %2919 = vmatprep.subr.mxu0 0.0
    %2920 = vmatpush1.msra.mxu0 0.0
    %2921 = vmatprep.subr.mxu0 0.0
    %2922 = vmatpush1.msra.mxu0 0.0
    %2923 = vmatprep.subr.mxu0 0.0
    %2924 = vmatpush1.msra.mxu0 0.0
    %2925 = vmatprep.subr.mxu0 0.0
    %2926 = vmatpush1.msra.mxu0 0.0
    %2927 = vmatprep.subr.mxu0 0.0
    %2928 = vmatpush1.msra.mxu0 0.0
    %2929 = vmatprep.subr.mxu0 0.0
    %2930 = vmatpush1.msra.mxu0 0.0
    %2931 = vmatprep.subr.mxu0 0.0
    %2932 = vmatpush1.msra.mxu0 0.0
    %2933 = vmatprep.subr.mxu0 0.0
    %2934 = vmatpush1.msra.mxu0 0.0
    %2935 = vmatprep.subr.mxu0 0.0
    %2936 = vmatpush1.msra.mxu0 0.0
    %2937 = vmatprep.subr.mxu0 0.0
    %2938 = vmatpush1.msra.mxu0 0.0
    %2939 = vmatprep.subr.mxu0 0.0
    %2940 = vmatpush1.msra.mxu0 0.0
    %2941 = vmatprep.subr.mxu0 0.0
    %2942 = vmatpush1.msra.mxu0 0.0
    %2943 = vmatprep.subr.mxu0 0.0
    %2944 = vmatpush1.msra.mxu0 0.0
    %2945 = vmatprep.subr.mxu0 0.0
    %2946 = vmatpush1.msra.mxu0 0.0
    %2947 = vmatprep.subr.mxu0 0.0
    %2948 = vmatpush1.msra.mxu0 0.0
    %2949 = vmatprep.subr.mxu0 0.0
    %2950 = vmatpush1.msra.mxu0 0.0
    %2951 = vmatprep.subr.mxu0 0.0
    %2952 = vmatpush1.msra.mxu0 0.0
    %2953 = vmatprep.subr.mxu0 0.0
    %2954 = vmatpush1.msra.mxu0 0.0
    %2955 = vmatprep.mubr.f32.mxu0 0.0
    %2956 = vmatmul.mubr.f32.gmra.mrb[0].mxu0 %v2880
    %v2957 = vpop.f32.mrb[0].mxu0
    %v2958 = vadd.f32 0.0, %v2957
    %v2959 = vpop.f32.mrb[0].mxu0
    %v2960 = vadd.f32 0.0, %v2959
    %2961 = vmatprep.mubr.f32.mxu0 0.0
    %2962 = vmatmul.mubr.f32.gmra.mrb[0].mxu0 %v2883
    %v2963 = vpop.f32.mrb[0].mxu0
    %v2964 = vadd.f32 0.0, %v2963
    %v2965 = vpop.f32.mrb[0].mxu0
    %v2966 = vadd.f32 0.0, %v2965
    %2967 = vdwg.mxu0
    %v2969 = vsel %vm871, %v2831, 0
    %v2972 = vsel %vm871, %v2832, 0
    %v2975 = vsel %vm520, %v2853, 0
    %v2978 = vsel %vm520, %v2854, 0
    %2980 = vmatprep.subr.mxu0 %v2834
    %2981 = vmatpush1.msra.mxu0 %v2833
    %2982 = vmatprep.subr.mxu0 %v2836
    %2983 = vmatpush1.msra.mxu0 %v2835
    %2984 = vmatprep.subr.mxu0 %v2838
    %2985 = vmatpush1.msra.mxu0 %v2837
    %2986 = vmatprep.subr.mxu0 %v2840
    %2987 = vmatpush1.msra.mxu0 %v2839
    %2988 = vmatprep.subr.mxu0 %v2842
    %2989 = vmatpush1.msra.mxu0 %v2841
    %2990 = vmatprep.subr.mxu0 %v2844
    %2991 = vmatpush1.msra.mxu0 %v2843
    %2992 = vmatprep.subr.mxu0 %v2846
    %2993 = vmatpush1.msra.mxu0 %v2845
    %2994 = vmatprep.subr.mxu0 %v2848
    %2995 = vmatpush1.msra.mxu0 %v2847
    %2996 = vmatprep.subr.mxu0 %v2850
    %2997 = vmatpush1.msra.mxu0 %v2849
    %2998 = vmatprep.subr.mxu0 %v2852
    %2999 = vmatpush1.msra.mxu0 %v2851
    %3000 = vmatprep.subr.mxu0 %v2978
    %3001 = vmatpush1.msra.mxu0 %v2975
    %3002 = vmatprep.subr.mxu0 0.0
    %3003 = vmatpush1.msra.mxu0 0.0
    %3004 = vmatprep.subr.mxu0 0.0
    %3005 = vmatpush1.msra.mxu0 0.0
    %3006 = vmatprep.subr.mxu0 0.0
    %3007 = vmatpush1.msra.mxu0 0.0
    %3008 = vmatprep.subr.mxu0 0.0
    %3009 = vmatpush1.msra.mxu0 0.0
    %3010 = vmatprep.subr.mxu0 0.0
    %3011 = vmatpush1.msra.mxu0 0.0
    %3012 = vmatprep.subr.mxu0 0.0
    %3013 = vmatpush1.msra.mxu0 0.0
    %3014 = vmatprep.subr.mxu0 0.0
    %3015 = vmatpush1.msra.mxu0 0.0
    %3016 = vmatprep.subr.mxu0 0.0
    %3017 = vmatpush1.msra.mxu0 0.0
    %3018 = vmatprep.subr.mxu0 0.0
    %3019 = vmatpush1.msra.mxu0 0.0
    %3020 = vmatprep.subr.mxu0 0.0
    %3021 = vmatpush1.msra.mxu0 0.0
    %3022 = vmatprep.subr.mxu0 0.0
    %3023 = vmatpush1.msra.mxu0 0.0
    %3024 = vmatprep.subr.mxu0 0.0
    %3025 = vmatpush1.msra.mxu0 0.0
    %3026 = vmatprep.subr.mxu0 0.0
    %3027 = vmatpush1.msra.mxu0 0.0
    %3028 = vmatprep.subr.mxu0 0.0
    %3029 = vmatpush1.msra.mxu0 0.0
    %3030 = vmatprep.subr.mxu0 0.0
    %3031 = vmatpush1.msra.mxu0 0.0
    %3032 = vmatprep.subr.mxu0 0.0
    %3033 = vmatpush1.msra.mxu0 0.0
    %3034 = vmatprep.subr.mxu0 0.0
    %3035 = vmatpush1.msra.mxu0 0.0
    %3036 = vmatprep.subr.mxu0 0.0
    %3037 = vmatpush1.msra.mxu0 0.0
    %3038 = vmatprep.subr.mxu0 0.0
    %3039 = vmatpush1.msra.mxu0 0.0
    %3040 = vmatprep.subr.mxu0 0.0
    %3041 = vmatpush1.msra.mxu0 0.0
    %3042 = vmatprep.subr.mxu0 0.0
    %3043 = vmatpush1.msra.mxu0 0.0
    %3044 = vmatprep.mubr.f32.mxu0 0.0
    %3045 = vmatmul.mubr.f32.gmra.mrb[0].mxu0 %v2969
    %v3046 = vpop.f32.mrb[0].mxu0
    %v3047 = vadd.f32 %v2958, %v3046
    %v3048 = vpop.f32.mrb[0].mxu0
    %v3049 = vadd.f32 %v2960, %v3048
    %3050 = vmatprep.mubr.f32.mxu0 0.0
    %3051 = vmatmul.mubr.f32.gmra.mrb[0].mxu0 %v2972
    %v3052 = vpop.f32.mrb[0].mxu0
    %v3053 = vadd.f32 %v2964, %v3052
    %v3054 = vpop.f32.mrb[0].mxu0
    %v3055 = vadd.f32 %v2966, %v3054
    %3056 = vdwg.mxu0
    %v3057 = vld [vmem:[#allocation2 + $0x10] sm:$0xff]
    %v3058 = vld [vmem:[#allocation2 + $0x18] sm:$0x3]
    %v3059 = vld [vmem:[%s1052] sm:$0xff]
    %v3060 = vld [vmem:[%s1052 + $0x8] sm:$0xff]
    %v3061 = vld [vmem:[%s1052 + $0x10] sm:$0xff]
    %v3062 = vld [vmem:[%s1052 + $0x18] sm:$0xff]
    %v3063 = vld [vmem:[%s1052 + $0x20] sm:$0xff]
    %v3064 = vld [vmem:[%s1052 + $0x28] sm:$0xff]
    %v3065 = vld [vmem:[%s1052 + $0x30] sm:$0xff]
    %v3066 = vld [vmem:[%s1052 + $0x38] sm:$0xff]
    %v3067 = vld [vmem:[%s1052 + $0x40] sm:$0xff]
    %v3068 = vld [vmem:[%s1052 + $0x48] sm:$0xff]
    %v3069 = vld [vmem:[%s1052 + $0x50] sm:$0xff]
    %v3070 = vld [vmem:[%s1052 + $0x58] sm:$0xff]
    %v3071 = vld [vmem:[%s1052 + $0x60] sm:$0xff]
    %v3072 = vld [vmem:[%s1052 + $0x68] sm:$0xff]
    %v3073 = vld [vmem:[%s1052 + $0x70] sm:$0xff]
    %v3074 = vld [vmem:[%s1052 + $0x78] sm:$0xff]
    %v3075 = vld [vmem:[%s1052 + $0x80] sm:$0xff]
    %v3076 = vld [vmem:[%s1052 + $0x88] sm:$0xff]
    %v3077 = vld [vmem:[%s1052 + $0x90] sm:$0xff]
    %v3078 = vld [vmem:[%s1052 + $0x98] sm:$0xff]
    %v3079 = vld [vmem:[%s1052 + $0xa0] sm:$0xf]
    %v3080 = vld [vmem:[%s1052 + $0xa8] sm:$0xf]
    %v3082 = vsel %vm871, %v3057, 0
    %v3085 = vsel %vm871, %v3058, 0
    %v3088 = vsel %vm520, %v3079, 0
    %v3091 = vsel %vm520, %v3080, 0
    %3093 = vmatprep.subr.mxu0 %v3060
    %3094 = vmatpush1.msra.mxu0 %v3059
    %3095 = vmatprep.subr.mxu0 %v3062
    %3096 = vmatpush1.msra.mxu0 %v3061
    %3097 = vmatprep.subr.mxu0 %v3064
    %3098 = vmatpush1.msra.mxu0 %v3063
    %3099 = vmatprep.subr.mxu0 %v3066
    %3100 = vmatpush1.msra.mxu0 %v3065
    %3101 = vmatprep.subr.mxu0 %v3068
    %3102 = vmatpush1.msra.mxu0 %v3067
    %3103 = vmatprep.subr.mxu0 %v3070
    %3104 = vmatpush1.msra.mxu0 %v3069
    %3105 = vmatprep.subr.mxu0 %v3072
    %3106 = vmatpush1.msra.mxu0 %v3071
    %3107 = vmatprep.subr.mxu0 %v3074
    %3108 = vmatpush1.msra.mxu0 %v3073
    %3109 = vmatprep.subr.mxu0 %v3076
    %3110 = vmatpush1.msra.mxu0 %v3075
    %3111 = vmatprep.subr.mxu0 %v3078
    %3112 = vmatpush1.msra.mxu0 %v3077
    %3113 = vmatprep.subr.mxu0 %v3091
    %3114 = vmatpush1.msra.mxu0 %v3088
    %3115 = vmatprep.subr.mxu0 0.0
    %3116 = vmatpush1.msra.mxu0 0.0
    %3117 = vmatprep.subr.mxu0 0.0
    %3118 = vmatpush1.msra.mxu0 0.0
    %3119 = vmatprep.subr.mxu0 0.0
    %3120 = vmatpush1.msra.mxu0 0.0
    %3121 = vmatprep.subr.mxu0 0.0
    %3122 = vmatpush1.msra.mxu0 0.0
    %3123 = vmatprep.subr.mxu0 0.0
    %3124 = vmatpush1.msra.mxu0 0.0
    %3125 = vmatprep.subr.mxu0 0.0
    %3126 = vmatpush1.msra.mxu0 0.0
    %3127 = vmatprep.subr.mxu0 0.0
    %3128 = vmatpush1.msra.mxu0 0.0
    %3129 = vmatprep.subr.mxu0 0.0
    %3130 = vmatpush1.msra.mxu0 0.0
    %3131 = vmatprep.subr.mxu0 0.0
    %3132 = vmatpush1.msra.mxu0 0.0
    %3133 = vmatprep.subr.mxu0 0.0
    %3134 = vmatpush1.msra.mxu0 0.0
    %3135 = vmatprep.subr.mxu0 0.0
    %3136 = vmatpush1.msra.mxu0 0.0
    %3137 = vmatprep.subr.mxu0 0.0
    %3138 = vmatpush1.msra.mxu0 0.0
    %3139 = vmatprep.subr.mxu0 0.0
    %3140 = vmatpush1.msra.mxu0 0.0
    %3141 = vmatprep.subr.mxu0 0.0
    %3142 = vmatpush1.msra.mxu0 0.0
    %3143 = vmatprep.subr.mxu0 0.0
    %3144 = vmatpush1.msra.mxu0 0.0
    %3145 = vmatprep.subr.mxu0 0.0
    %3146 = vmatpush1.msra.mxu0 0.0
    %3147 = vmatprep.subr.mxu0 0.0
    %3148 = vmatpush1.msra.mxu0 0.0
    %3149 = vmatprep.subr.mxu0 0.0
    %3150 = vmatpush1.msra.mxu0 0.0
    %3151 = vmatprep.subr.mxu0 0.0
    %3152 = vmatpush1.msra.mxu0 0.0
    %3153 = vmatprep.subr.mxu0 0.0
    %3154 = vmatpush1.msra.mxu0 0.0
    %3155 = vmatprep.subr.mxu0 0.0
    %3156 = vmatpush1.msra.mxu0 0.0
    %3157 = vmatprep.mubr.f32.mxu0 0.0
    %3158 = vmatmul.mubr.f32.gmra.mrb[0].mxu0 %v3082
    %v3159 = vpop.f32.mrb[0].mxu0
    %v3160 = vadd.f32 0.0, %v3159
    %v3161 = vpop.f32.mrb[0].mxu0
    %v3162 = vadd.f32 0.0, %v3161
    %3163 = vmatprep.mubr.f32.mxu0 0.0
    %3164 = vmatmul.mubr.f32.gmra.mrb[0].mxu0 %v3085
    %v3165 = vpop.f32.mrb[0].mxu0
    %v3166 = vadd.f32 0.0, %v3165
    %v3167 = vpop.f32.mrb[0].mxu0
    %v3168 = vadd.f32 0.0, %v3167
    %3169 = vdwg.mxu0
    %v3170 = vadd.f32 %v3047, %v3160
    %v3171 = vadd.f32 %v3049, %v3162
    %v3172 = vadd.f32 %v3053, %v3166
    %v3173 = vadd.f32 %v3055, %v3168
    %v3174 = vld [vmem:[#allocation2 + $0x11] sm:$0xff]
    %v3175 = vld [vmem:[#allocation2 + $0x19] sm:$0x3]
    %v3176 = vld [vmem:[%s1170] sm:$0xff]
    %v3177 = vld [vmem:[%s1170 + $0x8] sm:$0xff]
    %v3178 = vld [vmem:[%s1170 + $0x10] sm:$0xff]
    %v3179 = vld [vmem:[%s1170 + $0x18] sm:$0xff]
    %v3180 = vld [vmem:[%s1170 + $0x20] sm:$0xff]
    %v3181 = vld [vmem:[%s1170 + $0x28] sm:$0xff]
    %v3182 = vld [vmem:[%s1170 + $0x30] sm:$0xff]
    %v3183 = vld [vmem:[%s1170 + $0x38] sm:$0xff]
    %v3184 = vld [vmem:[%s1170 + $0x40] sm:$0xff]
    %v3185 = vld [vmem:[%s1170 + $0x48] sm:$0xff]
    %v3186 = vld [vmem:[%s1170 + $0x50] sm:$0xff]
    %v3187 = vld [vmem:[%s1170 + $0x58] sm:$0xff]
    %v3188 = vld [vmem:[%s1170 + $0x60] sm:$0xff]
    %v3189 = vld [vmem:[%s1170 + $0x68] sm:$0xff]
    %v3190 = vld [vmem:[%s1170 + $0x70] sm:$0xff]
    %v3191 = vld [vmem:[%s1170 + $0x78] sm:$0xff]
    %v3192 = vld [vmem:[%s1170 + $0x80] sm:$0xff]
    %v3193 = vld [vmem:[%s1170 + $0x88] sm:$0xff]
    %v3194 = vld [vmem:[%s1170 + $0x90] sm:$0xff]
    %v3195 = vld [vmem:[%s1170 + $0x98] sm:$0xff]
    %v3196 = vld [vmem:[%s1170 + $0xa0] sm:$0xf]
    %v3197 = vld [vmem:[%s1170 + $0xa8] sm:$0xf]
    %v3199 = vsel %vm871, %v3174, 0
    %v3202 = vsel %vm871, %v3175, 0
    %v3205 = vsel %vm520, %v3196, 0
    %v3208 = vsel %vm520, %v3197, 0
    %3210 = vmatprep.subr.mxu0 %v3177
    %3211 = vmatpush1.msra.mxu0 %v3176
    %3212 = vmatprep.subr.mxu0 %v3179
    %3213 = vmatpush1.msra.mxu0 %v3178
    %3214 = vmatprep.subr.mxu0 %v3181
    %3215 = vmatpush1.msra.mxu0 %v3180
    %3216 = vmatprep.subr.mxu0 %v3183
    %3217 = vmatpush1.msra.mxu0 %v3182
    %3218 = vmatprep.subr.mxu0 %v3185
    %3219 = vmatpush1.msra.mxu0 %v3184
    %3220 = vmatprep.subr.mxu0 %v3187
    %3221 = vmatpush1.msra.mxu0 %v3186
    %3222 = vmatprep.subr.mxu0 %v3189
    %3223 = vmatpush1.msra.mxu0 %v3188
    %3224 = vmatprep.subr.mxu0 %v3191
    %3225 = vmatpush1.msra.mxu0 %v3190
    %3226 = vmatprep.subr.mxu0 %v3193
    %3227 = vmatpush1.msra.mxu0 %v3192
    %3228 = vmatprep.subr.mxu0 %v3195
    %3229 = vmatpush1.msra.mxu0 %v3194
    %3230 = vmatprep.subr.mxu0 %v3208
    %3231 = vmatpush1.msra.mxu0 %v3205
    %3232 = vmatprep.subr.mxu0 0.0
    %3233 = vmatpush1.msra.mxu0 0.0
    %3234 = vmatprep.subr.mxu0 0.0
    %3235 = vmatpush1.msra.mxu0 0.0
    %3236 = vmatprep.subr.mxu0 0.0
    %3237 = vmatpush1.msra.mxu0 0.0
    %3238 = vmatprep.subr.mxu0 0.0
    %3239 = vmatpush1.msra.mxu0 0.0
    %3240 = vmatprep.subr.mxu0 0.0
    %3241 = vmatpush1.msra.mxu0 0.0
    %3242 = vmatprep.subr.mxu0 0.0
    %3243 = vmatpush1.msra.mxu0 0.0
    %3244 = vmatprep.subr.mxu0 0.0
    %3245 = vmatpush1.msra.mxu0 0.0
    %3246 = vmatprep.subr.mxu0 0.0
    %3247 = vmatpush1.msra.mxu0 0.0
    %3248 = vmatprep.subr.mxu0 0.0
    %3249 = vmatpush1.msra.mxu0 0.0
    %3250 = vmatprep.subr.mxu0 0.0
    %3251 = vmatpush1.msra.mxu0 0.0
    %3252 = vmatprep.subr.mxu0 0.0
    %3253 = vmatpush1.msra.mxu0 0.0
    %3254 = vmatprep.subr.mxu0 0.0
    %3255 = vmatpush1.msra.mxu0 0.0
    %3256 = vmatprep.subr.mxu0 0.0
    %3257 = vmatpush1.msra.mxu0 0.0
    %3258 = vmatprep.subr.mxu0 0.0
    %3259 = vmatpush1.msra.mxu0 0.0
    %3260 = vmatprep.subr.mxu0 0.0
    %3261 = vmatpush1.msra.mxu0 0.0
    %3262 = vmatprep.subr.mxu0 0.0
    %3263 = vmatpush1.msra.mxu0 0.0
    %3264 = vmatprep.subr.mxu0 0.0
    %3265 = vmatpush1.msra.mxu0 0.0
    %3266 = vmatprep.subr.mxu0 0.0
    %3267 = vmatpush1.msra.mxu0 0.0
    %3268 = vmatprep.subr.mxu0 0.0
    %3269 = vmatpush1.msra.mxu0 0.0
    %3270 = vmatprep.subr.mxu0 0.0
    %3271 = vmatpush1.msra.mxu0 0.0
    %3272 = vmatprep.subr.mxu0 0.0
    %3273 = vmatpush1.msra.mxu0 0.0
    %3274 = vmatprep.mubr.f32.mxu0 0.0
    %3275 = vmatmul.mubr.f32.gmra.mrb[0].mxu0 %v3199
    %v3276 = vpop.f32.mrb[0].mxu0
    %v3277 = vadd.f32 0.0, %v3276
    %v3278 = vpop.f32.mrb[0].mxu0
    %v3279 = vadd.f32 0.0, %v3278
    %3280 = vmatprep.mubr.f32.mxu0 0.0
    %3281 = vmatmul.mubr.f32.gmra.mrb[0].mxu0 %v3202
    %v3282 = vpop.f32.mrb[0].mxu0
    %v3283 = vadd.f32 0.0, %v3282
    %v3284 = vpop.f32.mrb[0].mxu0
    %v3285 = vadd.f32 0.0, %v3284
    %3286 = vdwg.mxu0
    %v3287 = vadd.f32 %v3170, %v3277
    %v3288 = vadd.f32 %v3171, %v3279
    %v3289 = vadd.f32 %v3172, %v3283
    %v3290 = vadd.f32 %v3173, %v3285
    %v3291 = vld [vmem:[#allocation2 + $0x12] sm:$0xff]
    %v3292 = vld [vmem:[#allocation2 + $0x1a] sm:$0x3]
    %v3293 = vld [vmem:[%s1288] sm:$0xff]
    %v3294 = vld [vmem:[%s1288 + $0x8] sm:$0xff]
    %v3295 = vld [vmem:[%s1288 + $0x10] sm:$0xff]
    %v3296 = vld [vmem:[%s1288 + $0x18] sm:$0xff]
    %v3297 = vld [vmem:[%s1288 + $0x20] sm:$0xff]
    %v3298 = vld [vmem:[%s1288 + $0x28] sm:$0xff]
    %v3299 = vld [vmem:[%s1288 + $0x30] sm:$0xff]
    %v3300 = vld [vmem:[%s1288 + $0x38] sm:$0xff]
    %v3301 = vld [vmem:[%s1288 + $0x40] sm:$0xff]
    %v3302 = vld [vmem:[%s1288 + $0x48] sm:$0xff]
    %v3303 = vld [vmem:[%s1288 + $0x50] sm:$0xff]
    %v3304 = vld [vmem:[%s1288 + $0x58] sm:$0xff]
    %v3305 = vld [vmem:[%s1288 + $0x60] sm:$0xff]
    %v3306 = vld [vmem:[%s1288 + $0x68] sm:$0xff]
    %v3307 = vld [vmem:[%s1288 + $0x70] sm:$0xff]
    %v3308 = vld [vmem:[%s1288 + $0x78] sm:$0xff]
    %v3309 = vld [vmem:[%s1288 + $0x80] sm:$0xff]
    %v3310 = vld [vmem:[%s1288 + $0x88] sm:$0xff]
    %v3311 = vld [vmem:[%s1288 + $0x90] sm:$0xff]
    %v3312 = vld [vmem:[%s1288 + $0x98] sm:$0xff]
    %v3313 = vld [vmem:[%s1288 + $0xa0] sm:$0xf]
    %v3314 = vld [vmem:[%s1288 + $0xa8] sm:$0xf]
    %v3316 = vsel %vm871, %v3291, 0
    %v3319 = vsel %vm871, %v3292, 0
    %v3322 = vsel %vm520, %v3313, 0
    %v3325 = vsel %vm520, %v3314, 0
    %3327 = vmatprep.subr.mxu0 %v3294
    %3328 = vmatpush1.msra.mxu0 %v3293
    %3329 = vmatprep.subr.mxu0 %v3296
    %3330 = vmatpush1.msra.mxu0 %v3295
    %3331 = vmatprep.subr.mxu0 %v3298
    %3332 = vmatpush1.msra.mxu0 %v3297
    %3333 = vmatprep.subr.mxu0 %v3300
    %3334 = vmatpush1.msra.mxu0 %v3299
    %3335 = vmatprep.subr.mxu0 %v3302
    %3336 = vmatpush1.msra.mxu0 %v3301
    %3337 = vmatprep.subr.mxu0 %v3304
    %3338 = vmatpush1.msra.mxu0 %v3303
    %3339 = vmatprep.subr.mxu0 %v3306
    %3340 = vmatpush1.msra.mxu0 %v3305
    %3341 = vmatprep.subr.mxu0 %v3308
    %3342 = vmatpush1.msra.mxu0 %v3307
    %3343 = vmatprep.subr.mxu0 %v3310
    %3344 = vmatpush1.msra.mxu0 %v3309
    %3345 = vmatprep.subr.mxu0 %v3312
    %3346 = vmatpush1.msra.mxu0 %v3311
    %3347 = vmatprep.subr.mxu0 %v3325
    %3348 = vmatpush1.msra.mxu0 %v3322
    %3349 = vmatprep.subr.mxu0 0.0
    %3350 = vmatpush1.msra.mxu0 0.0
    %3351 = vmatprep.subr.mxu0 0.0
    %3352 = vmatpush1.msra.mxu0 0.0
    %3353 = vmatprep.subr.mxu0 0.0
    %3354 = vmatpush1.msra.mxu0 0.0
    %3355 = vmatprep.subr.mxu0 0.0
    %3356 = vmatpush1.msra.mxu0 0.0
    %3357 = vmatprep.subr.mxu0 0.0
    %3358 = vmatpush1.msra.mxu0 0.0
    %3359 = vmatprep.subr.mxu0 0.0
    %3360 = vmatpush1.msra.mxu0 0.0
    %3361 = vmatprep.subr.mxu0 0.0
    %3362 = vmatpush1.msra.mxu0 0.0
    %3363 = vmatprep.subr.mxu0 0.0
    %3364 = vmatpush1.msra.mxu0 0.0
    %3365 = vmatprep.subr.mxu0 0.0
    %3366 = vmatpush1.msra.mxu0 0.0
    %3367 = vmatprep.subr.mxu0 0.0
    %3368 = vmatpush1.msra.mxu0 0.0
    %3369 = vmatprep.subr.mxu0 0.0
    %3370 = vmatpush1.msra.mxu0 0.0
    %3371 = vmatprep.subr.mxu0 0.0
    %3372 = vmatpush1.msra.mxu0 0.0
    %3373 = vmatprep.subr.mxu0 0.0
    %3374 = vmatpush1.msra.mxu0 0.0
    %3375 = vmatprep.subr.mxu0 0.0
    %3376 = vmatpush1.msra.mxu0 0.0
    %3377 = vmatprep.subr.mxu0 0.0
    %3378 = vmatpush1.msra.mxu0 0.0
    %3379 = vmatprep.subr.mxu0 0.0
    %3380 = vmatpush1.msra.mxu0 0.0
    %3381 = vmatprep.subr.mxu0 0.0
    %3382 = vmatpush1.msra.mxu0 0.0
    %3383 = vmatprep.subr.mxu0 0.0
    %3384 = vmatpush1.msra.mxu0 0.0
    %3385 = vmatprep.subr.mxu0 0.0
    %3386 = vmatpush1.msra.mxu0 0.0
    %3387 = vmatprep.subr.mxu0 0.0
    %3388 = vmatpush1.msra.mxu0 0.0
    %3389 = vmatprep.subr.mxu0 0.0
    %3390 = vmatpush1.msra.mxu0 0.0
    %3391 = vmatprep.mubr.f32.mxu0 0.0
    %3392 = vmatmul.mubr.f32.gmra.mrb[0].mxu0 %v3316
    %v3393 = vpop.f32.mrb[0].mxu0
    %v3394 = vadd.f32 0.0, %v3393
    %v3395 = vpop.f32.mrb[0].mxu0
    %v3396 = vadd.f32 0.0, %v3395
    %3397 = vmatprep.mubr.f32.mxu0 0.0
    %3398 = vmatmul.mubr.f32.gmra.mrb[0].mxu0 %v3319
    %v3399 = vpop.f32.mrb[0].mxu0
    %v3400 = vadd.f32 0.0, %v3399
    %v3401 = vpop.f32.mrb[0].mxu0
    %v3402 = vadd.f32 0.0, %v3401
    %3403 = vdwg.mxu0
    %v3404 = vadd.f32 %v3287, %v3394
    %v3405 = vadd.f32 %v3288, %v3396
    %v3406 = vadd.f32 %v3289, %v3400
    %v3407 = vadd.f32 %v3290, %v3402
    %v3408 = vld [vmem:[%s6] sm:$0x1]
    %v3411 = vrot.slane %v3404, 1
    %v3412 = vrot.slane %v3405, 1
    %v3415 = vmax.f32 %v3404, %v3411
    %v3416 = vmax.f32 %v3405, %v3412
    %3419 = vrot.lane.b32.xlu0 %v3415, 48
    %v3420 = vpop.permute.xlu0 %3419
    %3421 = vrot.lane.b32.xlu0 %v3416, 48
    %v3422 = vpop.permute.xlu0 %3421
    %v3423 = vsel %vm1419, %v3420, %v3422
    %v3425 = vmax.f32 %v3415, %v3423
    %v3426 = vld [vmem:[%s4] sm:$0x1]
    %v3427 = vadd.f32 %v3425, %v3426
    %v3428 = vmax.f32 %v3427, 0.0
    %v3429 = vld [vmem:[%s5] sm:$0xff]
    %v3430 = vld [vmem:[%s5 + $0x8] sm:$0xff]
    %v3431 = vld [vmem:[%s5 + $0x10] sm:$0xff]
    %v3432 = vld [vmem:[%s5 + $0x18] sm:$0xff]
    %v3433 = vld [vmem:[%s5 + $0x20] sm:$0xff]
    %v3434 = vld [vmem:[%s5 + $0x28] sm:$0xff]
    %v3435 = vld [vmem:[%s5 + $0x30] sm:$0xff]
    %v3436 = vld [vmem:[%s5 + $0x38] sm:$0xff]
    %v3437 = vld [vmem:[%s5 + $0x40] sm:$0xff]
    %v3438 = vld [vmem:[%s5 + $0x48] sm:$0xff]
    %v3440 = vsel %vm1436, %v3428, 0
    %3442 = vmatprep.subr.mxu0 0.0
    %3443 = vmatpush1.msra.mxu0 %v3429
    %3444 = vmatprep.subr.mxu0 0.0
    %3445 = vmatpush1.msra.mxu0 %v3430
    %3446 = vmatprep.subr.mxu0 0.0
    %3447 = vmatpush1.msra.mxu0 %v3431
    %3448 = vmatprep.subr.mxu0 0.0
    %3449 = vmatpush1.msra.mxu0 %v3432
    %3450 = vmatprep.subr.mxu0 0.0
    %3451 = vmatpush1.msra.mxu0 %v3433
    %3452 = vmatprep.subr.mxu0 0.0
    %3453 = vmatpush1.msra.mxu0 %v3434
    %3454 = vmatprep.subr.mxu0 0.0
    %3455 = vmatpush1.msra.mxu0 %v3435
    %3456 = vmatprep.subr.mxu0 0.0
    %3457 = vmatpush1.msra.mxu0 %v3436
    %3458 = vmatprep.subr.mxu0 0.0
    %3459 = vmatpush1.msra.mxu0 %v3437
    %3460 = vmatprep.subr.mxu0 0.0
    %3461 = vmatpush1.msra.mxu0 %v3438
    %3462 = vmatprep.subr.mxu0 0.0
    %3463 = vmatpush1.msra.mxu0 0.0
    %3464 = vmatprep.subr.mxu0 0.0
    %3465 = vmatpush1.msra.mxu0 0.0
    %3466 = vmatprep.subr.mxu0 0.0
    %3467 = vmatpush1.msra.mxu0 0.0
    %3468 = vmatprep.subr.mxu0 0.0
    %3469 = vmatpush1.msra.mxu0 0.0
    %3470 = vmatprep.subr.mxu0 0.0
    %3471 = vmatpush1.msra.mxu0 0.0
    %3472 = vmatprep.subr.mxu0 0.0
    %3473 = vmatpush1.msra.mxu0 0.0
    %3474 = vmatprep.subr.mxu0 0.0
    %3475 = vmatpush1.msra.mxu0 0.0
    %3476 = vmatprep.subr.mxu0 0.0
    %3477 = vmatpush1.msra.mxu0 0.0
    %3478 = vmatprep.subr.mxu0 0.0
    %3479 = vmatpush1.msra.mxu0 0.0
    %3480 = vmatprep.subr.mxu0 0.0
    %3481 = vmatpush1.msra.mxu0 0.0
    %3482 = vmatprep.subr.mxu0 0.0
    %3483 = vmatpush1.msra.mxu0 0.0
    %3484 = vmatprep.subr.mxu0 0.0
    %3485 = vmatpush1.msra.mxu0 0.0
    %3486 = vmatprep.subr.mxu0 0.0
    %3487 = vmatpush1.msra.mxu0 0.0
    %3488 = vmatprep.subr.mxu0 0.0
    %3489 = vmatpush1.msra.mxu0 0.0
    %3490 = vmatprep.subr.mxu0 0.0
    %3491 = vmatpush1.msra.mxu0 0.0
    %3492 = vmatprep.subr.mxu0 0.0
    %3493 = vmatpush1.msra.mxu0 0.0
    %3494 = vmatprep.subr.mxu0 0.0
    %3495 = vmatpush1.msra.mxu0 0.0
    %3496 = vmatprep.subr.mxu0 0.0
    %3497 = vmatpush1.msra.mxu0 0.0
    %3498 = vmatprep.subr.mxu0 0.0
    %3499 = vmatpush1.msra.mxu0 0.0
    %3500 = vmatprep.subr.mxu0 0.0
    %3501 = vmatpush1.msra.mxu0 0.0
    %3502 = vmatprep.subr.mxu0 0.0
    %3503 = vmatpush1.msra.mxu0 0.0
    %3504 = vmatprep.subr.mxu0 0.0
    %3505 = vmatpush1.msra.mxu0 0.0
    %3506 = vmatprep.mubr.f32.mxu0 0.0
    %3507 = vmatmul.mubr.f32.gmra.mrb[0].mxu0 %v3440
    %v3508 = vpop.f32.mrb[0].mxu0
    %v3509 = vadd.f32 0.0, %v3508
    %v3510 = vpop.f32.mrb[0].mxu0
    %3511 = vdwg.mxu0
    %v3512 = vadd.f32 %v3408, %v3509
    %v3514 = vlaneseq
    %v3515 = vshrl.u32 %v3514, 7
    %v3516 = vsub.s32 0, %v3515
    %v3517 = vrot.slane %v3426, %v3516
    %v3519 = vadd.f32 %v3425, %v3517
    %v3520 = vmax.f32 %v3519, 0.0
    %v3521 = vld [vmem:[%s1519] sm:$0xff]
    %v3522 = vld [vmem:[%s1519 + $0x8] sm:$0xff]
    %v3523 = vld [vmem:[%s1519 + $0x10] sm:$0xff]
    %v3524 = vld [vmem:[%s1519 + $0x18] sm:$0xff]
    %v3525 = vld [vmem:[%s1519 + $0x20] sm:$0xff]
    %v3526 = vld [vmem:[%s1519 + $0x28] sm:$0xff]
    %v3527 = vld [vmem:[%s1519 + $0x30] sm:$0xff]
    %v3528 = vld [vmem:[%s1519 + $0x38] sm:$0xff]
    %v3529 = vld [vmem:[%s1519 + $0x40] sm:$0xff]
    %v3530 = vld [vmem:[%s1519 + $0x48] sm:$0xff]
    %v3532 = vrot.slane %v3520, 2
    %v3533 = vsel %vm1436, %v3532, 0
    %3535 = vmatprep.subr.mxu0 0.0
    %3536 = vmatpush1.msra.mxu0 %v3521
    %3537 = vmatprep.subr.mxu0 0.0
    %3538 = vmatpush1.msra.mxu0 %v3522
    %3539 = vmatprep.subr.mxu0 0.0
    %3540 = vmatpush1.msra.mxu0 %v3523
    %3541 = vmatprep.subr.mxu0 0.0
    %3542 = vmatpush1.msra.mxu0 %v3524
    %3543 = vmatprep.subr.mxu0 0.0
    %3544 = vmatpush1.msra.mxu0 %v3525
    %3545 = vmatprep.subr.mxu0 0.0
    %3546 = vmatpush1.msra.mxu0 %v3526
    %3547 = vmatprep.subr.mxu0 0.0
    %3548 = vmatpush1.msra.mxu0 %v3527
    %3549 = vmatprep.subr.mxu0 0.0
    %3550 = vmatpush1.msra.mxu0 %v3528
    %3551 = vmatprep.subr.mxu0 0.0
    %3552 = vmatpush1.msra.mxu0 %v3529
    %3553 = vmatprep.subr.mxu0 0.0
    %3554 = vmatpush1.msra.mxu0 %v3530
    %3555 = vmatprep.subr.mxu0 0.0
    %3556 = vmatpush1.msra.mxu0 0.0
    %3557 = vmatprep.subr.mxu0 0.0
    %3558 = vmatpush1.msra.mxu0 0.0
    %3559 = vmatprep.subr.mxu0 0.0
    %3560 = vmatpush1.msra.mxu0 0.0
    %3561 = vmatprep.subr.mxu0 0.0
    %3562 = vmatpush1.msra.mxu0 0.0
    %3563 = vmatprep.subr.mxu0 0.0
    %3564 = vmatpush1.msra.mxu0 0.0
    %3565 = vmatprep.subr.mxu0 0.0
    %3566 = vmatpush1.msra.mxu0 0.0
    %3567 = vmatprep.subr.mxu0 0.0
    %3568 = vmatpush1.msra.mxu0 0.0
    %3569 = vmatprep.subr.mxu0 0.0
    %3570 = vmatpush1.msra.mxu0 0.0
    %3571 = vmatprep.subr.mxu0 0.0
    %3572 = vmatpush1.msra.mxu0 0.0
    %3573 = vmatprep.subr.mxu0 0.0
    %3574 = vmatpush1.msra.mxu0 0.0
    %3575 = vmatprep.subr.mxu0 0.0
    %3576 = vmatpush1.msra.mxu0 0.0
    %3577 = vmatprep.subr.mxu0 0.0
    %3578 = vmatpush1.msra.mxu0 0.0
    %3579 = vmatprep.subr.mxu0 0.0
    %3580 = vmatpush1.msra.mxu0 0.0
    %3581 = vmatprep.subr.mxu0 0.0
    %3582 = vmatpush1.msra.mxu0 0.0
    %3583 = vmatprep.subr.mxu0 0.0
    %3584 = vmatpush1.msra.mxu0 0.0
    %3585 = vmatprep.subr.mxu0 0.0
    %3586 = vmatpush1.msra.mxu0 0.0
    %3587 = vmatprep.subr.mxu0 0.0
    %3588 = vmatpush1.msra.mxu0 0.0
    %3589 = vmatprep.subr.mxu0 0.0
    %3590 = vmatpush1.msra.mxu0 0.0
    %3591 = vmatprep.subr.mxu0 0.0
    %3592 = vmatpush1.msra.mxu0 0.0
    %3593 = vmatprep.subr.mxu0 0.0
    %3594 = vmatpush1.msra.mxu0 0.0
    %3595 = vmatprep.subr.mxu0 0.0
    %3596 = vmatpush1.msra.mxu0 0.0
    %3597 = vmatprep.subr.mxu0 0.0
    %3598 = vmatpush1.msra.mxu0 0.0
    %3599 = vmatprep.mubr.f32.mxu0 0.0
    %3600 = vmatmul.mubr.f32.gmra.mrb[0].mxu0 %v3533
    %v3601 = vpop.f32.mrb[0].mxu0
    %v3602 = vadd.f32 0.0, %v3601
    %v3603 = vpop.f32.mrb[0].mxu0
    %3604 = vdwg.mxu0
    %v3605 = vadd.f32 %v3512, %v3602
    %v3606 = vld [vmem:[%s1605] sm:$0xff]
    %v3607 = vld [vmem:[%s1605 + $0x8] sm:$0xff]
    %v3608 = vld [vmem:[%s1605 + $0x10] sm:$0xff]
    %v3609 = vld [vmem:[%s1605 + $0x18] sm:$0xff]
    %v3610 = vld [vmem:[%s1605 + $0x20] sm:$0xff]
    %v3611 = vld [vmem:[%s1605 + $0x28] sm:$0xff]
    %v3612 = vld [vmem:[%s1605 + $0x30] sm:$0xff]
    %v3613 = vld [vmem:[%s1605 + $0x38] sm:$0xff]
    %v3614 = vld [vmem:[%s1605 + $0x40] sm:$0xff]
    %v3615 = vld [vmem:[%s1605 + $0x48] sm:$0xff]
    %v3616 = vrot.slane %v3520, 4
    %v3617 = vsel %vm1436, %v3616, 0
    %3619 = vmatprep.subr.mxu0 0.0
    %3620 = vmatpush1.msra.mxu0 %v3606
    %3621 = vmatprep.subr.mxu0 0.0
    %3622 = vmatpush1.msra.mxu0 %v3607
    %3623 = vmatprep.subr.mxu0 0.0
    %3624 = vmatpush1.msra.mxu0 %v3608
    %3625 = vmatprep.subr.mxu0 0.0
    %3626 = vmatpush1.msra.mxu0 %v3609
    %3627 = vmatprep.subr.mxu0 0.0
    %3628 = vmatpush1.msra.mxu0 %v3610
    %3629 = vmatprep.subr.mxu0 0.0
    %3630 = vmatpush1.msra.mxu0 %v3611
    %3631 = vmatprep.subr.mxu0 0.0
    %3632 = vmatpush1.msra.mxu0 %v3612
    %3633 = vmatprep.subr.mxu0 0.0
    %3634 = vmatpush1.msra.mxu0 %v3613
    %3635 = vmatprep.subr.mxu0 0.0
    %3636 = vmatpush1.msra.mxu0 %v3614
    %3637 = vmatprep.subr.mxu0 0.0
    %3638 = vmatpush1.msra.mxu0 %v3615
    %3639 = vmatprep.subr.mxu0 0.0
    %3640 = vmatpush1.msra.mxu0 0.0
    %3641 = vmatprep.subr.mxu0 0.0
    %3642 = vmatpush1.msra.mxu0 0.0
    %3643 = vmatprep.subr.mxu0 0.0
    %3644 = vmatpush1.msra.mxu0 0.0
    %3645 = vmatprep.subr.mxu0 0.0
    %3646 = vmatpush1.msra.mxu0 0.0
    %3647 = vmatprep.subr.mxu0 0.0
    %3648 = vmatpush1.msra.mxu0 0.0
    %3649 = vmatprep.subr.mxu0 0.0
    %3650 = vmatpush1.msra.mxu0 0.0
    %3651 = vmatprep.subr.mxu0 0.0
    %3652 = vmatpush1.msra.mxu0 0.0
    %3653 = vmatprep.subr.mxu0 0.0
    %3654 = vmatpush1.msra.mxu0 0.0
    %3655 = vmatprep.subr.mxu0 0.0
    %3656 = vmatpush1.msra.mxu0 0.0
    %3657 = vmatprep.subr.mxu0 0.0
    %3658 = vmatpush1.msra.mxu0 0.0
    %3659 = vmatprep.subr.mxu0 0.0
    %3660 = vmatpush1.msra.mxu0 0.0
    %3661 = vmatprep.subr.mxu0 0.0
    %3662 = vmatpush1.msra.mxu0 0.0
    %3663 = vmatprep.subr.mxu0 0.0
    %3664 = vmatpush1.msra.mxu0 0.0
    %3665 = vmatprep.subr.mxu0 0.0
    %3666 = vmatpush1.msra.mxu0 0.0
    %3667 = vmatprep.subr.mxu0 0.0
    %3668 = vmatpush1.msra.mxu0 0.0
    %3669 = vmatprep.subr.mxu0 0.0
    %3670 = vmatpush1.msra.mxu0 0.0
    %3671 = vmatprep.subr.mxu0 0.0
    %3672 = vmatpush1.msra.mxu0 0.0
    %3673 = vmatprep.subr.mxu0 0.0
    %3674 = vmatpush1.msra.mxu0 0.0
    %3675 = vmatprep.subr.mxu0 0.0
    %3676 = vmatpush1.msra.mxu0 0.0
    %3677 = vmatprep.subr.mxu0 0.0
    %3678 = vmatpush1.msra.mxu0 0.0
    %3679 = vmatprep.subr.mxu0 0.0
    %3680 = vmatpush1.msra.mxu0 0.0
    %3681 = vmatprep.subr.mxu0 0.0
    %3682 = vmatpush1.msra.mxu0 0.0
    %3683 = vmatprep.mubr.f32.mxu0 0.0
    %3684 = vmatmul.mubr.f32.gmra.mrb[0].mxu0 %v3617
    %v3685 = vpop.f32.mrb[0].mxu0
    %v3686 = vadd.f32 0.0, %v3685
    %v3687 = vpop.f32.mrb[0].mxu0
    %3688 = vdwg.mxu0
    %v3689 = vadd.f32 %v3605, %v3686
    %v3690 = vld [vmem:[%s1690] sm:$0xff]
    %v3691 = vld [vmem:[%s1690 + $0x8] sm:$0xff]
    %v3692 = vld [vmem:[%s1690 + $0x10] sm:$0xff]
    %v3693 = vld [vmem:[%s1690 + $0x18] sm:$0xff]
    %v3694 = vld [vmem:[%s1690 + $0x20] sm:$0xff]
    %v3695 = vld [vmem:[%s1690 + $0x28] sm:$0xff]
    %v3696 = vld [vmem:[%s1690 + $0x30] sm:$0xff]
    %v3697 = vld [vmem:[%s1690 + $0x38] sm:$0xff]
    %v3698 = vld [vmem:[%s1690 + $0x40] sm:$0xff]
    %v3699 = vld [vmem:[%s1690 + $0x48] sm:$0xff]
    %v3700 = vrot.slane %v3520, 6
    %v3701 = vsel %vm1436, %v3700, 0
    %3703 = vmatprep.subr.mxu0 0.0
    %3704 = vmatpush1.msra.mxu0 %v3690
    %3705 = vmatprep.subr.mxu0 0.0
    %3706 = vmatpush1.msra.mxu0 %v3691
    %3707 = vmatprep.subr.mxu0 0.0
    %3708 = vmatpush1.msra.mxu0 %v3692
    %3709 = vmatprep.subr.mxu0 0.0
    %3710 = vmatpush1.msra.mxu0 %v3693
    %3711 = vmatprep.subr.mxu0 0.0
    %3712 = vmatpush1.msra.mxu0 %v3694
    %3713 = vmatprep.subr.mxu0 0.0
    %3714 = vmatpush1.msra.mxu0 %v3695
    %3715 = vmatprep.subr.mxu0 0.0
    %3716 = vmatpush1.msra.mxu0 %v3696
    %3717 = vmatprep.subr.mxu0 0.0
    %3718 = vmatpush1.msra.mxu0 %v3697
    %3719 = vmatprep.subr.mxu0 0.0
    %3720 = vmatpush1.msra.mxu0 %v3698
    %3721 = vmatprep.subr.mxu0 0.0
    %3722 = vmatpush1.msra.mxu0 %v3699
    %3723 = vmatprep.subr.mxu0 0.0
    %3724 = vmatpush1.msra.mxu0 0.0
    %3725 = vmatprep.subr.mxu0 0.0
    %3726 = vmatpush1.msra.mxu0 0.0
    %3727 = vmatprep.subr.mxu0 0.0
    %3728 = vmatpush1.msra.mxu0 0.0
    %3729 = vmatprep.subr.mxu0 0.0
    %3730 = vmatpush1.msra.mxu0 0.0
    %3731 = vmatprep.subr.mxu0 0.0
    %3732 = vmatpush1.msra.mxu0 0.0
    %3733 = vmatprep.subr.mxu0 0.0
    %3734 = vmatpush1.msra.mxu0 0.0
    %3735 = vmatprep.subr.mxu0 0.0
    %3736 = vmatpush1.msra.mxu0 0.0
    %3737 = vmatprep.subr.mxu0 0.0
    %3738 = vmatpush1.msra.mxu0 0.0
    %3739 = vmatprep.subr.mxu0 0.0
    %3740 = vmatpush1.msra.mxu0 0.0
    %3741 = vmatprep.subr.mxu0 0.0
    %3742 = vmatpush1.msra.mxu0 0.0
    %3743 = vmatprep.subr.mxu0 0.0
    %3744 = vmatpush1.msra.mxu0 0.0
    %3745 = vmatprep.subr.mxu0 0.0
    %3746 = vmatpush1.msra.mxu0 0.0
    %3747 = vmatprep.subr.mxu0 0.0
    %3748 = vmatpush1.msra.mxu0 0.0
    %3749 = vmatprep.subr.mxu0 0.0
    %3750 = vmatpush1.msra.mxu0 0.0
    %3751 = vmatprep.subr.mxu0 0.0
    %3752 = vmatpush1.msra.mxu0 0.0
    %3753 = vmatprep.subr.mxu0 0.0
    %3754 = vmatpush1.msra.mxu0 0.0
    %3755 = vmatprep.subr.mxu0 0.0
    %3756 = vmatpush1.msra.mxu0 0.0
    %3757 = vmatprep.subr.mxu0 0.0
    %3758 = vmatpush1.msra.mxu0 0.0
    %3759 = vmatprep.subr.mxu0 0.0
    %3760 = vmatpush1.msra.mxu0 0.0
    %3761 = vmatprep.subr.mxu0 0.0
    %3762 = vmatpush1.msra.mxu0 0.0
    %3763 = vmatprep.subr.mxu0 0.0
    %3764 = vmatpush1.msra.mxu0 0.0
    %3765 = vmatprep.subr.mxu0 0.0
    %3766 = vmatpush1.msra.mxu0 0.0
    %3767 = vmatprep.mubr.f32.mxu0 0.0
    %3768 = vmatmul.mubr.f32.gmra.mrb[0].mxu0 %v3701
    %v3769 = vpop.f32.mrb[0].mxu0
    %v3770 = vadd.f32 0.0, %v3769
    %v3771 = vpop.f32.mrb[0].mxu0
    %3772 = vdwg.mxu0
    %v3773 = vadd.f32 %v3689, %v3770
    %v3776 = vrot.slane %v3406, 1
    %v3777 = vrot.slane %v3407, 1
    %v3780 = vmax.f32 %v3406, %v3776
    %v3781 = vmax.f32 %v3407, %v3777
    %3784 = vrot.lane.b32.xlu0 %v3780, 48
    %v3785 = vpop.permute.xlu0 %3784
    %3786 = vrot.lane.b32.xlu0 %v3781, 48
    %v3787 = vpop.permute.xlu0 %3786
    %v3788 = vsel %vm1419, %v3785, %v3787
    %v3790 = vmax.f32 %v3780, %v3788
    %v3791 = vadd.f32 %v3790, %v3426
    %v3792 = vmax.f32 %v3791, 0.0
    %v3793 = vld [vmem:[%s1794] sm:$0xff]
    %v3794 = vld [vmem:[%s1794 + $0x8] sm:$0xff]
    %v3795 = vld [vmem:[%s1794 + $0x10] sm:$0xff]
    %v3796 = vld [vmem:[%s1794 + $0x18] sm:$0xff]
    %v3797 = vld [vmem:[%s1794 + $0x20] sm:$0xff]
    %v3798 = vld [vmem:[%s1794 + $0x28] sm:$0xff]
    %v3799 = vld [vmem:[%s1794 + $0x30] sm:$0xff]
    %v3800 = vld [vmem:[%s1794 + $0x38] sm:$0xff]
    %v3801 = vld [vmem:[%s1794 + $0x40] sm:$0xff]
    %v3802 = vld [vmem:[%s1794 + $0x48] sm:$0xff]
    %v3804 = vsel %vm1436, %v3792, 0
    %3806 = vmatprep.subr.mxu0 0.0
    %3807 = vmatpush1.msra.mxu0 %v3793
    %3808 = vmatprep.subr.mxu0 0.0
    %3809 = vmatpush1.msra.mxu0 %v3794
    %3810 = vmatprep.subr.mxu0 0.0
    %3811 = vmatpush1.msra.mxu0 %v3795
    %3812 = vmatprep.subr.mxu0 0.0
    %3813 = vmatpush1.msra.mxu0 %v3796
    %3814 = vmatprep.subr.mxu0 0.0
    %3815 = vmatpush1.msra.mxu0 %v3797
    %3816 = vmatprep.subr.mxu0 0.0
    %3817 = vmatpush1.msra.mxu0 %v3798
    %3818 = vmatprep.subr.mxu0 0.0
    %3819 = vmatpush1.msra.mxu0 %v3799
    %3820 = vmatprep.subr.mxu0 0.0
    %3821 = vmatpush1.msra.mxu0 %v3800
    %3822 = vmatprep.subr.mxu0 0.0
    %3823 = vmatpush1.msra.mxu0 %v3801
    %3824 = vmatprep.subr.mxu0 0.0
    %3825 = vmatpush1.msra.mxu0 %v3802
    %3826 = vmatprep.subr.mxu0 0.0
    %3827 = vmatpush1.msra.mxu0 0.0
    %3828 = vmatprep.subr.mxu0 0.0
    %3829 = vmatpush1.msra.mxu0 0.0
    %3830 = vmatprep.subr.mxu0 0.0
    %3831 = vmatpush1.msra.mxu0 0.0
    %3832 = vmatprep.subr.mxu0 0.0
    %3833 = vmatpush1.msra.mxu0 0.0
    %3834 = vmatprep.subr.mxu0 0.0
    %3835 = vmatpush1.msra.mxu0 0.0
    %3836 = vmatprep.subr.mxu0 0.0
    %3837 = vmatpush1.msra.mxu0 0.0
    %3838 = vmatprep.subr.mxu0 0.0
    %3839 = vmatpush1.msra.mxu0 0.0
    %3840 = vmatprep.subr.mxu0 0.0
    %3841 = vmatpush1.msra.mxu0 0.0
    %3842 = vmatprep.subr.mxu0 0.0
    %3843 = vmatpush1.msra.mxu0 0.0
    %3844 = vmatprep.subr.mxu0 0.0
    %3845 = vmatpush1.msra.mxu0 0.0
    %3846 = vmatprep.subr.mxu0 0.0
    %3847 = vmatpush1.msra.mxu0 0.0
    %3848 = vmatprep.subr.mxu0 0.0
    %3849 = vmatpush1.msra.mxu0 0.0
    %3850 = vmatprep.subr.mxu0 0.0
    %3851 = vmatpush1.msra.mxu0 0.0
    %3852 = vmatprep.subr.mxu0 0.0
    %3853 = vmatpush1.msra.mxu0 0.0
    %3854 = vmatprep.subr.mxu0 0.0
    %3855 = vmatpush1.msra.mxu0 0.0
    %3856 = vmatprep.subr.mxu0 0.0
    %3857 = vmatpush1.msra.mxu0 0.0
    %3858 = vmatprep.subr.mxu0 0.0
    %3859 = vmatpush1.msra.mxu0 0.0
    %3860 = vmatprep.subr.mxu0 0.0
    %3861 = vmatpush1.msra.mxu0 0.0
    %3862 = vmatprep.subr.mxu0 0.0
    %3863 = vmatpush1.msra.mxu0 0.0
    %3864 = vmatprep.subr.mxu0 0.0
    %3865 = vmatpush1.msra.mxu0 0.0
    %3866 = vmatprep.subr.mxu0 0.0
    %3867 = vmatpush1.msra.mxu0 0.0
    %3868 = vmatprep.subr.mxu0 0.0
    %3869 = vmatpush1.msra.mxu0 0.0
    %3870 = vmatprep.mubr.f32.mxu0 0.0
    %3871 = vmatmul.mubr.f32.gmra.mrb[0].mxu0 %v3804
    %v3872 = vpop.f32.mrb[0].mxu0
    %v3873 = vadd.f32 0.0, %v3872
    %v3874 = vpop.f32.mrb[0].mxu0
    %3875 = vdwg.mxu0
    %v3876 = vadd.f32 %v3773, %v3873
    %v3877 = vmax.f32 %v3876, 0.0
    %v3878 = vld [vmem:[%s7] sm:$0xff]
    %v3879 = vld [vmem:[%s7 + $0x8] sm:$0xff]
    %v3880 = vld [vmem:[%s7 + $0x10] sm:$0xff]
    %v3881 = vld [vmem:[%s7 + $0x18] sm:$0xff]
    %v3882 = vld [vmem:[%s7 + $0x20] sm:$0xff]
    %v3883 = vld [vmem:[%s7 + $0x28] sm:$0xff]
    %v3884 = vld [vmem:[%s7 + $0x30] sm:$0xff]
    %v3885 = vld [vmem:[%s7 + $0x38] sm:$0xff]
    %v3886 = vld [vmem:[%s7 + $0x40] sm:$0xff]
    %v3887 = vld [vmem:[%s7 + $0x48] sm:$0xff]
    %v3888 = vld [vmem:[%s7 + $0x50] sm:$0xff]
    %v3889 = vld [vmem:[%s7 + $0x58] sm:$0xff]
    %v3890 = vld [vmem:[%s7 + $0x60] sm:$0xff]
    %v3891 = vld [vmem:[%s7 + $0x68] sm:$0xff]
    %v3892 = vld [vmem:[%s7 + $0x70] sm:$0xff]
    %v3893 = vld [vmem:[%s8] sm:$0x1]
    %v3895 = vsel %vm1896, %v3877, 0
    %3897 = vmatprep.subr.mxu0 0.0
    %3898 = vmatpush1.msra.mxu0 %v3878
    %3899 = vmatprep.subr.mxu0 0.0
    %3900 = vmatpush1.msra.mxu0 %v3879
    %3901 = vmatprep.subr.mxu0 0.0
    %3902 = vmatpush1.msra.mxu0 %v3880
    %3903 = vmatprep.subr.mxu0 0.0
    %3904 = vmatpush1.msra.mxu0 %v3881
    %3905 = vmatprep.subr.mxu0 0.0
    %3906 = vmatpush1.msra.mxu0 %v3882
    %3907 = vmatprep.subr.mxu0 0.0
    %3908 = vmatpush1.msra.mxu0 %v3883
    %3909 = vmatprep.subr.mxu0 0.0
    %3910 = vmatpush1.msra.mxu0 %v3884
    %3911 = vmatprep.subr.mxu0 0.0
    %3912 = vmatpush1.msra.mxu0 %v3885
    %3913 = vmatprep.subr.mxu0 0.0
    %3914 = vmatpush1.msra.mxu0 %v3886
    %3915 = vmatprep.subr.mxu0 0.0
    %3916 = vmatpush1.msra.mxu0 %v3887
    %3917 = vmatprep.subr.mxu0 0.0
    %3918 = vmatpush1.msra.mxu0 %v3888
    %3919 = vmatprep.subr.mxu0 0.0
    %3920 = vmatpush1.msra.mxu0 %v3889
    %3921 = vmatprep.subr.mxu0 0.0
    %3922 = vmatpush1.msra.mxu0 %v3890
    %3923 = vmatprep.subr.mxu0 0.0
    %3924 = vmatpush1.msra.mxu0 %v3891
    %3925 = vmatprep.subr.mxu0 0.0
    %3926 = vmatpush1.msra.mxu0 %v3892
    %3927 = vmatprep.subr.mxu0 0.0
    %3928 = vmatpush1.msra.mxu0 0.0
    %3929 = vmatprep.subr.mxu0 0.0
    %3930 = vmatpush1.msra.mxu0 0.0
    %3931 = vmatprep.subr.mxu0 0.0
    %3932 = vmatpush1.msra.mxu0 0.0
    %3933 = vmatprep.subr.mxu0 0.0
    %3934 = vmatpush1.msra.mxu0 0.0
    %3935 = vmatprep.subr.mxu0 0.0
    %3936 = vmatpush1.msra.mxu0 0.0
    %3937 = vmatprep.subr.mxu0 0.0
    %3938 = vmatpush1.msra.mxu0 0.0
    %3939 = vmatprep.subr.mxu0 0.0
    %3940 = vmatpush1.msra.mxu0 0.0
    %3941 = vmatprep.subr.mxu0 0.0
    %3942 = vmatpush1.msra.mxu0 0.0
    %3943 = vmatprep.subr.mxu0 0.0
    %3944 = vmatpush1.msra.mxu0 0.0
    %3945 = vmatprep.subr.mxu0 0.0
    %3946 = vmatpush1.msra.mxu0 0.0
    %3947 = vmatprep.subr.mxu0 0.0
    %3948 = vmatpush1.msra.mxu0 0.0
    %3949 = vmatprep.subr.mxu0 0.0
    %3950 = vmatpush1.msra.mxu0 0.0
    %3951 = vmatprep.subr.mxu0 0.0
    %3952 = vmatpush1.msra.mxu0 0.0
    %3953 = vmatprep.subr.mxu0 0.0
    %3954 = vmatpush1.msra.mxu0 0.0
    %3955 = vmatprep.subr.mxu0 0.0
    %3956 = vmatpush1.msra.mxu0 0.0
    %3957 = vmatprep.subr.mxu0 0.0
    %3958 = vmatpush1.msra.mxu0 0.0
    %3959 = vmatprep.subr.mxu0 0.0
    %3960 = vmatpush1.msra.mxu0 0.0
    %3961 = vmatprep.mubr.f32.mxu0 0.0
    %3962 = vmatmul.mubr.f32.gmra.mrb[0].mxu0 %v3895
    %v3963 = vpop.f32.mrb[0].mxu0
    %v3964 = vadd.f32 %v3893, %v3963
    %v3965 = vpop.f32.mrb[0].mxu0
    %3966 = vdwg.mxu0
    %v3967 = vmax.f32 %v3964, 0.0
    %v3968 = vld [vmem:[%s9] sm:$0xff]
    %v3969 = vld [vmem:[%s9 + $0x8] sm:$0xff]
    %v3970 = vld [vmem:[%s9 + $0x10] sm:$0xff]
    %v3971 = vld [vmem:[%s9 + $0x18] sm:$0xff]
    %v3972 = vld [vmem:[%s9 + $0x20] sm:$0xff]
    %v3973 = vld [vmem:[%s9 + $0x28] sm:$0xff]
    %v3974 = vld [vmem:[%s9 + $0x30] sm:$0xff]
    %v3975 = vld [vmem:[%s9 + $0x38] sm:$0xff]
    %v3976 = vld [vmem:[%s9 + $0x40] sm:$0xff]
    %v3977 = vld [vmem:[%s9 + $0x48] sm:$0xff]
    %v3978 = vld [vmem:[%s9 + $0x50] sm:$0xf]
    %v3979 = vld [vmem:[%s10] sm:$0x1]
    %v3981 = vsel %vm871, %v3967, 0
    %v3984 = vsel %vm520, %v3978, 0
    %3986 = vmatprep.subr.mxu0 0.0
    %3987 = vmatpush1.msra.mxu0 %v3968
    %3988 = vmatprep.subr.mxu0 0.0
    %3989 = vmatpush1.msra.mxu0 %v3969
    %3990 = vmatprep.subr.mxu0 0.0
    %3991 = vmatpush1.msra.mxu0 %v3970
    %3992 = vmatprep.subr.mxu0 0.0
    %3993 = vmatpush1.msra.mxu0 %v3971
    %3994 = vmatprep.subr.mxu0 0.0
    %3995 = vmatpush1.msra.mxu0 %v3972
    %3996 = vmatprep.subr.mxu0 0.0
    %3997 = vmatpush1.msra.mxu0 %v3973
    %3998 = vmatprep.subr.mxu0 0.0
    %3999 = vmatpush1.msra.mxu0 %v3974
    %4000 = vmatprep.subr.mxu0 0.0
    %4001 = vmatpush1.msra.mxu0 %v3975
    %4002 = vmatprep.subr.mxu0 0.0
    %4003 = vmatpush1.msra.mxu0 %v3976
    %4004 = vmatprep.subr.mxu0 0.0
    %4005 = vmatpush1.msra.mxu0 %v3977
    %4006 = vmatprep.subr.mxu0 0.0
    %4007 = vmatpush1.msra.mxu0 %v3984
    %4008 = vmatprep.subr.mxu0 0.0
    %4009 = vmatpush1.msra.mxu0 0.0
    %4010 = vmatprep.subr.mxu0 0.0
    %4011 = vmatpush1.msra.mxu0 0.0
    %4012 = vmatprep.subr.mxu0 0.0
    %4013 = vmatpush1.msra.mxu0 0.0
    %4014 = vmatprep.subr.mxu0 0.0
    %4015 = vmatpush1.msra.mxu0 0.0
    %4016 = vmatprep.subr.mxu0 0.0
    %4017 = vmatpush1.msra.mxu0 0.0
    %4018 = vmatprep.subr.mxu0 0.0
    %4019 = vmatpush1.msra.mxu0 0.0
    %4020 = vmatprep.subr.mxu0 0.0
    %4021 = vmatpush1.msra.mxu0 0.0
    %4022 = vmatprep.subr.mxu0 0.0
    %4023 = vmatpush1.msra.mxu0 0.0
    %4024 = vmatprep.subr.mxu0 0.0
    %4025 = vmatpush1.msra.mxu0 0.0
    %4026 = vmatprep.subr.mxu0 0.0
    %4027 = vmatpush1.msra.mxu0 0.0
    %4028 = vmatprep.subr.mxu0 0.0
    %4029 = vmatpush1.msra.mxu0 0.0
    %4030 = vmatprep.subr.mxu0 0.0
    %4031 = vmatpush1.msra.mxu0 0.0
    %4032 = vmatprep.subr.mxu0 0.0
    %4033 = vmatpush1.msra.mxu0 0.0
    %4034 = vmatprep.subr.mxu0 0.0
    %4035 = vmatpush1.msra.mxu0 0.0
    %4036 = vmatprep.subr.mxu0 0.0
    %4037 = vmatpush1.msra.mxu0 0.0
    %4038 = vmatprep.subr.mxu0 0.0
    %4039 = vmatpush1.msra.mxu0 0.0
    %4040 = vmatprep.subr.mxu0 0.0
    %4041 = vmatpush1.msra.mxu0 0.0
    %4042 = vmatprep.subr.mxu0 0.0
    %4043 = vmatpush1.msra.mxu0 0.0
    %4044 = vmatprep.subr.mxu0 0.0
    %4045 = vmatpush1.msra.mxu0 0.0
    %4046 = vmatprep.subr.mxu0 0.0
    %4047 = vmatpush1.msra.mxu0 0.0
    %4048 = vmatprep.subr.mxu0 0.0
    %4049 = vmatpush1.msra.mxu0 0.0
    %4050 = vmatprep.mubr.f32.mxu0 0.0
    %4051 = vmatmul.mubr.f32.gmra.mrb[0].mxu0 %v3981
    %v4052 = vpop.f32.mrb[0].mxu0
    %v4053 = vadd.f32 %v3979, %v4052
    %v4054 = vpop.f32.mrb[0].mxu0
    %4055 = vdwg.mxu0
    %4056 = vst.msk [vmem:[#allocation3 + $0x1] sm:$0x1] %vm2059, %v4053
    // Predicated region
    $region46: #{net_forward.1} parent=1 // pred_check
      _
    $region47: #{net_forward.1} parent=1 // pred_check_branch
      %4058 = sbr.rel (0) target = $region49
    $region48: #{net_forward.1} parent=1 // pred_region
      %s4060 = ssub.s32 32, 32
      %4061 = vsyncadd [#allocation4], %s4060
      %s4063 = sshll.u32 [#allocation3], 4
      %s4064 = int_to_ptr.vmem [resolvable:$true] %s4063
      %4066 = dma.vmem_to_hbm [thread:$0]  %s4064, 32, %s11, [#allocation4]
    $region49: #{net_forward.1} parent=1 // pred_fallthru
      _
    // Predicated region
    $region50: #{net_forward.1} parent=1 // pred_check
      _
    $region51: #{net_forward.1} parent=1 // pred_check_branch
      %4068 = sbr.rel (0) target = $region53
    $region52: #{net_forward.1} parent=1 // pred_region
      %4069 = dma.done [#allocation4], 32
    $region53: #{net_forward.1} parent=1 // pred_fallthru
      _
    %4070 = vsyncpa [#allocation4], 1

</llo_original>
